<compile_context>
chip_gen: v7x
topology: tpu7x:2x2x1
jax: 0.10.0
libtpu: 0.0.40
codegen_flags: <defaults>
</compile_context>

<pallas_src>
import functools
import math

import jax
import jax.numpy as jnp
import numpy as np
from jax.experimental import pallas as pl
from jax.experimental.pallas import tpu as pltpu


_CONV_CHANNELS = ((1, 64), (64, 64), (64, 128), (128, 128),
                  (128, 256), (256, 256), (256, 256))
_SHIFTS = ((0, 0), (0, 1), (1, 0), (1, 1))   # (kh, kw) — matches w.reshape(4*cin, cout)


def _round_up(v, m):
    return -(-v // m) * m


def _conv_plan(batch, board_size):
    """Per conv layer: (s_in, s_out, rows_in_padded, rows_out_padded, cin, cout)."""
    plan = []
    s_in = board_size
    rp_in = _round_up(batch * s_in * s_in, 8)
    for cin, cout in _CONV_CHANNELS:
        s_out = s_in - 1
        rp_out = _round_up(batch * s_out * s_out, 8)
        plan.append((s_in, s_out, rp_in, rp_out, cin, cout))
        s_in, rp_in = s_out, rp_out
    return plan


def _build_gather_matrix(batch, s_in, rp_in, s_out, rp_out):
    """0/1 matrix (4*rp_out, rp_in): row k*rp_out + (n, ho, wo) selects the
    flattened previous-activation row (n, ho+kh, wo+kw) for shift k=(kh,kw).
    Padded rows/cols stay all-zero, so padding is ignored by construction.
    Stored in bf16: 0.0 / 1.0 are exact, so the gather matmul is an exact
    row selection even with bf16 operands."""
    # Tie the padding used here to _conv_plan so a future change can't silently
    # break the "padded rows are never selected" invariant.
    assert s_out == s_in - 1, (s_in, s_out)
    assert rp_in == _round_up(batch * s_in * s_in, 8), (rp_in, batch, s_in)
    assert rp_out == _round_up(batch * s_out * s_out, 8), (rp_out, batch, s_out)
    g = np.zeros((4 * rp_out, rp_in), np.float32)
    for k, (kh, kw) in enumerate(_SHIFTS):
        for n in range(batch):
            for ho in range(s_out):
                for wo in range(s_out):
                    row = k * rp_out + n * s_out * s_out + ho * s_out + wo
                    col = n * s_in * s_in + (ho + kh) * s_in + (wo + kw)
                    g[row, col] = 1.0
    return jnp.asarray(g, dtype=jnp.bfloat16)


# ----------------------------------------------------------------------------
# Fused Pallas kernel: entire CNN forward pass in one program
# ----------------------------------------------------------------------------
def _cnn_fused_kernel(
    # small inputs, auto-copied into VMEM before the body runs
    cols1_ref, w1_ref, b1_ref,
    g2_ref, w2_ref, b2_ref,
    g3_ref, w3_ref, b3_ref,
    g4_ref, w4_ref, b4_ref,
    g5_ref, b5_ref,
    g6_ref, b6_ref,
    g7_ref, b7_ref,
    bfc1_ref, bfc2_ref,
    # big late-layer weights left in HBM (pl.ANY): copied manually, overlapped
    w5_hbm, w6_hbm, w7_hbm, wfc1_hbm, wfc2_hbm,
    # output
    o_ref,
    # scratch: VMEM landing buffers for the streamed weights + DMA semaphores
    w5_v, w6_v, w7_v, wfc1_v, wfc2_v, dma_sem,
    *, batch, layer_meta):
    # Kick off the big-weight DMAs immediately so they overlap conv1..conv4.
    copies = []
    for i, (src, dst) in enumerate(
        ((w5_hbm, w5_v), (w6_hbm, w6_v), (w7_hbm, w7_v),
         (wfc1_hbm, wfc1_v), (wfc2_hbm, wfc2_v))):
        cp = pltpu.make_async_copy(src, dst, dma_sem.at[i])
        cp.start()
        copies.append(cp)

    def conv(x_bf16, g_ref, w, b_ref, rp_out, cin):
        # One bf16 0/1 "gather" matmul materializes the 4 shifted im2col row-sets
        # (exact selection), then 4 per-shift bf16 weight matmuls accumulate in f32.
        p_all = jnp.dot(g_ref[...], x_bf16,
                        preferred_element_type=jnp.float32).astype(jnp.bfloat16)
        acc = jnp.dot(p_all[0:rp_out, :], w[0:cin, :],
                      preferred_element_type=jnp.float32)
        for k in range(1, 4):
            acc = acc + jnp.dot(p_all[k * rp_out:(k + 1) * rp_out, :],
                                w[k * cin:(k + 1) * cin, :],
                                preferred_element_type=jnp.float32)
        # Bias added once at the end; cast to bf16 once, right after the ReLU.
        return jnp.maximum(acc + b_ref[...], 0.0).astype(jnp.bfloat16)

    # conv1 (cin=1, K=4): single tiny bf16 matmul + bias + ReLU.
    x = jnp.maximum(
        jnp.dot(cols1_ref[...], w1_ref[...],
                preferred_element_type=jnp.float32) + b1_ref[...],
        0.0).astype(jnp.bfloat16)                              # (rp1, 64) bf16

    # conv2..conv4: weights already resident in VMEM.
    x = conv(x, g2_ref, w2_ref, b2_ref, *layer_meta[0])
    x = conv(x, g3_ref, w3_ref, b3_ref, *layer_meta[1])
    x = conv(x, g4_ref, w4_ref, b4_ref, *layer_meta[2])

    # conv5..conv7 / fc: wait for each streamed weight right before first use.
    copies[0].wait()
    x = conv(x, g5_ref, w5_v, b5_ref, *layer_meta[3])
    copies[1].wait()
    x = conv(x, g6_ref, w6_v, b6_ref, *layer_meta[4])
    copies[2].wait()
    x = conv(x, g7_ref, w7_v, b7_ref, *layer_meta[5])

    # Spatial is 1x1 after conv7, so rows 0..batch-1 of x are already the fc1 input.
    copies[3].wait()
    h = jnp.maximum(
        jnp.dot(x, wfc1_v[...], preferred_element_type=jnp.float32) + bfc1_ref[...],
        0.0).astype(jnp.bfloat16)
    copies[4].wait()
    out = jnp.dot(h, wfc2_v[...], preferred_element_type=jnp.float32) + bfc2_ref[...]
    o_ref[...] = out[0:batch, :]          # only the final logits go to HBM


# ----------------------------------------------------------------------------
# Parameter init (deterministic, PyTorch-default-style uniform bounds)
# ----------------------------------------------------------------------------
def _init_conv(key, cin, cout):
    k1, k2 = jax.random.split(key)
    bound = 1.0 / math.sqrt(cin * 2 * 2)
    w = jax.random.uniform(k1, (2, 2, cin, cout), jnp.float32, -bound, bound)
    b = jax.random.uniform(k2, (cout,), jnp.float32, -bound, bound)
    return w, b


def _init_linear(key, fan_in, fan_out):
    k1, k2 = jax.random.split(key)
    bound = 1.0 / math.sqrt(fan_in)
    w = jax.random.uniform(k1, (fan_in, fan_out), jnp.float32, -bound, bound)
    b = jax.random.uniform(k2, (fan_out,), jnp.float32, -bound, bound)
    return w, b


def init_cnn_params(key, board_size=8):
    keys = jax.random.split(key, len(_CONV_CHANNELS) + 2)
    params = {}
    for i, (cin, cout) in enumerate(_CONV_CHANNELS):
        params[f"conv{i + 1}"] = _init_conv(keys[i], cin, cout)
    params["fc1"] = _init_linear(keys[-2], 256 * 1 * 1, 128)
    params["fc2"] = _init_linear(keys[-1], 128, board_size * board_size)
    return params


def prepare_cnn_params(params, batch, board_size=8):
    """One-time prep (outside the hot path).

    'vmem'  : small tensors auto-copied to VMEM each call, in kernel-arg order:
              w1 (bf16), b1, then per conv2..4 (gather bf16, weight bf16, bias f32),
              then per conv5..7 (gather bf16, bias f32), then fc1/fc2 biases (f32).
    'hbm'   : the big late-layer weights (conv5/6/7 (4*cin,cout) bf16, fc1, fc2 bf16)
              — passed with memory_space=pl.ANY and streamed inside the kernel.
    """
    plan = _conv_plan(batch, board_size)
    vmem, hbm = [], []

    w1, b1 = params["conv1"]
    vmem.append(w1.reshape(4, w1.shape[-1]).astype(jnp.bfloat16))
    vmem.append(b1.reshape(1, -1).astype(jnp.float32))

    for i in range(1, 4):                         # conv2..conv4: fully resident
        s_in, s_out, rp_in, rp_out, cin, cout = plan[i]
        w, b = params[f"conv{i + 1}"]
        vmem.append(_build_gather_matrix(batch, s_in, rp_in, s_out, rp_out))
        vmem.append(w.reshape(4 * cin, cout).astype(jnp.bfloat16))
        vmem.append(b.reshape(1, -1).astype(jnp.float32))

    for i in range(4, 7):                         # conv5..conv7: weights streamed
        s_in, s_out, rp_in, rp_out, cin, cout = plan[i]
        w, b = params[f"conv{i + 1}"]
        vmem.append(_build_gather_matrix(batch, s_in, rp_in, s_out, rp_out))
        vmem.append(b.reshape(1, -1).astype(jnp.float32))
        hbm.append(w.reshape(4 * cin, cout).astype(jnp.bfloat16))

    w_fc1, b_fc1 = params["fc1"]
    w_fc2, b_fc2 = params["fc2"]
    vmem.append(b_fc1.reshape(1, -1).astype(jnp.float32))
    vmem.append(b_fc2.reshape(1, -1).astype(jnp.float32))
    hbm.append(w_fc1.astype(jnp.bfloat16))
    hbm.append(w_fc2.astype(jnp.bfloat16))
    return {"vmem": tuple(vmem), "hbm": tuple(hbm)}


# ----------------------------------------------------------------------------
# Forward pass (mirrors CNN.forward)
# ----------------------------------------------------------------------------
def cnn_forward(prepared, x_nchw):
    batch, _, hdim, wdim = x_nchw.shape
    assert hdim == wdim == 8, "7 kernel-2 convs + fc1(256) require board_size == 8"
    board_size = hdim
    plan = _conv_plan(batch, board_size)
    s_out, rp1 = plan[0][1], plan[0][3]
    rows = batch * s_out * s_out

    # im2col for conv1 only (the raw, tiny network input): rows (n, ho, wo),
    # columns ordered by shift (kh, kw) — matches w1.reshape(4, 64). bf16 (v5e).
    x = x_nchw.astype(jnp.float32).reshape(batch, board_size, board_size)  # C == 1
    cols1 = jnp.stack(
        [x[:, kh:kh + s_out, kw:kw + s_out] for kh, kw in _SHIFTS], axis=-1
    ).reshape(rows, 4)
    cols1 = jnp.pad(cols1, ((0, rp1 - rows), (0, 0))).astype(jnp.bfloat16)

    layer_meta = tuple((plan[i][3], plan[i][4]) for i in range(1, 7))  # (rp_out, cin)
    out_dim = board_size * board_size
    vmem_inputs = (cols1,) + tuple(prepared["vmem"])
    hbm_inputs = tuple(prepared["hbm"])

    kernel = functools.partial(_cnn_fused_kernel, batch=batch, layer_meta=layer_meta)
    return pl.pallas_call(
        kernel,
        out_shape=jax.ShapeDtypeStruct((batch, out_dim), jnp.float32),
        in_specs=(
            [pl.BlockSpec(memory_space=pltpu.MemorySpace.VMEM)] * len(vmem_inputs)
            + [pl.BlockSpec(memory_space=pl.ANY)] * len(hbm_inputs)),
        out_specs=pl.BlockSpec(memory_space=pltpu.MemorySpace.VMEM),
        scratch_shapes=(
            [pltpu.VMEM(a.shape, a.dtype) for a in hbm_inputs]
            + [pltpu.SemaphoreType.DMA((len(hbm_inputs),))]),
    )(*vmem_inputs, *hbm_inputs)


def _cnn_reference(params, x_nchw):
    """Pure-JAX f32 reference of the same forward pass (tolerance check only)."""
    x = jnp.transpose(x_nchw.astype(jnp.float32), (0, 2, 3, 1))   # NHWC
    for i in range(7):
        w, b = params[f"conv{i + 1}"]
        n, h, wd, c = x.shape
        ho, wo = h - 1, wd - 1
        cols = jnp.stack(
            [x[:, kh:kh + ho, kw:kw + wo, :] for kh, kw in _SHIFTS], axis=3
        ).reshape(n * ho * wo, 4 * c)
        x = jnp.maximum(cols @ w.reshape(4 * c, -1) + b, 0.0).reshape(n, ho, wo, -1)
    flat = x.reshape(x.shape[0], -1)
    w1, b1 = params["fc1"]
    w2, b2 = params["fc2"]
    h1 = jnp.maximum(flat @ w1 + b1, 0.0)
    return h1 @ w2 + b2


# TODO(synk): train_all / evalulate are host-side training loops (optimizer,
# checkpointing, sklearn classification_report) — not part of the forward pass.

if __name__ == "__main__":
    BOARD = 8           # 7 convs with kernel 2 reduce 8x8 -> 1x1, as forward requires
    BATCH = 2

    pkey, xkey = jax.random.split(jax.random.PRNGKey(0))
    params = init_cnn_params(pkey, board_size=BOARD)
    prepared = prepare_cnn_params(params, batch=BATCH, board_size=BOARD)
    x = jax.random.normal(xkey, (BATCH, 1, BOARD, BOARD), dtype=jnp.float32)

    fwd = jax.jit(cnn_forward)
    out = jax.block_until_ready(fwd(prepared, x))

    assert out.shape == (BATCH, BOARD * BOARD), out.shape
    assert out.dtype == jnp.float32
    assert bool(jnp.all(jnp.isfinite(out)))

    # Loose check vs. an f32 XLA reference (kernel uses bf16 matmuls w/ f32 accum).
    ref = _cnn_reference(params, x)
    err = float(jnp.max(jnp.abs(out - ref)))
    scale = float(jnp.max(jnp.abs(ref)))
    assert err <= 0.05 * scale + 1e-3, (err, scale)

    print("KERNEL_OK")
</pallas_src>

<mosaic_0001>
module attributes {stable_mosaic.version = 11 : i64} {
  func.func @_cnn_fused_kernel(%arg0: memref<104x4xbf16, #tpu.memory_space<vmem>>, %arg1: memref<4x64xbf16, #tpu.memory_space<vmem>>, %arg2: memref<1x64xf32, #tpu.memory_space<vmem>>, %arg3: memref<288x104xbf16, #tpu.memory_space<vmem>>, %arg4: memref<256x64xbf16, #tpu.memory_space<vmem>>, %arg5: memref<1x64xf32, #tpu.memory_space<vmem>>, %arg6: memref<224x72xbf16, #tpu.memory_space<vmem>>, %arg7: memref<256x128xbf16, #tpu.memory_space<vmem>>, %arg8: memref<1x128xf32, #tpu.memory_space<vmem>>, %arg9: memref<128x56xbf16, #tpu.memory_space<vmem>>, %arg10: memref<512x128xbf16, #tpu.memory_space<vmem>>, %arg11: memref<1x128xf32, #tpu.memory_space<vmem>>, %arg12: memref<96x32xbf16, #tpu.memory_space<vmem>>, %arg13: memref<1x256xf32, #tpu.memory_space<vmem>>, %arg14: memref<32x24xbf16, #tpu.memory_space<vmem>>, %arg15: memref<1x256xf32, #tpu.memory_space<vmem>>, %arg16: memref<32x8xbf16, #tpu.memory_space<vmem>>, %arg17: memref<1x256xf32, #tpu.memory_space<vmem>>, %arg18: memref<1x128xf32, #tpu.memory_space<vmem>>, %arg19: memref<1x64xf32, #tpu.memory_space<vmem>>, %arg20: memref<512x256xbf16, #tpu.memory_space<any>>, %arg21: memref<1024x256xbf16, #tpu.memory_space<any>>, %arg22: memref<1024x256xbf16, #tpu.memory_space<any>>, %arg23: memref<256x128xbf16, #tpu.memory_space<any>>, %arg24: memref<128x64xbf16, #tpu.memory_space<any>>, %arg25: memref<2x64xf32, #tpu.memory_space<vmem>>, %arg26: memref<512x256xbf16, #tpu.memory_space<vmem>>, %arg27: memref<1024x256xbf16, #tpu.memory_space<vmem>>, %arg28: memref<1024x256xbf16, #tpu.memory_space<vmem>>, %arg29: memref<256x128xbf16, #tpu.memory_space<vmem>>, %arg30: memref<128x64xbf16, #tpu.memory_space<vmem>>, %arg31: memref<5x!tpu.dma_semaphore, #tpu.memory_space<semaphore_mem>>) attributes {dimension_semantics = [], scalar_prefetch = 0 : i64, scratch_operands = 6 : i64, tpu.core_type = #tpu.core_type<tc>} {
    %c0_i32 = arith.constant 0 : i32
    %0 = tpu.memref_slice %arg31[%c0_i32] : memref<5x!tpu.dma_semaphore, #tpu.memory_space<semaphore_mem>> -> memref<1x!tpu.dma_semaphore, #tpu.memory_space<semaphore_mem>>
    %1 = tpu.memref_squeeze %0 : memref<1x!tpu.dma_semaphore, #tpu.memory_space<semaphore_mem>> -> memref<!tpu.dma_semaphore, #tpu.memory_space<semaphore_mem>>
    tpu.enqueue_dma source(%arg20 : memref<512x256xbf16, #tpu.memory_space<any>>) target(%arg26 : memref<512x256xbf16, #tpu.memory_space<vmem>>) target_semaphore(%1 : memref<!tpu.dma_semaphore, #tpu.memory_space<semaphore_mem>>)
    %c1_i32 = arith.constant 1 : i32
    %2 = tpu.memref_slice %arg31[%c1_i32] : memref<5x!tpu.dma_semaphore, #tpu.memory_space<semaphore_mem>> -> memref<1x!tpu.dma_semaphore, #tpu.memory_space<semaphore_mem>>
    %3 = tpu.memref_squeeze %2 : memref<1x!tpu.dma_semaphore, #tpu.memory_space<semaphore_mem>> -> memref<!tpu.dma_semaphore, #tpu.memory_space<semaphore_mem>>
    tpu.enqueue_dma source(%arg21 : memref<1024x256xbf16, #tpu.memory_space<any>>) target(%arg27 : memref<1024x256xbf16, #tpu.memory_space<vmem>>) target_semaphore(%3 : memref<!tpu.dma_semaphore, #tpu.memory_space<semaphore_mem>>)
    %c2_i32 = arith.constant 2 : i32
    %4 = tpu.memref_slice %arg31[%c2_i32] : memref<5x!tpu.dma_semaphore, #tpu.memory_space<semaphore_mem>> -> memref<1x!tpu.dma_semaphore, #tpu.memory_space<semaphore_mem>>
    %5 = tpu.memref_squeeze %4 : memref<1x!tpu.dma_semaphore, #tpu.memory_space<semaphore_mem>> -> memref<!tpu.dma_semaphore, #tpu.memory_space<semaphore_mem>>
    tpu.enqueue_dma source(%arg22 : memref<1024x256xbf16, #tpu.memory_space<any>>) target(%arg28 : memref<1024x256xbf16, #tpu.memory_space<vmem>>) target_semaphore(%5 : memref<!tpu.dma_semaphore, #tpu.memory_space<semaphore_mem>>)
    %c3_i32 = arith.constant 3 : i32
    %6 = tpu.memref_slice %arg31[%c3_i32] : memref<5x!tpu.dma_semaphore, #tpu.memory_space<semaphore_mem>> -> memref<1x!tpu.dma_semaphore, #tpu.memory_space<semaphore_mem>>
    %7 = tpu.memref_squeeze %6 : memref<1x!tpu.dma_semaphore, #tpu.memory_space<semaphore_mem>> -> memref<!tpu.dma_semaphore, #tpu.memory_space<semaphore_mem>>
    tpu.enqueue_dma source(%arg23 : memref<256x128xbf16, #tpu.memory_space<any>>) target(%arg29 : memref<256x128xbf16, #tpu.memory_space<vmem>>) target_semaphore(%7 : memref<!tpu.dma_semaphore, #tpu.memory_space<semaphore_mem>>)
    %c4_i32 = arith.constant 4 : i32
    %8 = tpu.memref_slice %arg31[%c4_i32] : memref<5x!tpu.dma_semaphore, #tpu.memory_space<semaphore_mem>> -> memref<1x!tpu.dma_semaphore, #tpu.memory_space<semaphore_mem>>
    %9 = tpu.memref_squeeze %8 : memref<1x!tpu.dma_semaphore, #tpu.memory_space<semaphore_mem>> -> memref<!tpu.dma_semaphore, #tpu.memory_space<semaphore_mem>>
    tpu.enqueue_dma source(%arg24 : memref<128x64xbf16, #tpu.memory_space<any>>) target(%arg30 : memref<128x64xbf16, #tpu.memory_space<vmem>>) target_semaphore(%9 : memref<!tpu.dma_semaphore, #tpu.memory_space<semaphore_mem>>)
    %c0 = arith.constant 0 : index
    %c0_0 = arith.constant 0 : index
    %10 = vector.load %arg0[%c0, %c0_0] : memref<104x4xbf16, #tpu.memory_space<vmem>>, vector<104x4xbf16>
    %c0_1 = arith.constant 0 : index
    %c0_2 = arith.constant 0 : index
    %11 = vector.load %arg1[%c0_1, %c0_2] : memref<4x64xbf16, #tpu.memory_space<vmem>>, vector<4x64xbf16>
    %cst = arith.constant dense<0.000000e+00> : vector<104x64xf32>
    %12 = tpu.matmul %10, %11, %cst {dimension_numbers = #tpu.dot_dimension_numbers<[1], [0], [0], [1], [0, 0, 1, 1], [], []>} : vector<104x4xbf16>, vector<4x64xbf16>, vector<104x64xf32> -> vector<104x64xf32>
    %c0_3 = arith.constant 0 : index
    %c0_4 = arith.constant 0 : index
    %13 = vector.load %arg2[%c0_3, %c0_4] : memref<1x64xf32, #tpu.memory_space<vmem>>, vector<1x64xf32>
    %14 = vector.broadcast %13 : vector<1x64xf32> to vector<104x64xf32>
    %15 = arith.addf %12, %14 : vector<104x64xf32>
    %cst_5 = arith.constant 0.000000e+00 : f32
    %16 = vector.broadcast %cst_5 : f32 to vector<104x64xf32>
    %17 = arith.maximumf %15, %16 : vector<104x64xf32>
    %18 = arith.truncf %17 : vector<104x64xf32> to vector<104x64xbf16>
    %c0_6 = arith.constant 0 : index
    %c0_7 = arith.constant 0 : index
    %19 = vector.load %arg3[%c0_6, %c0_7] : memref<288x104xbf16, #tpu.memory_space<vmem>>, vector<288x104xbf16>
    %cst_8 = arith.constant dense<0.000000e+00> : vector<288x64xf32>
    %20 = tpu.matmul %19, %18, %cst_8 {dimension_numbers = #tpu.dot_dimension_numbers<[1], [0], [0], [1], [0, 0, 1, 1], [], []>} : vector<288x104xbf16>, vector<104x64xbf16>, vector<288x64xf32> -> vector<288x64xf32>
    %21 = arith.truncf %20 : vector<288x64xf32> to vector<288x64xbf16>
    %22 = vector.extract_strided_slice %21 {offsets = [0, 0], sizes = [72, 64], strides = [1, 1]} : vector<288x64xbf16> to vector<72x64xbf16>
    %c0_9 = arith.constant 0 : index
    %c0_10 = arith.constant 0 : index
    %23 = vector.load %arg4[%c0_9, %c0_10] : memref<256x64xbf16, #tpu.memory_space<vmem>>, vector<64x64xbf16>
    %cst_11 = arith.constant dense<0.000000e+00> : vector<72x64xf32>
    %24 = tpu.matmul %22, %23, %cst_11 {dimension_numbers = #tpu.dot_dimension_numbers<[1], [0], [0], [1], [0, 0, 1, 1], [], []>} : vector<72x64xbf16>, vector<64x64xbf16>, vector<72x64xf32> -> vector<72x64xf32>
    %25 = vector.extract_strided_slice %21 {offsets = [72, 0], sizes = [72, 64], strides = [1, 1]} : vector<288x64xbf16> to vector<72x64xbf16>
    %c64 = arith.constant 64 : index
    %c0_12 = arith.constant 0 : index
    %26 = vector.load %arg4[%c64, %c0_12] : memref<256x64xbf16, #tpu.memory_space<vmem>>, vector<64x64xbf16>
    %cst_13 = arith.constant dense<0.000000e+00> : vector<72x64xf32>
    %27 = tpu.matmul %25, %26, %cst_13 {dimension_numbers = #tpu.dot_dimension_numbers<[1], [0], [0], [1], [0, 0, 1, 1], [], []>} : vector<72x64xbf16>, vector<64x64xbf16>, vector<72x64xf32> -> vector<72x64xf32>
    %28 = arith.addf %24, %27 : vector<72x64xf32>
    %29 = vector.extract_strided_slice %21 {offsets = [144, 0], sizes = [72, 64], strides = [1, 1]} : vector<288x64xbf16> to vector<72x64xbf16>
    %c128 = arith.constant 128 : index
    %c0_14 = arith.constant 0 : index
    %30 = vector.load %arg4[%c128, %c0_14] : memref<256x64xbf16, #tpu.memory_space<vmem>>, vector<64x64xbf16>
    %cst_15 = arith.constant dense<0.000000e+00> : vector<72x64xf32>
    %31 = tpu.matmul %29, %30, %cst_15 {dimension_numbers = #tpu.dot_dimension_numbers<[1], [0], [0], [1], [0, 0, 1, 1], [], []>} : vector<72x64xbf16>, vector<64x64xbf16>, vector<72x64xf32> -> vector<72x64xf32>
    %32 = arith.addf %28, %31 : vector<72x64xf32>
    %33 = vector.extract_strided_slice %21 {offsets = [216, 0], sizes = [72, 64], strides = [1, 1]} : vector<288x64xbf16> to vector<72x64xbf16>
    %c192 = arith.constant 192 : index
    %c0_16 = arith.constant 0 : index
    %34 = vector.load %arg4[%c192, %c0_16] : memref<256x64xbf16, #tpu.memory_space<vmem>>, vector<64x64xbf16>
    %cst_17 = arith.constant dense<0.000000e+00> : vector<72x64xf32>
    %35 = tpu.matmul %33, %34, %cst_17 {dimension_numbers = #tpu.dot_dimension_numbers<[1], [0], [0], [1], [0, 0, 1, 1], [], []>} : vector<72x64xbf16>, vector<64x64xbf16>, vector<72x64xf32> -> vector<72x64xf32>
    %36 = arith.addf %32, %35 : vector<72x64xf32>
    %c0_18 = arith.constant 0 : index
    %c0_19 = arith.constant 0 : index
    %37 = vector.load %arg5[%c0_18, %c0_19] : memref<1x64xf32, #tpu.memory_space<vmem>>, vector<1x64xf32>
    %38 = vector.broadcast %37 : vector<1x64xf32> to vector<72x64xf32>
    %39 = arith.addf %36, %38 : vector<72x64xf32>
    %cst_20 = arith.constant 0.000000e+00 : f32
    %40 = vector.broadcast %cst_20 : f32 to vector<72x64xf32>
    %41 = arith.maximumf %39, %40 : vector<72x64xf32>
    %42 = arith.truncf %41 : vector<72x64xf32> to vector<72x64xbf16>
    %c0_21 = arith.constant 0 : index
    %c0_22 = arith.constant 0 : index
    %43 = vector.load %arg6[%c0_21, %c0_22] : memref<224x72xbf16, #tpu.memory_space<vmem>>, vector<224x72xbf16>
    %cst_23 = arith.constant dense<0.000000e+00> : vector<224x64xf32>
    %44 = tpu.matmul %43, %42, %cst_23 {dimension_numbers = #tpu.dot_dimension_numbers<[1], [0], [0], [1], [0, 0, 1, 1], [], []>} : vector<224x72xbf16>, vector<72x64xbf16>, vector<224x64xf32> -> vector<224x64xf32>
    %45 = arith.truncf %44 : vector<224x64xf32> to vector<224x64xbf16>
    %46 = vector.extract_strided_slice %45 {offsets = [0, 0], sizes = [56, 64], strides = [1, 1]} : vector<224x64xbf16> to vector<56x64xbf16>
    %c0_24 = arith.constant 0 : index
    %c0_25 = arith.constant 0 : index
    %47 = vector.load %arg7[%c0_24, %c0_25] : memref<256x128xbf16, #tpu.memory_space<vmem>>, vector<64x128xbf16>
    %cst_26 = arith.constant dense<0.000000e+00> : vector<56x128xf32>
    %48 = tpu.matmul %46, %47, %cst_26 {dimension_numbers = #tpu.dot_dimension_numbers<[1], [0], [0], [1], [0, 0, 1, 1], [], []>} : vector<56x64xbf16>, vector<64x128xbf16>, vector<56x128xf32> -> vector<56x128xf32>
    %49 = vector.extract_strided_slice %45 {offsets = [56, 0], sizes = [56, 64], strides = [1, 1]} : vector<224x64xbf16> to vector<56x64xbf16>
    %c64_27 = arith.constant 64 : index
    %c0_28 = arith.constant 0 : index
    %50 = vector.load %arg7[%c64_27, %c0_28] : memref<256x128xbf16, #tpu.memory_space<vmem>>, vector<64x128xbf16>
    %cst_29 = arith.constant dense<0.000000e+00> : vector<56x128xf32>
    %51 = tpu.matmul %49, %50, %cst_29 {dimension_numbers = #tpu.dot_dimension_numbers<[1], [0], [0], [1], [0, 0, 1, 1], [], []>} : vector<56x64xbf16>, vector<64x128xbf16>, vector<56x128xf32> -> vector<56x128xf32>
    %52 = arith.addf %48, %51 : vector<56x128xf32>
    %53 = vector.extract_strided_slice %45 {offsets = [112, 0], sizes = [56, 64], strides = [1, 1]} : vector<224x64xbf16> to vector<56x64xbf16>
    %c128_30 = arith.constant 128 : index
    %c0_31 = arith.constant 0 : index
    %54 = vector.load %arg7[%c128_30, %c0_31] : memref<256x128xbf16, #tpu.memory_space<vmem>>, vector<64x128xbf16>
    %cst_32 = arith.constant dense<0.000000e+00> : vector<56x128xf32>
    %55 = tpu.matmul %53, %54, %cst_32 {dimension_numbers = #tpu.dot_dimension_numbers<[1], [0], [0], [1], [0, 0, 1, 1], [], []>} : vector<56x64xbf16>, vector<64x128xbf16>, vector<56x128xf32> -> vector<56x128xf32>
    %56 = arith.addf %52, %55 : vector<56x128xf32>
    %57 = vector.extract_strided_slice %45 {offsets = [168, 0], sizes = [56, 64], strides = [1, 1]} : vector<224x64xbf16> to vector<56x64xbf16>
    %c192_33 = arith.constant 192 : index
    %c0_34 = arith.constant 0 : index
    %58 = vector.load %arg7[%c192_33, %c0_34] : memref<256x128xbf16, #tpu.memory_space<vmem>>, vector<64x128xbf16>
    %cst_35 = arith.constant dense<0.000000e+00> : vector<56x128xf32>
    %59 = tpu.matmul %57, %58, %cst_35 {dimension_numbers = #tpu.dot_dimension_numbers<[1], [0], [0], [1], [0, 0, 1, 1], [], []>} : vector<56x64xbf16>, vector<64x128xbf16>, vector<56x128xf32> -> vector<56x128xf32>
    %60 = arith.addf %56, %59 : vector<56x128xf32>
    %c0_36 = arith.constant 0 : index
    %c0_37 = arith.constant 0 : index
    %61 = vector.load %arg8[%c0_36, %c0_37] : memref<1x128xf32, #tpu.memory_space<vmem>>, vector<1x128xf32>
    %62 = vector.broadcast %61 : vector<1x128xf32> to vector<56x128xf32>
    %63 = arith.addf %60, %62 : vector<56x128xf32>
    %cst_38 = arith.constant 0.000000e+00 : f32
    %64 = vector.broadcast %cst_38 : f32 to vector<56x128xf32>
    %65 = arith.maximumf %63, %64 : vector<56x128xf32>
    %66 = arith.truncf %65 : vector<56x128xf32> to vector<56x128xbf16>
    %c0_39 = arith.constant 0 : index
    %c0_40 = arith.constant 0 : index
    %67 = vector.load %arg9[%c0_39, %c0_40] : memref<128x56xbf16, #tpu.memory_space<vmem>>, vector<128x56xbf16>
    %cst_41 = arith.constant dense<0.000000e+00> : vector<128x128xf32>
    %68 = tpu.matmul %67, %66, %cst_41 {dimension_numbers = #tpu.dot_dimension_numbers<[1], [0], [0], [1], [0, 0, 1, 1], [], []>} : vector<128x56xbf16>, vector<56x128xbf16>, vector<128x128xf32> -> vector<128x128xf32>
    %69 = arith.truncf %68 : vector<128x128xf32> to vector<128x128xbf16>
    %70 = vector.extract_strided_slice %69 {offsets = [0, 0], sizes = [32, 128], strides = [1, 1]} : vector<128x128xbf16> to vector<32x128xbf16>
    %c0_42 = arith.constant 0 : index
    %c0_43 = arith.constant 0 : index
    %71 = vector.load %arg10[%c0_42, %c0_43] : memref<512x128xbf16, #tpu.memory_space<vmem>>, vector<128x128xbf16>
    %cst_44 = arith.constant dense<0.000000e+00> : vector<32x128xf32>
    %72 = tpu.matmul %70, %71, %cst_44 {dimension_numbers = #tpu.dot_dimension_numbers<[1], [0], [0], [1], [0, 0, 1, 1], [], []>} : vector<32x128xbf16>, vector<128x128xbf16>, vector<32x128xf32> -> vector<32x128xf32>
    %73 = vector.extract_strided_slice %69 {offsets = [32, 0], sizes = [32, 128], strides = [1, 1]} : vector<128x128xbf16> to vector<32x128xbf16>
    %c128_45 = arith.constant 128 : index
    %c0_46 = arith.constant 0 : index
    %74 = vector.load %arg10[%c128_45, %c0_46] : memref<512x128xbf16, #tpu.memory_space<vmem>>, vector<128x128xbf16>
    %cst_47 = arith.constant dense<0.000000e+00> : vector<32x128xf32>
    %75 = tpu.matmul %73, %74, %cst_47 {dimension_numbers = #tpu.dot_dimension_numbers<[1], [0], [0], [1], [0, 0, 1, 1], [], []>} : vector<32x128xbf16>, vector<128x128xbf16>, vector<32x128xf32> -> vector<32x128xf32>
    %76 = arith.addf %72, %75 : vector<32x128xf32>
    %77 = vector.extract_strided_slice %69 {offsets = [64, 0], sizes = [32, 128], strides = [1, 1]} : vector<128x128xbf16> to vector<32x128xbf16>
    %c256 = arith.constant 256 : index
    %c0_48 = arith.constant 0 : index
    %78 = vector.load %arg10[%c256, %c0_48] : memref<512x128xbf16, #tpu.memory_space<vmem>>, vector<128x128xbf16>
    %cst_49 = arith.constant dense<0.000000e+00> : vector<32x128xf32>
    %79 = tpu.matmul %77, %78, %cst_49 {dimension_numbers = #tpu.dot_dimension_numbers<[1], [0], [0], [1], [0, 0, 1, 1], [], []>} : vector<32x128xbf16>, vector<128x128xbf16>, vector<32x128xf32> -> vector<32x128xf32>
    %80 = arith.addf %76, %79 : vector<32x128xf32>
    %81 = vector.extract_strided_slice %69 {offsets = [96, 0], sizes = [32, 128], strides = [1, 1]} : vector<128x128xbf16> to vector<32x128xbf16>
    %c384 = arith.constant 384 : index
    %c0_50 = arith.constant 0 : index
    %82 = vector.load %arg10[%c384, %c0_50] : memref<512x128xbf16, #tpu.memory_space<vmem>>, vector<128x128xbf16>
    %cst_51 = arith.constant dense<0.000000e+00> : vector<32x128xf32>
    %83 = tpu.matmul %81, %82, %cst_51 {dimension_numbers = #tpu.dot_dimension_numbers<[1], [0], [0], [1], [0, 0, 1, 1], [], []>} : vector<32x128xbf16>, vector<128x128xbf16>, vector<32x128xf32> -> vector<32x128xf32>
    %84 = arith.addf %80, %83 : vector<32x128xf32>
    %c0_52 = arith.constant 0 : index
    %c0_53 = arith.constant 0 : index
    %85 = vector.load %arg11[%c0_52, %c0_53] : memref<1x128xf32, #tpu.memory_space<vmem>>, vector<1x128xf32>
    %86 = vector.broadcast %85 : vector<1x128xf32> to vector<32x128xf32>
    %87 = arith.addf %84, %86 : vector<32x128xf32>
    %cst_54 = arith.constant 0.000000e+00 : f32
    %88 = vector.broadcast %cst_54 : f32 to vector<32x128xf32>
    %89 = arith.maximumf %87, %88 : vector<32x128xf32>
    %90 = arith.truncf %89 : vector<32x128xf32> to vector<32x128xbf16>
    %c0_i32_55 = arith.constant 0 : i32
    %91 = tpu.memref_slice %arg31[%c0_i32_55] : memref<5x!tpu.dma_semaphore, #tpu.memory_space<semaphore_mem>> -> memref<1x!tpu.dma_semaphore, #tpu.memory_space<semaphore_mem>>
    %92 = tpu.memref_squeeze %91 : memref<1x!tpu.dma_semaphore, #tpu.memory_space<semaphore_mem>> -> memref<!tpu.dma_semaphore, #tpu.memory_space<semaphore_mem>>
    tpu.wait_dma2 semaphore(%92 : memref<!tpu.dma_semaphore, #tpu.memory_space<semaphore_mem>>) src(%arg20 : memref<512x256xbf16, #tpu.memory_space<any>>) dst(%arg26 : memref<512x256xbf16, #tpu.memory_space<vmem>>)
    %c0_56 = arith.constant 0 : index
    %c0_57 = arith.constant 0 : index
    %93 = vector.load %arg12[%c0_56, %c0_57] : memref<96x32xbf16, #tpu.memory_space<vmem>>, vector<96x32xbf16>
    %cst_58 = arith.constant dense<0.000000e+00> : vector<96x128xf32>
    %94 = tpu.matmul %93, %90, %cst_58 {dimension_numbers = #tpu.dot_dimension_numbers<[1], [0], [0], [1], [0, 0, 1, 1], [], []>} : vector<96x32xbf16>, vector<32x128xbf16>, vector<96x128xf32> -> vector<96x128xf32>
    %95 = arith.truncf %94 : vector<96x128xf32> to vector<96x128xbf16>
    %96 = vector.extract_strided_slice %95 {offsets = [0, 0], sizes = [24, 128], strides = [1, 1]} : vector<96x128xbf16> to vector<24x128xbf16>
    %c0_59 = arith.constant 0 : index
    %c0_60 = arith.constant 0 : index
    %97 = vector.load %arg26[%c0_59, %c0_60] : memref<512x256xbf16, #tpu.memory_space<vmem>>, vector<128x256xbf16>
    %cst_61 = arith.constant dense<0.000000e+00> : vector<24x256xf32>
    %98 = tpu.matmul %96, %97, %cst_61 {dimension_numbers = #tpu.dot_dimension_numbers<[1], [0], [0], [1], [0, 0, 1, 1], [], []>} : vector<24x128xbf16>, vector<128x256xbf16>, vector<24x256xf32> -> vector<24x256xf32>
    %99 = vector.extract_strided_slice %95 {offsets = [24, 0], sizes = [24, 128], strides = [1, 1]} : vector<96x128xbf16> to vector<24x128xbf16>
    %c128_62 = arith.constant 128 : index
    %c0_63 = arith.constant 0 : index
    %100 = vector.load %arg26[%c128_62, %c0_63] : memref<512x256xbf16, #tpu.memory_space<vmem>>, vector<128x256xbf16>
    %cst_64 = arith.constant dense<0.000000e+00> : vector<24x256xf32>
    %101 = tpu.matmul %99, %100, %cst_64 {dimension_numbers = #tpu.dot_dimension_numbers<[1], [0], [0], [1], [0, 0, 1, 1], [], []>} : vector<24x128xbf16>, vector<128x256xbf16>, vector<24x256xf32> -> vector<24x256xf32>
    %102 = arith.addf %98, %101 : vector<24x256xf32>
    %103 = vector.extract_strided_slice %95 {offsets = [48, 0], sizes = [24, 128], strides = [1, 1]} : vector<96x128xbf16> to vector<24x128xbf16>
    %c256_65 = arith.constant 256 : index
    %c0_66 = arith.constant 0 : index
    %104 = vector.load %arg26[%c256_65, %c0_66] : memref<512x256xbf16, #tpu.memory_space<vmem>>, vector<128x256xbf16>
    %cst_67 = arith.constant dense<0.000000e+00> : vector<24x256xf32>
    %105 = tpu.matmul %103, %104, %cst_67 {dimension_numbers = #tpu.dot_dimension_numbers<[1], [0], [0], [1], [0, 0, 1, 1], [], []>} : vector<24x128xbf16>, vector<128x256xbf16>, vector<24x256xf32> -> vector<24x256xf32>
    %106 = arith.addf %102, %105 : vector<24x256xf32>
    %107 = vector.extract_strided_slice %95 {offsets = [72, 0], sizes = [24, 128], strides = [1, 1]} : vector<96x128xbf16> to vector<24x128xbf16>
    %c384_68 = arith.constant 384 : index
    %c0_69 = arith.constant 0 : index
    %108 = vector.load %arg26[%c384_68, %c0_69] : memref<512x256xbf16, #tpu.memory_space<vmem>>, vector<128x256xbf16>
    %cst_70 = arith.constant dense<0.000000e+00> : vector<24x256xf32>
    %109 = tpu.matmul %107, %108, %cst_70 {dimension_numbers = #tpu.dot_dimension_numbers<[1], [0], [0], [1], [0, 0, 1, 1], [], []>} : vector<24x128xbf16>, vector<128x256xbf16>, vector<24x256xf32> -> vector<24x256xf32>
    %110 = arith.addf %106, %109 : vector<24x256xf32>
    %c0_71 = arith.constant 0 : index
    %c0_72 = arith.constant 0 : index
    %111 = vector.load %arg13[%c0_71, %c0_72] : memref<1x256xf32, #tpu.memory_space<vmem>>, vector<1x256xf32>
    %112 = vector.broadcast %111 : vector<1x256xf32> to vector<24x256xf32>
    %113 = arith.addf %110, %112 : vector<24x256xf32>
    %cst_73 = arith.constant 0.000000e+00 : f32
    %114 = vector.broadcast %cst_73 : f32 to vector<24x256xf32>
    %115 = arith.maximumf %113, %114 : vector<24x256xf32>
    %116 = arith.truncf %115 : vector<24x256xf32> to vector<24x256xbf16>
    %c1_i32_74 = arith.constant 1 : i32
    %117 = tpu.memref_slice %arg31[%c1_i32_74] : memref<5x!tpu.dma_semaphore, #tpu.memory_space<semaphore_mem>> -> memref<1x!tpu.dma_semaphore, #tpu.memory_space<semaphore_mem>>
    %118 = tpu.memref_squeeze %117 : memref<1x!tpu.dma_semaphore, #tpu.memory_space<semaphore_mem>> -> memref<!tpu.dma_semaphore, #tpu.memory_space<semaphore_mem>>
    tpu.wait_dma2 semaphore(%118 : memref<!tpu.dma_semaphore, #tpu.memory_space<semaphore_mem>>) src(%arg21 : memref<1024x256xbf16, #tpu.memory_space<any>>) dst(%arg27 : memref<1024x256xbf16, #tpu.memory_space<vmem>>)
    %c0_75 = arith.constant 0 : index
    %c0_76 = arith.constant 0 : index
    %119 = vector.load %arg14[%c0_75, %c0_76] : memref<32x24xbf16, #tpu.memory_space<vmem>>, vector<32x24xbf16>
    %cst_77 = arith.constant dense<0.000000e+00> : vector<32x256xf32>
    %120 = tpu.matmul %119, %116, %cst_77 {dimension_numbers = #tpu.dot_dimension_numbers<[1], [0], [0], [1], [0, 0, 1, 1], [], []>} : vector<32x24xbf16>, vector<24x256xbf16>, vector<32x256xf32> -> vector<32x256xf32>
    %121 = arith.truncf %120 : vector<32x256xf32> to vector<32x256xbf16>
    %122 = vector.extract_strided_slice %121 {offsets = [0, 0], sizes = [8, 256], strides = [1, 1]} : vector<32x256xbf16> to vector<8x256xbf16>
    %c0_78 = arith.constant 0 : index
    %c0_79 = arith.constant 0 : index
    %123 = vector.load %arg27[%c0_78, %c0_79] : memref<1024x256xbf16, #tpu.memory_space<vmem>>, vector<256x256xbf16>
    %cst_80 = arith.constant dense<0.000000e+00> : vector<8x256xf32>
    %124 = tpu.matmul %122, %123, %cst_80 {dimension_numbers = #tpu.dot_dimension_numbers<[1], [0], [0], [1], [0, 0, 1, 1], [], []>} : vector<8x256xbf16>, vector<256x256xbf16>, vector<8x256xf32> -> vector<8x256xf32>
    %125 = vector.extract_strided_slice %121 {offsets = [8, 0], sizes = [8, 256], strides = [1, 1]} : vector<32x256xbf16> to vector<8x256xbf16>
    %c256_81 = arith.constant 256 : index
    %c0_82 = arith.constant 0 : index
    %126 = vector.load %arg27[%c256_81, %c0_82] : memref<1024x256xbf16, #tpu.memory_space<vmem>>, vector<256x256xbf16>
    %cst_83 = arith.constant dense<0.000000e+00> : vector<8x256xf32>
    %127 = tpu.matmul %125, %126, %cst_83 {dimension_numbers = #tpu.dot_dimension_numbers<[1], [0], [0], [1], [0, 0, 1, 1], [], []>} : vector<8x256xbf16>, vector<256x256xbf16>, vector<8x256xf32> -> vector<8x256xf32>
    %128 = arith.addf %124, %127 : vector<8x256xf32>
    %129 = vector.extract_strided_slice %121 {offsets = [16, 0], sizes = [8, 256], strides = [1, 1]} : vector<32x256xbf16> to vector<8x256xbf16>
    %c512 = arith.constant 512 : index
    %c0_84 = arith.constant 0 : index
    %130 = vector.load %arg27[%c512, %c0_84] : memref<1024x256xbf16, #tpu.memory_space<vmem>>, vector<256x256xbf16>
    %cst_85 = arith.constant dense<0.000000e+00> : vector<8x256xf32>
    %131 = tpu.matmul %129, %130, %cst_85 {dimension_numbers = #tpu.dot_dimension_numbers<[1], [0], [0], [1], [0, 0, 1, 1], [], []>} : vector<8x256xbf16>, vector<256x256xbf16>, vector<8x256xf32> -> vector<8x256xf32>
    %132 = arith.addf %128, %131 : vector<8x256xf32>
    %133 = vector.extract_strided_slice %121 {offsets = [24, 0], sizes = [8, 256], strides = [1, 1]} : vector<32x256xbf16> to vector<8x256xbf16>
    %c768 = arith.constant 768 : index
    %c0_86 = arith.constant 0 : index
    %134 = vector.load %arg27[%c768, %c0_86] : memref<1024x256xbf16, #tpu.memory_space<vmem>>, vector<256x256xbf16>
    %cst_87 = arith.constant dense<0.000000e+00> : vector<8x256xf32>
    %135 = tpu.matmul %133, %134, %cst_87 {dimension_numbers = #tpu.dot_dimension_numbers<[1], [0], [0], [1], [0, 0, 1, 1], [], []>} : vector<8x256xbf16>, vector<256x256xbf16>, vector<8x256xf32> -> vector<8x256xf32>
    %136 = arith.addf %132, %135 : vector<8x256xf32>
    %c0_88 = arith.constant 0 : index
    %c0_89 = arith.constant 0 : index
    %137 = vector.load %arg15[%c0_88, %c0_89] : memref<1x256xf32, #tpu.memory_space<vmem>>, vector<1x256xf32>
    %138 = vector.broadcast %137 : vector<1x256xf32> to vector<8x256xf32>
    %139 = arith.addf %136, %138 : vector<8x256xf32>
    %cst_90 = arith.constant 0.000000e+00 : f32
    %140 = vector.broadcast %cst_90 : f32 to vector<8x256xf32>
    %141 = arith.maximumf %139, %140 : vector<8x256xf32>
    %142 = arith.truncf %141 : vector<8x256xf32> to vector<8x256xbf16>
    %c2_i32_91 = arith.constant 2 : i32
    %143 = tpu.memref_slice %arg31[%c2_i32_91] : memref<5x!tpu.dma_semaphore, #tpu.memory_space<semaphore_mem>> -> memref<1x!tpu.dma_semaphore, #tpu.memory_space<semaphore_mem>>
    %144 = tpu.memref_squeeze %143 : memref<1x!tpu.dma_semaphore, #tpu.memory_space<semaphore_mem>> -> memref<!tpu.dma_semaphore, #tpu.memory_space<semaphore_mem>>
    tpu.wait_dma2 semaphore(%144 : memref<!tpu.dma_semaphore, #tpu.memory_space<semaphore_mem>>) src(%arg22 : memref<1024x256xbf16, #tpu.memory_space<any>>) dst(%arg28 : memref<1024x256xbf16, #tpu.memory_space<vmem>>)
    %c0_92 = arith.constant 0 : index
    %c0_93 = arith.constant 0 : index
    %145 = vector.load %arg16[%c0_92, %c0_93] : memref<32x8xbf16, #tpu.memory_space<vmem>>, vector<32x8xbf16>
    %cst_94 = arith.constant dense<0.000000e+00> : vector<32x256xf32>
    %146 = tpu.matmul %145, %142, %cst_94 {dimension_numbers = #tpu.dot_dimension_numbers<[1], [0], [0], [1], [0, 0, 1, 1], [], []>} : vector<32x8xbf16>, vector<8x256xbf16>, vector<32x256xf32> -> vector<32x256xf32>
    %147 = arith.truncf %146 : vector<32x256xf32> to vector<32x256xbf16>
    %148 = vector.extract_strided_slice %147 {offsets = [0, 0], sizes = [8, 256], strides = [1, 1]} : vector<32x256xbf16> to vector<8x256xbf16>
    %c0_95 = arith.constant 0 : index
    %c0_96 = arith.constant 0 : index
    %149 = vector.load %arg28[%c0_95, %c0_96] : memref<1024x256xbf16, #tpu.memory_space<vmem>>, vector<256x256xbf16>
    %cst_97 = arith.constant dense<0.000000e+00> : vector<8x256xf32>
    %150 = tpu.matmul %148, %149, %cst_97 {dimension_numbers = #tpu.dot_dimension_numbers<[1], [0], [0], [1], [0, 0, 1, 1], [], []>} : vector<8x256xbf16>, vector<256x256xbf16>, vector<8x256xf32> -> vector<8x256xf32>
    %151 = vector.extract_strided_slice %147 {offsets = [8, 0], sizes = [8, 256], strides = [1, 1]} : vector<32x256xbf16> to vector<8x256xbf16>
    %c256_98 = arith.constant 256 : index
    %c0_99 = arith.constant 0 : index
    %152 = vector.load %arg28[%c256_98, %c0_99] : memref<1024x256xbf16, #tpu.memory_space<vmem>>, vector<256x256xbf16>
    %cst_100 = arith.constant dense<0.000000e+00> : vector<8x256xf32>
    %153 = tpu.matmul %151, %152, %cst_100 {dimension_numbers = #tpu.dot_dimension_numbers<[1], [0], [0], [1], [0, 0, 1, 1], [], []>} : vector<8x256xbf16>, vector<256x256xbf16>, vector<8x256xf32> -> vector<8x256xf32>
    %154 = arith.addf %150, %153 : vector<8x256xf32>
    %155 = vector.extract_strided_slice %147 {offsets = [16, 0], sizes = [8, 256], strides = [1, 1]} : vector<32x256xbf16> to vector<8x256xbf16>
    %c512_101 = arith.constant 512 : index
    %c0_102 = arith.constant 0 : index
    %156 = vector.load %arg28[%c512_101, %c0_102] : memref<1024x256xbf16, #tpu.memory_space<vmem>>, vector<256x256xbf16>
    %cst_103 = arith.constant dense<0.000000e+00> : vector<8x256xf32>
    %157 = tpu.matmul %155, %156, %cst_103 {dimension_numbers = #tpu.dot_dimension_numbers<[1], [0], [0], [1], [0, 0, 1, 1], [], []>} : vector<8x256xbf16>, vector<256x256xbf16>, vector<8x256xf32> -> vector<8x256xf32>
    %158 = arith.addf %154, %157 : vector<8x256xf32>
    %159 = vector.extract_strided_slice %147 {offsets = [24, 0], sizes = [8, 256], strides = [1, 1]} : vector<32x256xbf16> to vector<8x256xbf16>
    %c768_104 = arith.constant 768 : index
    %c0_105 = arith.constant 0 : index
    %160 = vector.load %arg28[%c768_104, %c0_105] : memref<1024x256xbf16, #tpu.memory_space<vmem>>, vector<256x256xbf16>
    %cst_106 = arith.constant dense<0.000000e+00> : vector<8x256xf32>
    %161 = tpu.matmul %159, %160, %cst_106 {dimension_numbers = #tpu.dot_dimension_numbers<[1], [0], [0], [1], [0, 0, 1, 1], [], []>} : vector<8x256xbf16>, vector<256x256xbf16>, vector<8x256xf32> -> vector<8x256xf32>
    %162 = arith.addf %158, %161 : vector<8x256xf32>
    %c0_107 = arith.constant 0 : index
    %c0_108 = arith.constant 0 : index
    %163 = vector.load %arg17[%c0_107, %c0_108] : memref<1x256xf32, #tpu.memory_space<vmem>>, vector<1x256xf32>
    %164 = vector.broadcast %163 : vector<1x256xf32> to vector<8x256xf32>
    %165 = arith.addf %162, %164 : vector<8x256xf32>
    %cst_109 = arith.constant 0.000000e+00 : f32
    %166 = vector.broadcast %cst_109 : f32 to vector<8x256xf32>
    %167 = arith.maximumf %165, %166 : vector<8x256xf32>
    %168 = arith.truncf %167 : vector<8x256xf32> to vector<8x256xbf16>
    %c3_i32_110 = arith.constant 3 : i32
    %169 = tpu.memref_slice %arg31[%c3_i32_110] : memref<5x!tpu.dma_semaphore, #tpu.memory_space<semaphore_mem>> -> memref<1x!tpu.dma_semaphore, #tpu.memory_space<semaphore_mem>>
    %170 = tpu.memref_squeeze %169 : memref<1x!tpu.dma_semaphore, #tpu.memory_space<semaphore_mem>> -> memref<!tpu.dma_semaphore, #tpu.memory_space<semaphore_mem>>
    tpu.wait_dma2 semaphore(%170 : memref<!tpu.dma_semaphore, #tpu.memory_space<semaphore_mem>>) src(%arg23 : memref<256x128xbf16, #tpu.memory_space<any>>) dst(%arg29 : memref<256x128xbf16, #tpu.memory_space<vmem>>)
    %c0_111 = arith.constant 0 : index
    %c0_112 = arith.constant 0 : index
    %171 = vector.load %arg29[%c0_111, %c0_112] : memref<256x128xbf16, #tpu.memory_space<vmem>>, vector<256x128xbf16>
    %cst_113 = arith.constant dense<0.000000e+00> : vector<8x128xf32>
    %172 = tpu.matmul %168, %171, %cst_113 {dimension_numbers = #tpu.dot_dimension_numbers<[1], [0], [0], [1], [0, 0, 1, 1], [], []>} : vector<8x256xbf16>, vector<256x128xbf16>, vector<8x128xf32> -> vector<8x128xf32>
    %c0_114 = arith.constant 0 : index
    %c0_115 = arith.constant 0 : index
    %173 = vector.load %arg18[%c0_114, %c0_115] : memref<1x128xf32, #tpu.memory_space<vmem>>, vector<1x128xf32>
    %174 = vector.broadcast %173 : vector<1x128xf32> to vector<8x128xf32>
    %175 = arith.addf %172, %174 : vector<8x128xf32>
    %cst_116 = arith.constant 0.000000e+00 : f32
    %176 = vector.broadcast %cst_116 : f32 to vector<8x128xf32>
    %177 = arith.maximumf %175, %176 : vector<8x128xf32>
    %178 = arith.truncf %177 : vector<8x128xf32> to vector<8x128xbf16>
    %c4_i32_117 = arith.constant 4 : i32
    %179 = tpu.memref_slice %arg31[%c4_i32_117] : memref<5x!tpu.dma_semaphore, #tpu.memory_space<semaphore_mem>> -> memref<1x!tpu.dma_semaphore, #tpu.memory_space<semaphore_mem>>
    %180 = tpu.memref_squeeze %179 : memref<1x!tpu.dma_semaphore, #tpu.memory_space<semaphore_mem>> -> memref<!tpu.dma_semaphore, #tpu.memory_space<semaphore_mem>>
    tpu.wait_dma2 semaphore(%180 : memref<!tpu.dma_semaphore, #tpu.memory_space<semaphore_mem>>) src(%arg24 : memref<128x64xbf16, #tpu.memory_space<any>>) dst(%arg30 : memref<128x64xbf16, #tpu.memory_space<vmem>>)
    %c0_118 = arith.constant 0 : index
    %c0_119 = arith.constant 0 : index
    %181 = vector.load %arg30[%c0_118, %c0_119] : memref<128x64xbf16, #tpu.memory_space<vmem>>, vector<128x64xbf16>
    %cst_120 = arith.constant dense<0.000000e+00> : vector<8x64xf32>
    %182 = tpu.matmul %178, %181, %cst_120 {dimension_numbers = #tpu.dot_dimension_numbers<[1], [0], [0], [1], [0, 0, 1, 1], [], []>} : vector<8x128xbf16>, vector<128x64xbf16>, vector<8x64xf32> -> vector<8x64xf32>
    %c0_121 = arith.constant 0 : index
    %c0_122 = arith.constant 0 : index
    %183 = vector.load %arg19[%c0_121, %c0_122] : memref<1x64xf32, #tpu.memory_space<vmem>>, vector<1x64xf32>
    %184 = vector.broadcast %183 : vector<1x64xf32> to vector<8x64xf32>
    %185 = arith.addf %182, %184 : vector<8x64xf32>
    %186 = vector.extract_strided_slice %185 {offsets = [0, 0], sizes = [2, 64], strides = [1, 1]} : vector<8x64xf32> to vector<2x64xf32>
    %c0_123 = arith.constant 0 : index
    %c0_124 = arith.constant 0 : index
    %187 = vector.load %arg25[%c0_123, %c0_124] : memref<2x64xf32, #tpu.memory_space<vmem>>, vector<2x64xf32>
    tpu.vector_store %arg25[%c0_123, %c0_124], %186 {strides = array<i32>} : memref<2x64xf32, #tpu.memory_space<vmem>>, vector<2x64xf32>,
    return
  }
}

</mosaic_0001>

<llo_original>
// kernel: cnn_forward.1
$region0: #{cnn_forward.1}
  #allocation0 [shape = 'u32[]', space=smem, size = 0x4, offset = 0x4, fixed_abs, tag = 'smem constant byte address 0x4 - core index']
  #allocation1 [shape = 'u32[144,128]{1,0:T(1,128)}', space=vmem, size = 0x12000, scoped, tag = 'internal scratch']
  #allocation2 [shape = 'bf16[512,256]{1,0:T(16,128)(2,1)}', space=vmem, size = 0x40000, scoped, tag = 'scratch operand']
  #allocation3 [shape = 'bf16[1024,256]{1,0:T(16,128)(2,1)}', space=vmem, size = 0x80000, scoped, tag = 'scratch operand']
  #allocation4 [shape = 'bf16[1024,256]{1,0:T(16,128)(2,1)}', space=vmem, size = 0x80000, scoped, tag = 'scratch operand']
  #allocation5 [shape = 'bf16[256,128]{1,0:T(16,128)(2,1)}', space=vmem, size = 0x10000, scoped, tag = 'scratch operand']
  #allocation6 [shape = 'bf16[128,64]{1,0:T(16,128)(2,1)}', space=vmem, size = 0x8000, scoped, tag = 'scratch operand']
  #allocation7 [shape = 's32[5]{0}', space=sflag, size = 0x14, scoped, tag = 'scratch operand']
  #allocation21 [shape = 's32[]', space=sflag, size = 0x4, offset = 0, fixed_abs, tag = 'sflag constant byte address 0x0 - dummy sync flag']
  #allocation22 [shape = 's32[]', space=sflag, size = 0x4, offset = 0, fixed_abs, tag = 'sflag constant byte address 0x0 - dummy sync flag']
  #allocation24 [shape = 's32[]', space=sflag, size = 0x4, offset = 0, fixed_abs, tag = 'sflag constant byte address 0x0 - dummy sync flag']
  #allocation26 [shape = 's32[]', space=sflag, size = 0x4, offset = 0, fixed_abs, tag = 'sflag constant byte address 0x0 - dummy sync flag']
  #allocation27 [shape = 's32[]', space=sflag, size = 0x4, offset = 0, fixed_abs, tag = 'sflag constant byte address 0x0 - dummy sync flag']
  #allocation28 [shape = 'u32[]', space=smem, size = 0x4, offset = 0x44, fixed_abs, tag = 'smem constant byte address 0x44 - assertion arg 0']
  #allocation29 [shape = 'u32[]', space=smem, size = 0x4, offset = 0x48, fixed_abs, tag = 'smem constant byte address 0x48 - assertion arg 1']
  #allocation30 [shape = 's32[]', space=sflag, size = 0x4, offset = 0, fixed_abs, tag = 'sflag constant byte address 0x0 - dummy sync flag']
  %s0 = inlined_call_operand.vmem [shape: bf16[104,4], index: 0, kind: input, shape index: {}]
  %s1 = inlined_call_operand.hbm [shape: bf16[4,64], index: 1, kind: input, shape index: {}]
  %s2 = inlined_call_operand.hbm [shape: f32[1,64], index: 2, kind: input, shape index: {}]
  %s3 = inlined_call_operand.vmem [shape: bf16[288,104], index: 3, kind: input, shape index: {}]
  %s4 = inlined_call_operand.vmem [shape: bf16[256,64], index: 4, kind: input, shape index: {}]
  %s5 = inlined_call_operand.hbm [shape: f32[1,64], index: 5, kind: input, shape index: {}]
  %s6 = inlined_call_operand.vmem [shape: bf16[224,72], index: 6, kind: input, shape index: {}]
  %s7 = inlined_call_operand.hbm [shape: bf16[256,128], index: 7, kind: input, shape index: {}]
  %s8 = inlined_call_operand.hbm [shape: f32[1,128], index: 8, kind: input, shape index: {}]
  %s9 = inlined_call_operand.vmem [shape: bf16[128,56], index: 9, kind: input, shape index: {}]
  %s10 = inlined_call_operand.vmem [shape: bf16[512,128], index: 10, kind: input, shape index: {}]
  %s11 = inlined_call_operand.hbm [shape: f32[1,128], index: 11, kind: input, shape index: {}]
  %s12 = inlined_call_operand.vmem [shape: bf16[96,32], index: 12, kind: input, shape index: {}]
  %s13 = inlined_call_operand.hbm [shape: f32[1,256], index: 13, kind: input, shape index: {}]
  %s14 = inlined_call_operand.vmem [shape: bf16[32,24], index: 14, kind: input, shape index: {}]
  %s15 = inlined_call_operand.vmem [shape: f32[1,256], index: 15, kind: input, shape index: {}]
  %s16 = inlined_call_operand.vmem [shape: bf16[32,8], index: 16, kind: input, shape index: {}]
  %s17 = inlined_call_operand.vmem [shape: f32[1,256], index: 17, kind: input, shape index: {}]
  %s18 = inlined_call_operand.vmem [shape: f32[1,128], index: 18, kind: input, shape index: {}]
  %s19 = inlined_call_operand.vmem [shape: f32[1,64], index: 19, kind: input, shape index: {}]
  %s20 = inlined_call_operand.vmem [shape: bf16[512,256], index: 20, kind: input, shape index: {}]
  %s21 = inlined_call_operand.hbm [shape: bf16[1024,256], index: 21, kind: input, shape index: {}]
  %s22 = inlined_call_operand.hbm [shape: bf16[1024,256], index: 22, kind: input, shape index: {}]
  %s23 = inlined_call_operand.hbm [shape: bf16[256,128], index: 23, kind: input, shape index: {}]
  %s24 = inlined_call_operand.vmem [shape: bf16[128,64], index: 24, kind: input, shape index: {}]
  %s25 = inlined_call_operand.hbm [shape: f32[2,64], index: 25, kind: output, shape index: {}]
  %s26 = sld [smem:[#allocation0]]
  $region193: #{cnn_forward.1} parent=0
    _
  %s28 = ssub.s32 1, %s26
  %s29 = scalar_select 0, %s28, %s26
  $region1: #{cnn_forward.1} parent=0
    #allocation8 [shape = 'u8[1024]{0}', space=vmem, size = 0x400, scoped, tag = 'input window, operand 1, single buffered']
    #allocation9 [shape = 's32[1]{0}', space=sflag, size = 0x4, scoped, tag = 'scoped memory for cnn_forward.1']
    #allocation10 [shape = 's32[1]{0}', space=sflag, size = 0x4, scoped, tag = 'scoped memory for cnn_forward.1']
    #allocation11 [shape = 'u8[512]{0}', space=vmem, size = 0x400, scoped, tag = 'input window, operand 2, single buffered']
    #allocation12 [shape = 's32[1]{0}', space=sflag, size = 0x4, scoped, tag = 'scoped memory for cnn_forward.1']
    #allocation13 [shape = 'u8[512]{0}', space=vmem, size = 0x400, scoped, tag = 'input window, operand 5, single buffered']
    #allocation14 [shape = 'u8[65536]{0}', space=vmem, size = 0x10000, scoped, tag = 'input window, operand 7, single buffered']
    #allocation15 [shape = 's32[1]{0}', space=sflag, size = 0x4, scoped, tag = 'scoped memory for cnn_forward.1']
    #allocation16 [shape = 'u8[512]{0}', space=vmem, size = 0x400, scoped, tag = 'input window, operand 8, single buffered']
    #allocation17 [shape = 'u8[512]{0}', space=vmem, size = 0x400, scoped, tag = 'input window, operand 11, single buffered']
    #allocation18 [shape = 's32[1]{0}', space=sflag, size = 0x4, scoped, tag = 'scoped memory for cnn_forward.1']
    #allocation19 [shape = 'u8[1024]{0}', space=vmem, size = 0x400, scoped, tag = 'input window, operand 13, single buffered']
    #allocation20 [shape = 'u8[1024]{0}', space=vmem, size = 0x400, scoped, tag = 'output window, operand 0, single buffered']
    #allocation23 [shape = 'u32[9]{0}', space=smem, size = 0x24, scoped, tag = 'DMA stride descriptor']
    #allocation25 [shape = 'u32[9]{0}', space=smem, size = 0x24, scoped, tag = 'DMA stride descriptor']
    %30 = vsyncpa [#allocation9], 0
    %31 = vsyncpa [#allocation12], 0
    %32 = vsyncpa [#allocation15], 0
    %33 = vsyncpa [#allocation18], 0
    %34 = vsyncpa [#allocation10], 0
    // Predicated region
    $region2: #{cnn_forward.1} parent=1 // pred_check
      _
    $region3: #{cnn_forward.1} parent=1 // pred_check_branch
      %36 = sbr.rel (0) target = $region5
    $region4: #{cnn_forward.1} parent=1 // pred_region
      _
    $region5: #{cnn_forward.1} parent=1 // pred_fallthru
      _
    // Predicated region
    $region6: #{cnn_forward.1} parent=1 // pred_check
      _
    $region7: #{cnn_forward.1} parent=1 // pred_check_branch
      %38 = sbr.rel (0) target = $region9
    $region8: #{cnn_forward.1} parent=1 // pred_region
      %s40 = ssub.s32 32, 32
      %41 = vsyncadd [#allocation9], %s40
      %s43 = sshll.u32 [#allocation8], 4
      %s44 = int_to_ptr.vmem [resolvable:$true] %s43
      %46 = dma.hbm_to_vmem [thread:$0]  %s1, 32, %s44, [#allocation9]
    $region9: #{cnn_forward.1} parent=1 // pred_fallthru
      _
    // Predicated region
    $region10: #{cnn_forward.1} parent=1 // pred_check
      _
    $region11: #{cnn_forward.1} parent=1 // pred_check_branch
      %48 = sbr.rel (0) target = $region13
    $region12: #{cnn_forward.1} parent=1 // pred_region
      %s50 = ssub.s32 16, 16
      %51 = vsyncadd [#allocation12], %s50
      %s53 = sshll.u32 [#allocation11], 4
      %s54 = int_to_ptr.vmem [resolvable:$true] %s53
      %56 = dma.hbm_to_vmem [thread:$0]  %s2, 16, %s54, [#allocation12]
    $region13: #{cnn_forward.1} parent=1 // pred_fallthru
      _
    // Predicated region
    $region14: #{cnn_forward.1} parent=1 // pred_check
      _
    $region15: #{cnn_forward.1} parent=1 // pred_check_branch
      %58 = sbr.rel (0) target = $region17
    $region16: #{cnn_forward.1} parent=1 // pred_region
      _
    $region17: #{cnn_forward.1} parent=1 // pred_fallthru
      _
    // Predicated region
    $region18: #{cnn_forward.1} parent=1 // pred_check
      _
    $region19: #{cnn_forward.1} parent=1 // pred_check_branch
      %60 = sbr.rel (0) target = $region21
    $region20: #{cnn_forward.1} parent=1 // pred_region
      _
    $region21: #{cnn_forward.1} parent=1 // pred_fallthru
      _
    // Predicated region
    $region22: #{cnn_forward.1} parent=1 // pred_check
      _
    $region23: #{cnn_forward.1} parent=1 // pred_check_branch
      %62 = sbr.rel (0) target = $region25
    $region24: #{cnn_forward.1} parent=1 // pred_region
      %s64 = ssub.s32 16, 16
      %65 = vsyncadd [#allocation12], %s64
      %s67 = sshll.u32 [#allocation13], 4
      %s68 = int_to_ptr.vmem [resolvable:$true] %s67
      %70 = dma.hbm_to_vmem [thread:$0]  %s5, 16, %s68, [#allocation12]
    $region25: #{cnn_forward.1} parent=1 // pred_fallthru
      _
    // Predicated region
    $region26: #{cnn_forward.1} parent=1 // pred_check
      _
    $region27: #{cnn_forward.1} parent=1 // pred_check_branch
      %72 = sbr.rel (0) target = $region29
    $region28: #{cnn_forward.1} parent=1 // pred_region
      _
    $region29: #{cnn_forward.1} parent=1 // pred_fallthru
      _
    // Predicated region
    $region30: #{cnn_forward.1} parent=1 // pred_check
      _
    $region31: #{cnn_forward.1} parent=1 // pred_check_branch
      %74 = sbr.rel (0) target = $region33
    $region32: #{cnn_forward.1} parent=1 // pred_region
      %s76 = ssub.s32 2048, 2048
      %77 = vsyncadd [#allocation15], %s76
      %s78 = sshll.u32 [#allocation14], 4
      %s79 = int_to_ptr.vmem [resolvable:$true] %s78
      %84 = dma.hbm_to_vmem [thread:$0]  %s7, 2048, %s79, [#allocation15], 64, 64, 4
    $region33: #{cnn_forward.1} parent=1 // pred_fallthru
      _
    // Predicated region
    $region34: #{cnn_forward.1} parent=1 // pred_check
      _
    $region35: #{cnn_forward.1} parent=1 // pred_check_branch
      %86 = sbr.rel (0) target = $region37
    $region36: #{cnn_forward.1} parent=1 // pred_region
      %s88 = ssub.s32 16, 16
      %89 = vsyncadd [#allocation15], %s88
      %s91 = sshll.u32 [#allocation16], 4
      %s92 = int_to_ptr.vmem [resolvable:$true] %s91
      %94 = dma.hbm_to_vmem [thread:$0]  %s8, 16, %s92, [#allocation15]
    $region37: #{cnn_forward.1} parent=1 // pred_fallthru
      _
    // Predicated region
    $region38: #{cnn_forward.1} parent=1 // pred_check
      _
    $region39: #{cnn_forward.1} parent=1 // pred_check_branch
      %96 = sbr.rel (0) target = $region41
    $region40: #{cnn_forward.1} parent=1 // pred_region
      _
    $region41: #{cnn_forward.1} parent=1 // pred_fallthru
      _
    // Predicated region
    $region42: #{cnn_forward.1} parent=1 // pred_check
      _
    $region43: #{cnn_forward.1} parent=1 // pred_check_branch
      %98 = sbr.rel (0) target = $region45
    $region44: #{cnn_forward.1} parent=1 // pred_region
      _
    $region45: #{cnn_forward.1} parent=1 // pred_fallthru
      _
    // Predicated region
    $region46: #{cnn_forward.1} parent=1 // pred_check
      _
    $region47: #{cnn_forward.1} parent=1 // pred_check_branch
      %100 = sbr.rel (0) target = $region49
    $region48: #{cnn_forward.1} parent=1 // pred_region
      %s102 = ssub.s32 16, 16
      %103 = vsyncadd [#allocation18], %s102
      %s105 = sshll.u32 [#allocation17], 4
      %s106 = int_to_ptr.vmem [resolvable:$true] %s105
      %108 = dma.hbm_to_vmem [thread:$0]  %s11, 16, %s106, [#allocation18]
    $region49: #{cnn_forward.1} parent=1 // pred_fallthru
      _
    // Predicated region
    $region50: #{cnn_forward.1} parent=1 // pred_check
      _
    $region51: #{cnn_forward.1} parent=1 // pred_check_branch
      %110 = sbr.rel (0) target = $region53
    $region52: #{cnn_forward.1} parent=1 // pred_region
      _
    $region53: #{cnn_forward.1} parent=1 // pred_fallthru
      _
    // Predicated region
    $region54: #{cnn_forward.1} parent=1 // pred_check
      _
    $region55: #{cnn_forward.1} parent=1 // pred_check_branch
      %112 = sbr.rel (0) target = $region57
    $region56: #{cnn_forward.1} parent=1 // pred_region
      %s114 = ssub.s32 32, 32
      %115 = vsyncadd [#allocation18], %s114
      %s117 = sshll.u32 [#allocation19], 4
      %s118 = int_to_ptr.vmem [resolvable:$true] %s117
      %120 = dma.hbm_to_vmem [thread:$0]  %s13, 32, %s118, [#allocation18]
    $region57: #{cnn_forward.1} parent=1 // pred_fallthru
      _
    // Predicated region
    $region58: #{cnn_forward.1} parent=1 // pred_check
      _
    $region59: #{cnn_forward.1} parent=1 // pred_check_branch
      %122 = sbr.rel (0) target = $region61
    $region60: #{cnn_forward.1} parent=1 // pred_region
      _
    $region61: #{cnn_forward.1} parent=1 // pred_fallthru
      _
    // Predicated region
    $region62: #{cnn_forward.1} parent=1 // pred_check
      _
    $region63: #{cnn_forward.1} parent=1 // pred_check_branch
      %124 = sbr.rel (0) target = $region65
    $region64: #{cnn_forward.1} parent=1 // pred_region
      _
    $region65: #{cnn_forward.1} parent=1 // pred_fallthru
      _
    // Predicated region
    $region66: #{cnn_forward.1} parent=1 // pred_check
      _
    $region67: #{cnn_forward.1} parent=1 // pred_check_branch
      %126 = sbr.rel (0) target = $region69
    $region68: #{cnn_forward.1} parent=1 // pred_region
      _
    $region69: #{cnn_forward.1} parent=1 // pred_fallthru
      _
    // Predicated region
    $region70: #{cnn_forward.1} parent=1 // pred_check
      _
    $region71: #{cnn_forward.1} parent=1 // pred_check_branch
      %128 = sbr.rel (0) target = $region73
    $region72: #{cnn_forward.1} parent=1 // pred_region
      _
    $region73: #{cnn_forward.1} parent=1 // pred_fallthru
      _
    // Predicated region
    $region74: #{cnn_forward.1} parent=1 // pred_check
      _
    $region75: #{cnn_forward.1} parent=1 // pred_check_branch
      %130 = sbr.rel (0) target = $region77
    $region76: #{cnn_forward.1} parent=1 // pred_region
      _
    $region77: #{cnn_forward.1} parent=1 // pred_fallthru
      _
    // Predicated region
    $region78: #{cnn_forward.1} parent=1 // pred_check
      _
    $region79: #{cnn_forward.1} parent=1 // pred_check_branch
      %132 = sbr.rel (0) target = $region81
    $region80: #{cnn_forward.1} parent=1 // pred_region
      _
    $region81: #{cnn_forward.1} parent=1 // pred_fallthru
      _
    // Predicated region
    $region82: #{cnn_forward.1} parent=1 // pred_check
      _
    $region83: #{cnn_forward.1} parent=1 // pred_check_branch
      %134 = sbr.rel (0) target = $region85
    $region84: #{cnn_forward.1} parent=1 // pred_region
      %135 = dma.done [#allocation9], 32
    $region85: #{cnn_forward.1} parent=1 // pred_fallthru
      _
    // Predicated region
    $region86: #{cnn_forward.1} parent=1 // pred_check
      _
    $region87: #{cnn_forward.1} parent=1 // pred_check_branch
      %137 = sbr.rel (0) target = $region89
    $region88: #{cnn_forward.1} parent=1 // pred_region
      %138 = dma.done [#allocation12], 16
    $region89: #{cnn_forward.1} parent=1 // pred_fallthru
      _
    // Predicated region
    $region90: #{cnn_forward.1} parent=1 // pred_check
      _
    $region91: #{cnn_forward.1} parent=1 // pred_check_branch
      %140 = sbr.rel (0) target = $region93
    $region92: #{cnn_forward.1} parent=1 // pred_region
      %141 = dma.done [#allocation12], 16
    $region93: #{cnn_forward.1} parent=1 // pred_fallthru
      _
    // Predicated region
    $region94: #{cnn_forward.1} parent=1 // pred_check
      _
    $region95: #{cnn_forward.1} parent=1 // pred_check_branch
      %143 = sbr.rel (0) target = $region97
    $region96: #{cnn_forward.1} parent=1 // pred_region
      %144 = dma.done [#allocation15], 2048
    $region97: #{cnn_forward.1} parent=1 // pred_fallthru
      _
    // Predicated region
    $region98: #{cnn_forward.1} parent=1 // pred_check
      _
    $region99: #{cnn_forward.1} parent=1 // pred_check_branch
      %146 = sbr.rel (0) target = $region101
    $region100: #{cnn_forward.1} parent=1 // pred_region
      %147 = dma.done [#allocation15], 16
    $region101: #{cnn_forward.1} parent=1 // pred_fallthru
      _
    // Predicated region
    $region102: #{cnn_forward.1} parent=1 // pred_check
      _
    $region103: #{cnn_forward.1} parent=1 // pred_check_branch
      %149 = sbr.rel (0) target = $region105
    $region104: #{cnn_forward.1} parent=1 // pred_region
      %150 = dma.done [#allocation18], 16
    $region105: #{cnn_forward.1} parent=1 // pred_fallthru
      _
    // Predicated region
    $region106: #{cnn_forward.1} parent=1 // pred_check
      _
    $region107: #{cnn_forward.1} parent=1 // pred_check_branch
      %152 = sbr.rel (0) target = $region109
    $region108: #{cnn_forward.1} parent=1 // pred_region
      %153 = dma.done [#allocation18], 32
    $region109: #{cnn_forward.1} parent=1 // pred_fallthru
      _
    %p156 = scmp.lt.u32.totalorder 4, 8
    %p157 = pneg %p156
    // Predicated region
    $region110: #{cnn_forward.1} parent=1 // pred_check
      _
    $region111: #{cnn_forward.1} parent=1 // pred_check_branch
      %159 = sbr.rel (%p156) target = $region113
    $region112: #{cnn_forward.1} parent=1 // pred_region
      %s428 = sand.u32 4, 7
      %p429 = scmp.eq.s32.totalorder %s428, 0
      %p430 = pneg %p429
      // Predicated region
      $region125: #{cnn_forward.1} parent=112 // pred_check
        _
      $region126: #{cnn_forward.1} parent=112 // pred_check_branch
        %432 = sbr.rel (%p429) target = $region128
      $region127: #{cnn_forward.1} parent=112 // pred_region
        %s433 = sand.u32 4, 7
        %s434 = ssub.s32 4, %s433
        %s435 = scalar_lea.vmem %s20, %s434
        %s436 = ssub.s32 4, %s433
        %s437 = scalar_lea.vmem [#allocation2], %s436
        loop: start=0, step=1, limit=1
        $region129: #{cnn_forward.1} parent=127 // loop_pre_header
          _
        $region130: #{cnn_forward.1} parent=127 // loop_header
          %s439 = sphi 0, %s443
          %p440 = scmp.ge.s32.totalorder %s439, 1
          %s444 = sphi %s20, %s20
          %s445 = sphi [#allocation2], [#allocation2]
        $region131: #{cnn_forward.1} parent=127 // loop_header_branch
          %442 = sbr.rel (%p440) target = $region135
        $region132: #{cnn_forward.1} parent=127 // loop_body
          _
        $region133: #{cnn_forward.1} parent=127 // loop_footer
          %s443 = sadd.s32 1, %s439
        $region134: #{cnn_forward.1} parent=127 // loop_footer_branch
          %438 = sbr.rel target = $region130
        $region135: #{cnn_forward.1} parent=127 // loop_exit
          _
        %s446 = sshllo.u32 0, %s433
        loop: start=0, step=1, limit=1
        $region136: #{cnn_forward.1} parent=127 // loop_pre_header
          _
        $region137: #{cnn_forward.1} parent=127 // loop_header
          %s448 = sphi 0, %s452
          %p449 = scmp.ge.s32.totalorder %s448, 1
          %s453 = sphi %s435, %s435
          %s454 = sphi %s437, %s437
        $region138: #{cnn_forward.1} parent=127 // loop_header_branch
          %451 = sbr.rel (%p449) target = $region142
        $region139: #{cnn_forward.1} parent=127 // loop_body
          %v455 = vld [vmem:[%s453] sm:%s446]
          %456 = vst [vmem:[%s454] sm:%s446] %v455
          %v457 = vld [vmem:[%s453 + $0x8] sm:%s446]
          %458 = vst [vmem:[%s454 + $0x4] sm:%s446] %v457
          %v459 = vld [vmem:[%s453 + $0x4] sm:%s446]
          %460 = vst [vmem:[%s454 + $0x8] sm:%s446] %v459
          %v461 = vld [vmem:[%s453 + $0xc] sm:%s446]
          %462 = vst [vmem:[%s454 + $0xc] sm:%s446] %v461
          %v463 = vld [vmem:[%s453 + $0x10] sm:%s446]
          %464 = vst [vmem:[%s454 + $0x10] sm:%s446] %v463
          %v465 = vld [vmem:[%s453 + $0x18] sm:%s446]
          %466 = vst [vmem:[%s454 + $0x14] sm:%s446] %v465
          %v467 = vld [vmem:[%s453 + $0x14] sm:%s446]
          %468 = vst [vmem:[%s454 + $0x18] sm:%s446] %v467
          %v469 = vld [vmem:[%s453 + $0x1c] sm:%s446]
          %470 = vst [vmem:[%s454 + $0x1c] sm:%s446] %v469
          %v471 = vld [vmem:[%s453 + $0x20] sm:%s446]
          %472 = vst [vmem:[%s454 + $0x20] sm:%s446] %v471
          %v473 = vld [vmem:[%s453 + $0x28] sm:%s446]
          %474 = vst [vmem:[%s454 + $0x24] sm:%s446] %v473
          %v475 = vld [vmem:[%s453 + $0x24] sm:%s446]
          %476 = vst [vmem:[%s454 + $0x28] sm:%s446] %v475
          %v477 = vld [vmem:[%s453 + $0x2c] sm:%s446]
          %478 = vst [vmem:[%s454 + $0x2c] sm:%s446] %v477
          %v479 = vld [vmem:[%s453 + $0x30] sm:%s446]
          %480 = vst [vmem:[%s454 + $0x30] sm:%s446] %v479
          %v481 = vld [vmem:[%s453 + $0x38] sm:%s446]
          %482 = vst [vmem:[%s454 + $0x34] sm:%s446] %v481
          %v483 = vld [vmem:[%s453 + $0x34] sm:%s446]
          %484 = vst [vmem:[%s454 + $0x38] sm:%s446] %v483
          %v485 = vld [vmem:[%s453 + $0x3c] sm:%s446]
          %486 = vst [vmem:[%s454 + $0x3c] sm:%s446] %v485
          %v487 = vld [vmem:[%s453 + $0x40] sm:%s446]
          %488 = vst [vmem:[%s454 + $0x40] sm:%s446] %v487
          %v489 = vld [vmem:[%s453 + $0x48] sm:%s446]
          %490 = vst [vmem:[%s454 + $0x44] sm:%s446] %v489
          %v491 = vld [vmem:[%s453 + $0x44] sm:%s446]
          %492 = vst [vmem:[%s454 + $0x48] sm:%s446] %v491
          %v493 = vld [vmem:[%s453 + $0x4c] sm:%s446]
          %494 = vst [vmem:[%s454 + $0x4c] sm:%s446] %v493
          %v495 = vld [vmem:[%s453 + $0x50] sm:%s446]
          %496 = vst [vmem:[%s454 + $0x50] sm:%s446] %v495
          %v497 = vld [vmem:[%s453 + $0x58] sm:%s446]
          %498 = vst [vmem:[%s454 + $0x54] sm:%s446] %v497
          %v499 = vld [vmem:[%s453 + $0x54] sm:%s446]
          %500 = vst [vmem:[%s454 + $0x58] sm:%s446] %v499
          %v501 = vld [vmem:[%s453 + $0x5c] sm:%s446]
          %502 = vst [vmem:[%s454 + $0x5c] sm:%s446] %v501
          %v503 = vld [vmem:[%s453 + $0x60] sm:%s446]
          %504 = vst [vmem:[%s454 + $0x60] sm:%s446] %v503
          %v505 = vld [vmem:[%s453 + $0x68] sm:%s446]
          %506 = vst [vmem:[%s454 + $0x64] sm:%s446] %v505
          %v507 = vld [vmem:[%s453 + $0x64] sm:%s446]
          %508 = vst [vmem:[%s454 + $0x68] sm:%s446] %v507
          %v509 = vld [vmem:[%s453 + $0x6c] sm:%s446]
          %510 = vst [vmem:[%s454 + $0x6c] sm:%s446] %v509
          %v511 = vld [vmem:[%s453 + $0x70] sm:%s446]
          %512 = vst [vmem:[%s454 + $0x70] sm:%s446] %v511
          %v513 = vld [vmem:[%s453 + $0x78] sm:%s446]
          %514 = vst [vmem:[%s454 + $0x74] sm:%s446] %v513
          %v515 = vld [vmem:[%s453 + $0x74] sm:%s446]
          %516 = vst [vmem:[%s454 + $0x78] sm:%s446] %v515
          %v517 = vld [vmem:[%s453 + $0x7c] sm:%s446]
          %518 = vst [vmem:[%s454 + $0x7c] sm:%s446] %v517
          %v519 = vld [vmem:[%s453 + $0x80] sm:%s446]
          %520 = vst [vmem:[%s454 + $0x80] sm:%s446] %v519
          %v521 = vld [vmem:[%s453 + $0x88] sm:%s446]
          %522 = vst [vmem:[%s454 + $0x84] sm:%s446] %v521
          %v523 = vld [vmem:[%s453 + $0x84] sm:%s446]
          %524 = vst [vmem:[%s454 + $0x88] sm:%s446] %v523
          %v525 = vld [vmem:[%s453 + $0x8c] sm:%s446]
          %526 = vst [vmem:[%s454 + $0x8c] sm:%s446] %v525
          %v527 = vld [vmem:[%s453 + $0x90] sm:%s446]
          %528 = vst [vmem:[%s454 + $0x90] sm:%s446] %v527
          %v529 = vld [vmem:[%s453 + $0x98] sm:%s446]
          %530 = vst [vmem:[%s454 + $0x94] sm:%s446] %v529
          %v531 = vld [vmem:[%s453 + $0x94] sm:%s446]
          %532 = vst [vmem:[%s454 + $0x98] sm:%s446] %v531
          %v533 = vld [vmem:[%s453 + $0x9c] sm:%s446]
          %534 = vst [vmem:[%s454 + $0x9c] sm:%s446] %v533
          %v535 = vld [vmem:[%s453 + $0xa0] sm:%s446]
          %536 = vst [vmem:[%s454 + $0xa0] sm:%s446] %v535
          %v537 = vld [vmem:[%s453 + $0xa8] sm:%s446]
          %538 = vst [vmem:[%s454 + $0xa4] sm:%s446] %v537
          %v539 = vld [vmem:[%s453 + $0xa4] sm:%s446]
          %540 = vst [vmem:[%s454 + $0xa8] sm:%s446] %v539
          %v541 = vld [vmem:[%s453 + $0xac] sm:%s446]
          %542 = vst [vmem:[%s454 + $0xac] sm:%s446] %v541
          %v543 = vld [vmem:[%s453 + $0xb0] sm:%s446]
          %544 = vst [vmem:[%s454 + $0xb0] sm:%s446] %v543
          %v545 = vld [vmem:[%s453 + $0xb8] sm:%s446]
          %546 = vst [vmem:[%s454 + $0xb4] sm:%s446] %v545
          %v547 = vld [vmem:[%s453 + $0xb4] sm:%s446]
          %548 = vst [vmem:[%s454 + $0xb8] sm:%s446] %v547
          %v549 = vld [vmem:[%s453 + $0xbc] sm:%s446]
          %550 = vst [vmem:[%s454 + $0xbc] sm:%s446] %v549
          %v551 = vld [vmem:[%s453 + $0xc0] sm:%s446]
          %552 = vst [vmem:[%s454 + $0xc0] sm:%s446] %v551
          %v553 = vld [vmem:[%s453 + $0xc8] sm:%s446]
          %554 = vst [vmem:[%s454 + $0xc4] sm:%s446] %v553
          %v555 = vld [vmem:[%s453 + $0xc4] sm:%s446]
          %556 = vst [vmem:[%s454 + $0xc8] sm:%s446] %v555
          %v557 = vld [vmem:[%s453 + $0xcc] sm:%s446]
          %558 = vst [vmem:[%s454 + $0xcc] sm:%s446] %v557
          %v559 = vld [vmem:[%s453 + $0xd0] sm:%s446]
          %560 = vst [vmem:[%s454 + $0xd0] sm:%s446] %v559
          %v561 = vld [vmem:[%s453 + $0xd8] sm:%s446]
          %562 = vst [vmem:[%s454 + $0xd4] sm:%s446] %v561
          %v563 = vld [vmem:[%s453 + $0xd4] sm:%s446]
          %564 = vst [vmem:[%s454 + $0xd8] sm:%s446] %v563
          %v565 = vld [vmem:[%s453 + $0xdc] sm:%s446]
          %566 = vst [vmem:[%s454 + $0xdc] sm:%s446] %v565
          %v567 = vld [vmem:[%s453 + $0xe0] sm:%s446]
          %568 = vst [vmem:[%s454 + $0xe0] sm:%s446] %v567
          %v569 = vld [vmem:[%s453 + $0xe8] sm:%s446]
          %570 = vst [vmem:[%s454 + $0xe4] sm:%s446] %v569
          %v571 = vld [vmem:[%s453 + $0xe4] sm:%s446]
          %572 = vst [vmem:[%s454 + $0xe8] sm:%s446] %v571
          %v573 = vld [vmem:[%s453 + $0xec] sm:%s446]
          %574 = vst [vmem:[%s454 + $0xec] sm:%s446] %v573
          %v575 = vld [vmem:[%s453 + $0xf0] sm:%s446]
          %576 = vst [vmem:[%s454 + $0xf0] sm:%s446] %v575
          %v577 = vld [vmem:[%s453 + $0xf8] sm:%s446]
          %578 = vst [vmem:[%s454 + $0xf4] sm:%s446] %v577
          %v579 = vld [vmem:[%s453 + $0xf4] sm:%s446]
          %580 = vst [vmem:[%s454 + $0xf8] sm:%s446] %v579
          %v581 = vld [vmem:[%s453 + $0xfc] sm:%s446]
          %582 = vst [vmem:[%s454 + $0xfc] sm:%s446] %v581
          %v583 = vld [vmem:[%s453 + $0x100] sm:%s446]
          %584 = vst [vmem:[%s454 + $0x100] sm:%s446] %v583
          %v585 = vld [vmem:[%s453 + $0x108] sm:%s446]
          %586 = vst [vmem:[%s454 + $0x104] sm:%s446] %v585
          %v587 = vld [vmem:[%s453 + $0x104] sm:%s446]
          %588 = vst [vmem:[%s454 + $0x108] sm:%s446] %v587
          %v589 = vld [vmem:[%s453 + $0x10c] sm:%s446]
          %590 = vst [vmem:[%s454 + $0x10c] sm:%s446] %v589
          %v591 = vld [vmem:[%s453 + $0x110] sm:%s446]
          %592 = vst [vmem:[%s454 + $0x110] sm:%s446] %v591
          %v593 = vld [vmem:[%s453 + $0x118] sm:%s446]
          %594 = vst [vmem:[%s454 + $0x114] sm:%s446] %v593
          %v595 = vld [vmem:[%s453 + $0x114] sm:%s446]
          %596 = vst [vmem:[%s454 + $0x118] sm:%s446] %v595
          %v597 = vld [vmem:[%s453 + $0x11c] sm:%s446]
          %598 = vst [vmem:[%s454 + $0x11c] sm:%s446] %v597
          %v599 = vld [vmem:[%s453 + $0x120] sm:%s446]
          %600 = vst [vmem:[%s454 + $0x120] sm:%s446] %v599
          %v601 = vld [vmem:[%s453 + $0x128] sm:%s446]
          %602 = vst [vmem:[%s454 + $0x124] sm:%s446] %v601
          %v603 = vld [vmem:[%s453 + $0x124] sm:%s446]
          %604 = vst [vmem:[%s454 + $0x128] sm:%s446] %v603
          %v605 = vld [vmem:[%s453 + $0x12c] sm:%s446]
          %606 = vst [vmem:[%s454 + $0x12c] sm:%s446] %v605
          %v607 = vld [vmem:[%s453 + $0x130] sm:%s446]
          %608 = vst [vmem:[%s454 + $0x130] sm:%s446] %v607
          %v609 = vld [vmem:[%s453 + $0x138] sm:%s446]
          %610 = vst [vmem:[%s454 + $0x134] sm:%s446] %v609
          %v611 = vld [vmem:[%s453 + $0x134] sm:%s446]
          %612 = vst [vmem:[%s454 + $0x138] sm:%s446] %v611
          %v613 = vld [vmem:[%s453 + $0x13c] sm:%s446]
          %614 = vst [vmem:[%s454 + $0x13c] sm:%s446] %v613
          %v615 = vld [vmem:[%s453 + $0x140] sm:%s446]
          %616 = vst [vmem:[%s454 + $0x140] sm:%s446] %v615
          %v617 = vld [vmem:[%s453 + $0x148] sm:%s446]
          %618 = vst [vmem:[%s454 + $0x144] sm:%s446] %v617
          %v619 = vld [vmem:[%s453 + $0x144] sm:%s446]
          %620 = vst [vmem:[%s454 + $0x148] sm:%s446] %v619
          %v621 = vld [vmem:[%s453 + $0x14c] sm:%s446]
          %622 = vst [vmem:[%s454 + $0x14c] sm:%s446] %v621
          %v623 = vld [vmem:[%s453 + $0x150] sm:%s446]
          %624 = vst [vmem:[%s454 + $0x150] sm:%s446] %v623
          %v625 = vld [vmem:[%s453 + $0x158] sm:%s446]
          %626 = vst [vmem:[%s454 + $0x154] sm:%s446] %v625
          %v627 = vld [vmem:[%s453 + $0x154] sm:%s446]
          %628 = vst [vmem:[%s454 + $0x158] sm:%s446] %v627
          %v629 = vld [vmem:[%s453 + $0x15c] sm:%s446]
          %630 = vst [vmem:[%s454 + $0x15c] sm:%s446] %v629
          %v631 = vld [vmem:[%s453 + $0x160] sm:%s446]
          %632 = vst [vmem:[%s454 + $0x160] sm:%s446] %v631
          %v633 = vld [vmem:[%s453 + $0x168] sm:%s446]
          %634 = vst [vmem:[%s454 + $0x164] sm:%s446] %v633
          %v635 = vld [vmem:[%s453 + $0x164] sm:%s446]
          %636 = vst [vmem:[%s454 + $0x168] sm:%s446] %v635
          %v637 = vld [vmem:[%s453 + $0x16c] sm:%s446]
          %638 = vst [vmem:[%s454 + $0x16c] sm:%s446] %v637
          %v639 = vld [vmem:[%s453 + $0x170] sm:%s446]
          %640 = vst [vmem:[%s454 + $0x170] sm:%s446] %v639
          %v641 = vld [vmem:[%s453 + $0x178] sm:%s446]
          %642 = vst [vmem:[%s454 + $0x174] sm:%s446] %v641
          %v643 = vld [vmem:[%s453 + $0x174] sm:%s446]
          %644 = vst [vmem:[%s454 + $0x178] sm:%s446] %v643
          %v645 = vld [vmem:[%s453 + $0x17c] sm:%s446]
          %646 = vst [vmem:[%s454 + $0x17c] sm:%s446] %v645
          %v647 = vld [vmem:[%s453 + $0x180] sm:%s446]
          %648 = vst [vmem:[%s454 + $0x180] sm:%s446] %v647
          %v649 = vld [vmem:[%s453 + $0x188] sm:%s446]
          %650 = vst [vmem:[%s454 + $0x184] sm:%s446] %v649
          %v651 = vld [vmem:[%s453 + $0x184] sm:%s446]
          %652 = vst [vmem:[%s454 + $0x188] sm:%s446] %v651
          %v653 = vld [vmem:[%s453 + $0x18c] sm:%s446]
          %654 = vst [vmem:[%s454 + $0x18c] sm:%s446] %v653
          %v655 = vld [vmem:[%s453 + $0x190] sm:%s446]
          %656 = vst [vmem:[%s454 + $0x190] sm:%s446] %v655
          %v657 = vld [vmem:[%s453 + $0x198] sm:%s446]
          %658 = vst [vmem:[%s454 + $0x194] sm:%s446] %v657
          %v659 = vld [vmem:[%s453 + $0x194] sm:%s446]
          %660 = vst [vmem:[%s454 + $0x198] sm:%s446] %v659
          %v661 = vld [vmem:[%s453 + $0x19c] sm:%s446]
          %662 = vst [vmem:[%s454 + $0x19c] sm:%s446] %v661
          %v663 = vld [vmem:[%s453 + $0x1a0] sm:%s446]
          %664 = vst [vmem:[%s454 + $0x1a0] sm:%s446] %v663
          %v665 = vld [vmem:[%s453 + $0x1a8] sm:%s446]
          %666 = vst [vmem:[%s454 + $0x1a4] sm:%s446] %v665
          %v667 = vld [vmem:[%s453 + $0x1a4] sm:%s446]
          %668 = vst [vmem:[%s454 + $0x1a8] sm:%s446] %v667
          %v669 = vld [vmem:[%s453 + $0x1ac] sm:%s446]
          %670 = vst [vmem:[%s454 + $0x1ac] sm:%s446] %v669
          %v671 = vld [vmem:[%s453 + $0x1b0] sm:%s446]
          %672 = vst [vmem:[%s454 + $0x1b0] sm:%s446] %v671
          %v673 = vld [vmem:[%s453 + $0x1b8] sm:%s446]
          %674 = vst [vmem:[%s454 + $0x1b4] sm:%s446] %v673
          %v675 = vld [vmem:[%s453 + $0x1b4] sm:%s446]
          %676 = vst [vmem:[%s454 + $0x1b8] sm:%s446] %v675
          %v677 = vld [vmem:[%s453 + $0x1bc] sm:%s446]
          %678 = vst [vmem:[%s454 + $0x1bc] sm:%s446] %v677
          %v679 = vld [vmem:[%s453 + $0x1c0] sm:%s446]
          %680 = vst [vmem:[%s454 + $0x1c0] sm:%s446] %v679
          %v681 = vld [vmem:[%s453 + $0x1c8] sm:%s446]
          %682 = vst [vmem:[%s454 + $0x1c4] sm:%s446] %v681
          %v683 = vld [vmem:[%s453 + $0x1c4] sm:%s446]
          %684 = vst [vmem:[%s454 + $0x1c8] sm:%s446] %v683
          %v685 = vld [vmem:[%s453 + $0x1cc] sm:%s446]
          %686 = vst [vmem:[%s454 + $0x1cc] sm:%s446] %v685
          %v687 = vld [vmem:[%s453 + $0x1d0] sm:%s446]
          %688 = vst [vmem:[%s454 + $0x1d0] sm:%s446] %v687
          %v689 = vld [vmem:[%s453 + $0x1d8] sm:%s446]
          %690 = vst [vmem:[%s454 + $0x1d4] sm:%s446] %v689
          %v691 = vld [vmem:[%s453 + $0x1d4] sm:%s446]
          %692 = vst [vmem:[%s454 + $0x1d8] sm:%s446] %v691
          %v693 = vld [vmem:[%s453 + $0x1dc] sm:%s446]
          %694 = vst [vmem:[%s454 + $0x1dc] sm:%s446] %v693
          %v695 = vld [vmem:[%s453 + $0x1e0] sm:%s446]
          %696 = vst [vmem:[%s454 + $0x1e0] sm:%s446] %v695
          %v697 = vld [vmem:[%s453 + $0x1e8] sm:%s446]
          %698 = vst [vmem:[%s454 + $0x1e4] sm:%s446] %v697
          %v699 = vld [vmem:[%s453 + $0x1e4] sm:%s446]
          %700 = vst [vmem:[%s454 + $0x1e8] sm:%s446] %v699
          %v701 = vld [vmem:[%s453 + $0x1ec] sm:%s446]
          %702 = vst [vmem:[%s454 + $0x1ec] sm:%s446] %v701
          %v703 = vld [vmem:[%s453 + $0x1f0] sm:%s446]
          %704 = vst [vmem:[%s454 + $0x1f0] sm:%s446] %v703
          %v705 = vld [vmem:[%s453 + $0x1f8] sm:%s446]
          %706 = vst [vmem:[%s454 + $0x1f4] sm:%s446] %v705
          %v707 = vld [vmem:[%s453 + $0x1f4] sm:%s446]
          %708 = vst [vmem:[%s454 + $0x1f8] sm:%s446] %v707
          %v709 = vld [vmem:[%s453 + $0x1fc] sm:%s446]
          %710 = vst [vmem:[%s454 + $0x1fc] sm:%s446] %v709
        $region140: #{cnn_forward.1} parent=127 // loop_footer
          %s452 = sadd.s32 1, %s448
        $region141: #{cnn_forward.1} parent=127 // loop_footer_branch
          %447 = sbr.rel target = $region137
        $region142: #{cnn_forward.1} parent=127 // loop_exit
          _
      $region128: #{cnn_forward.1} parent=112 // pred_fallthru
        _
    $region113: #{cnn_forward.1} parent=1 // pred_fallthru
      _
    // Predicated region
    $region114: #{cnn_forward.1} parent=1 // pred_check
      %p160 = pneg %p156
    $region115: #{cnn_forward.1} parent=1 // pred_check_branch
      %162 = sbr.rel (%p160) target = $region117
    $region116: #{cnn_forward.1} parent=1 // pred_region
      %s163 = sshllo.u32 0, 4
      loop: start=0, step=1, limit=1
      $region118: #{cnn_forward.1} parent=116 // loop_pre_header
        _
      $region119: #{cnn_forward.1} parent=116 // loop_header
        %s165 = sphi 0, %s169
        %p166 = scmp.ge.s32.totalorder %s165, 1
        %s170 = sphi %s20, %s20
        %s171 = sphi [#allocation2], [#allocation2]
      $region120: #{cnn_forward.1} parent=116 // loop_header_branch
        %168 = sbr.rel (%p166) target = $region124
      $region121: #{cnn_forward.1} parent=116 // loop_body
        %v172 = vld [vmem:[%s170] sm:%s163]
        %173 = vst [vmem:[%s171] sm:%s163] %v172
        %v174 = vld [vmem:[%s170 + $0x8] sm:%s163]
        %175 = vst [vmem:[%s171 + $0x4] sm:%s163] %v174
        %v176 = vld [vmem:[%s170 + $0x4] sm:%s163]
        %177 = vst [vmem:[%s171 + $0x8] sm:%s163] %v176
        %v178 = vld [vmem:[%s170 + $0xc] sm:%s163]
        %179 = vst [vmem:[%s171 + $0xc] sm:%s163] %v178
        %v180 = vld [vmem:[%s170 + $0x10] sm:%s163]
        %181 = vst [vmem:[%s171 + $0x10] sm:%s163] %v180
        %v182 = vld [vmem:[%s170 + $0x18] sm:%s163]
        %183 = vst [vmem:[%s171 + $0x14] sm:%s163] %v182
        %v184 = vld [vmem:[%s170 + $0x14] sm:%s163]
        %185 = vst [vmem:[%s171 + $0x18] sm:%s163] %v184
        %v186 = vld [vmem:[%s170 + $0x1c] sm:%s163]
        %187 = vst [vmem:[%s171 + $0x1c] sm:%s163] %v186
        %v188 = vld [vmem:[%s170 + $0x20] sm:%s163]
        %189 = vst [vmem:[%s171 + $0x20] sm:%s163] %v188
        %v190 = vld [vmem:[%s170 + $0x28] sm:%s163]
        %191 = vst [vmem:[%s171 + $0x24] sm:%s163] %v190
        %v192 = vld [vmem:[%s170 + $0x24] sm:%s163]
        %193 = vst [vmem:[%s171 + $0x28] sm:%s163] %v192
        %v194 = vld [vmem:[%s170 + $0x2c] sm:%s163]
        %195 = vst [vmem:[%s171 + $0x2c] sm:%s163] %v194
        %v196 = vld [vmem:[%s170 + $0x30] sm:%s163]
        %197 = vst [vmem:[%s171 + $0x30] sm:%s163] %v196
        %v198 = vld [vmem:[%s170 + $0x38] sm:%s163]
        %199 = vst [vmem:[%s171 + $0x34] sm:%s163] %v198
        %v200 = vld [vmem:[%s170 + $0x34] sm:%s163]
        %201 = vst [vmem:[%s171 + $0x38] sm:%s163] %v200
        %v202 = vld [vmem:[%s170 + $0x3c] sm:%s163]
        %203 = vst [vmem:[%s171 + $0x3c] sm:%s163] %v202
        %v204 = vld [vmem:[%s170 + $0x40] sm:%s163]
        %205 = vst [vmem:[%s171 + $0x40] sm:%s163] %v204
        %v206 = vld [vmem:[%s170 + $0x48] sm:%s163]
        %207 = vst [vmem:[%s171 + $0x44] sm:%s163] %v206
        %v208 = vld [vmem:[%s170 + $0x44] sm:%s163]
        %209 = vst [vmem:[%s171 + $0x48] sm:%s163] %v208
        %v210 = vld [vmem:[%s170 + $0x4c] sm:%s163]
        %211 = vst [vmem:[%s171 + $0x4c] sm:%s163] %v210
        %v212 = vld [vmem:[%s170 + $0x50] sm:%s163]
        %213 = vst [vmem:[%s171 + $0x50] sm:%s163] %v212
        %v214 = vld [vmem:[%s170 + $0x58] sm:%s163]
        %215 = vst [vmem:[%s171 + $0x54] sm:%s163] %v214
        %v216 = vld [vmem:[%s170 + $0x54] sm:%s163]
        %217 = vst [vmem:[%s171 + $0x58] sm:%s163] %v216
        %v218 = vld [vmem:[%s170 + $0x5c] sm:%s163]
        %219 = vst [vmem:[%s171 + $0x5c] sm:%s163] %v218
        %v220 = vld [vmem:[%s170 + $0x60] sm:%s163]
        %221 = vst [vmem:[%s171 + $0x60] sm:%s163] %v220
        %v222 = vld [vmem:[%s170 + $0x68] sm:%s163]
        %223 = vst [vmem:[%s171 + $0x64] sm:%s163] %v222
        %v224 = vld [vmem:[%s170 + $0x64] sm:%s163]
        %225 = vst [vmem:[%s171 + $0x68] sm:%s163] %v224
        %v226 = vld [vmem:[%s170 + $0x6c] sm:%s163]
        %227 = vst [vmem:[%s171 + $0x6c] sm:%s163] %v226
        %v228 = vld [vmem:[%s170 + $0x70] sm:%s163]
        %229 = vst [vmem:[%s171 + $0x70] sm:%s163] %v228
        %v230 = vld [vmem:[%s170 + $0x78] sm:%s163]
        %231 = vst [vmem:[%s171 + $0x74] sm:%s163] %v230
        %v232 = vld [vmem:[%s170 + $0x74] sm:%s163]
        %233 = vst [vmem:[%s171 + $0x78] sm:%s163] %v232
        %v234 = vld [vmem:[%s170 + $0x7c] sm:%s163]
        %235 = vst [vmem:[%s171 + $0x7c] sm:%s163] %v234
        %v236 = vld [vmem:[%s170 + $0x80] sm:%s163]
        %237 = vst [vmem:[%s171 + $0x80] sm:%s163] %v236
        %v238 = vld [vmem:[%s170 + $0x88] sm:%s163]
        %239 = vst [vmem:[%s171 + $0x84] sm:%s163] %v238
        %v240 = vld [vmem:[%s170 + $0x84] sm:%s163]
        %241 = vst [vmem:[%s171 + $0x88] sm:%s163] %v240
        %v242 = vld [vmem:[%s170 + $0x8c] sm:%s163]
        %243 = vst [vmem:[%s171 + $0x8c] sm:%s163] %v242
        %v244 = vld [vmem:[%s170 + $0x90] sm:%s163]
        %245 = vst [vmem:[%s171 + $0x90] sm:%s163] %v244
        %v246 = vld [vmem:[%s170 + $0x98] sm:%s163]
        %247 = vst [vmem:[%s171 + $0x94] sm:%s163] %v246
        %v248 = vld [vmem:[%s170 + $0x94] sm:%s163]
        %249 = vst [vmem:[%s171 + $0x98] sm:%s163] %v248
        %v250 = vld [vmem:[%s170 + $0x9c] sm:%s163]
        %251 = vst [vmem:[%s171 + $0x9c] sm:%s163] %v250
        %v252 = vld [vmem:[%s170 + $0xa0] sm:%s163]
        %253 = vst [vmem:[%s171 + $0xa0] sm:%s163] %v252
        %v254 = vld [vmem:[%s170 + $0xa8] sm:%s163]
        %255 = vst [vmem:[%s171 + $0xa4] sm:%s163] %v254
        %v256 = vld [vmem:[%s170 + $0xa4] sm:%s163]
        %257 = vst [vmem:[%s171 + $0xa8] sm:%s163] %v256
        %v258 = vld [vmem:[%s170 + $0xac] sm:%s163]
        %259 = vst [vmem:[%s171 + $0xac] sm:%s163] %v258
        %v260 = vld [vmem:[%s170 + $0xb0] sm:%s163]
        %261 = vst [vmem:[%s171 + $0xb0] sm:%s163] %v260
        %v262 = vld [vmem:[%s170 + $0xb8] sm:%s163]
        %263 = vst [vmem:[%s171 + $0xb4] sm:%s163] %v262
        %v264 = vld [vmem:[%s170 + $0xb4] sm:%s163]
        %265 = vst [vmem:[%s171 + $0xb8] sm:%s163] %v264
        %v266 = vld [vmem:[%s170 + $0xbc] sm:%s163]
        %267 = vst [vmem:[%s171 + $0xbc] sm:%s163] %v266
        %v268 = vld [vmem:[%s170 + $0xc0] sm:%s163]
        %269 = vst [vmem:[%s171 + $0xc0] sm:%s163] %v268
        %v270 = vld [vmem:[%s170 + $0xc8] sm:%s163]
        %271 = vst [vmem:[%s171 + $0xc4] sm:%s163] %v270
        %v272 = vld [vmem:[%s170 + $0xc4] sm:%s163]
        %273 = vst [vmem:[%s171 + $0xc8] sm:%s163] %v272
        %v274 = vld [vmem:[%s170 + $0xcc] sm:%s163]
        %275 = vst [vmem:[%s171 + $0xcc] sm:%s163] %v274
        %v276 = vld [vmem:[%s170 + $0xd0] sm:%s163]
        %277 = vst [vmem:[%s171 + $0xd0] sm:%s163] %v276
        %v278 = vld [vmem:[%s170 + $0xd8] sm:%s163]
        %279 = vst [vmem:[%s171 + $0xd4] sm:%s163] %v278
        %v280 = vld [vmem:[%s170 + $0xd4] sm:%s163]
        %281 = vst [vmem:[%s171 + $0xd8] sm:%s163] %v280
        %v282 = vld [vmem:[%s170 + $0xdc] sm:%s163]
        %283 = vst [vmem:[%s171 + $0xdc] sm:%s163] %v282
        %v284 = vld [vmem:[%s170 + $0xe0] sm:%s163]
        %285 = vst [vmem:[%s171 + $0xe0] sm:%s163] %v284
        %v286 = vld [vmem:[%s170 + $0xe8] sm:%s163]
        %287 = vst [vmem:[%s171 + $0xe4] sm:%s163] %v286
        %v288 = vld [vmem:[%s170 + $0xe4] sm:%s163]
        %289 = vst [vmem:[%s171 + $0xe8] sm:%s163] %v288
        %v290 = vld [vmem:[%s170 + $0xec] sm:%s163]
        %291 = vst [vmem:[%s171 + $0xec] sm:%s163] %v290
        %v292 = vld [vmem:[%s170 + $0xf0] sm:%s163]
        %293 = vst [vmem:[%s171 + $0xf0] sm:%s163] %v292
        %v294 = vld [vmem:[%s170 + $0xf8] sm:%s163]
        %295 = vst [vmem:[%s171 + $0xf4] sm:%s163] %v294
        %v296 = vld [vmem:[%s170 + $0xf4] sm:%s163]
        %297 = vst [vmem:[%s171 + $0xf8] sm:%s163] %v296
        %v298 = vld [vmem:[%s170 + $0xfc] sm:%s163]
        %299 = vst [vmem:[%s171 + $0xfc] sm:%s163] %v298
        %v300 = vld [vmem:[%s170 + $0x100] sm:%s163]
        %301 = vst [vmem:[%s171 + $0x100] sm:%s163] %v300
        %v302 = vld [vmem:[%s170 + $0x108] sm:%s163]
        %303 = vst [vmem:[%s171 + $0x104] sm:%s163] %v302
        %v304 = vld [vmem:[%s170 + $0x104] sm:%s163]
        %305 = vst [vmem:[%s171 + $0x108] sm:%s163] %v304
        %v306 = vld [vmem:[%s170 + $0x10c] sm:%s163]
        %307 = vst [vmem:[%s171 + $0x10c] sm:%s163] %v306
        %v308 = vld [vmem:[%s170 + $0x110] sm:%s163]
        %309 = vst [vmem:[%s171 + $0x110] sm:%s163] %v308
        %v310 = vld [vmem:[%s170 + $0x118] sm:%s163]
        %311 = vst [vmem:[%s171 + $0x114] sm:%s163] %v310
        %v312 = vld [vmem:[%s170 + $0x114] sm:%s163]
        %313 = vst [vmem:[%s171 + $0x118] sm:%s163] %v312
        %v314 = vld [vmem:[%s170 + $0x11c] sm:%s163]
        %315 = vst [vmem:[%s171 + $0x11c] sm:%s163] %v314
        %v316 = vld [vmem:[%s170 + $0x120] sm:%s163]
        %317 = vst [vmem:[%s171 + $0x120] sm:%s163] %v316
        %v318 = vld [vmem:[%s170 + $0x128] sm:%s163]
        %319 = vst [vmem:[%s171 + $0x124] sm:%s163] %v318
        %v320 = vld [vmem:[%s170 + $0x124] sm:%s163]
        %321 = vst [vmem:[%s171 + $0x128] sm:%s163] %v320
        %v322 = vld [vmem:[%s170 + $0x12c] sm:%s163]
        %323 = vst [vmem:[%s171 + $0x12c] sm:%s163] %v322
        %v324 = vld [vmem:[%s170 + $0x130] sm:%s163]
        %325 = vst [vmem:[%s171 + $0x130] sm:%s163] %v324
        %v326 = vld [vmem:[%s170 + $0x138] sm:%s163]
        %327 = vst [vmem:[%s171 + $0x134] sm:%s163] %v326
        %v328 = vld [vmem:[%s170 + $0x134] sm:%s163]
        %329 = vst [vmem:[%s171 + $0x138] sm:%s163] %v328
        %v330 = vld [vmem:[%s170 + $0x13c] sm:%s163]
        %331 = vst [vmem:[%s171 + $0x13c] sm:%s163] %v330
        %v332 = vld [vmem:[%s170 + $0x140] sm:%s163]
        %333 = vst [vmem:[%s171 + $0x140] sm:%s163] %v332
        %v334 = vld [vmem:[%s170 + $0x148] sm:%s163]
        %335 = vst [vmem:[%s171 + $0x144] sm:%s163] %v334
        %v336 = vld [vmem:[%s170 + $0x144] sm:%s163]
        %337 = vst [vmem:[%s171 + $0x148] sm:%s163] %v336
        %v338 = vld [vmem:[%s170 + $0x14c] sm:%s163]
        %339 = vst [vmem:[%s171 + $0x14c] sm:%s163] %v338
        %v340 = vld [vmem:[%s170 + $0x150] sm:%s163]
        %341 = vst [vmem:[%s171 + $0x150] sm:%s163] %v340
        %v342 = vld [vmem:[%s170 + $0x158] sm:%s163]
        %343 = vst [vmem:[%s171 + $0x154] sm:%s163] %v342
        %v344 = vld [vmem:[%s170 + $0x154] sm:%s163]
        %345 = vst [vmem:[%s171 + $0x158] sm:%s163] %v344
        %v346 = vld [vmem:[%s170 + $0x15c] sm:%s163]
        %347 = vst [vmem:[%s171 + $0x15c] sm:%s163] %v346
        %v348 = vld [vmem:[%s170 + $0x160] sm:%s163]
        %349 = vst [vmem:[%s171 + $0x160] sm:%s163] %v348
        %v350 = vld [vmem:[%s170 + $0x168] sm:%s163]
        %351 = vst [vmem:[%s171 + $0x164] sm:%s163] %v350
        %v352 = vld [vmem:[%s170 + $0x164] sm:%s163]
        %353 = vst [vmem:[%s171 + $0x168] sm:%s163] %v352
        %v354 = vld [vmem:[%s170 + $0x16c] sm:%s163]
        %355 = vst [vmem:[%s171 + $0x16c] sm:%s163] %v354
        %v356 = vld [vmem:[%s170 + $0x170] sm:%s163]
        %357 = vst [vmem:[%s171 + $0x170] sm:%s163] %v356
        %v358 = vld [vmem:[%s170 + $0x178] sm:%s163]
        %359 = vst [vmem:[%s171 + $0x174] sm:%s163] %v358
        %v360 = vld [vmem:[%s170 + $0x174] sm:%s163]
        %361 = vst [vmem:[%s171 + $0x178] sm:%s163] %v360
        %v362 = vld [vmem:[%s170 + $0x17c] sm:%s163]
        %363 = vst [vmem:[%s171 + $0x17c] sm:%s163] %v362
        %v364 = vld [vmem:[%s170 + $0x180] sm:%s163]
        %365 = vst [vmem:[%s171 + $0x180] sm:%s163] %v364
        %v366 = vld [vmem:[%s170 + $0x188] sm:%s163]
        %367 = vst [vmem:[%s171 + $0x184] sm:%s163] %v366
        %v368 = vld [vmem:[%s170 + $0x184] sm:%s163]
        %369 = vst [vmem:[%s171 + $0x188] sm:%s163] %v368
        %v370 = vld [vmem:[%s170 + $0x18c] sm:%s163]
        %371 = vst [vmem:[%s171 + $0x18c] sm:%s163] %v370
        %v372 = vld [vmem:[%s170 + $0x190] sm:%s163]
        %373 = vst [vmem:[%s171 + $0x190] sm:%s163] %v372
        %v374 = vld [vmem:[%s170 + $0x198] sm:%s163]
        %375 = vst [vmem:[%s171 + $0x194] sm:%s163] %v374
        %v376 = vld [vmem:[%s170 + $0x194] sm:%s163]
        %377 = vst [vmem:[%s171 + $0x198] sm:%s163] %v376
        %v378 = vld [vmem:[%s170 + $0x19c] sm:%s163]
        %379 = vst [vmem:[%s171 + $0x19c] sm:%s163] %v378
        %v380 = vld [vmem:[%s170 + $0x1a0] sm:%s163]
        %381 = vst [vmem:[%s171 + $0x1a0] sm:%s163] %v380
        %v382 = vld [vmem:[%s170 + $0x1a8] sm:%s163]
        %383 = vst [vmem:[%s171 + $0x1a4] sm:%s163] %v382
        %v384 = vld [vmem:[%s170 + $0x1a4] sm:%s163]
        %385 = vst [vmem:[%s171 + $0x1a8] sm:%s163] %v384
        %v386 = vld [vmem:[%s170 + $0x1ac] sm:%s163]
        %387 = vst [vmem:[%s171 + $0x1ac] sm:%s163] %v386
        %v388 = vld [vmem:[%s170 + $0x1b0] sm:%s163]
        %389 = vst [vmem:[%s171 + $0x1b0] sm:%s163] %v388
        %v390 = vld [vmem:[%s170 + $0x1b8] sm:%s163]
        %391 = vst [vmem:[%s171 + $0x1b4] sm:%s163] %v390
        %v392 = vld [vmem:[%s170 + $0x1b4] sm:%s163]
        %393 = vst [vmem:[%s171 + $0x1b8] sm:%s163] %v392
        %v394 = vld [vmem:[%s170 + $0x1bc] sm:%s163]
        %395 = vst [vmem:[%s171 + $0x1bc] sm:%s163] %v394
        %v396 = vld [vmem:[%s170 + $0x1c0] sm:%s163]
        %397 = vst [vmem:[%s171 + $0x1c0] sm:%s163] %v396
        %v398 = vld [vmem:[%s170 + $0x1c8] sm:%s163]
        %399 = vst [vmem:[%s171 + $0x1c4] sm:%s163] %v398
        %v400 = vld [vmem:[%s170 + $0x1c4] sm:%s163]
        %401 = vst [vmem:[%s171 + $0x1c8] sm:%s163] %v400
        %v402 = vld [vmem:[%s170 + $0x1cc] sm:%s163]
        %403 = vst [vmem:[%s171 + $0x1cc] sm:%s163] %v402
        %v404 = vld [vmem:[%s170 + $0x1d0] sm:%s163]
        %405 = vst [vmem:[%s171 + $0x1d0] sm:%s163] %v404
        %v406 = vld [vmem:[%s170 + $0x1d8] sm:%s163]
        %407 = vst [vmem:[%s171 + $0x1d4] sm:%s163] %v406
        %v408 = vld [vmem:[%s170 + $0x1d4] sm:%s163]
        %409 = vst [vmem:[%s171 + $0x1d8] sm:%s163] %v408
        %v410 = vld [vmem:[%s170 + $0x1dc] sm:%s163]
        %411 = vst [vmem:[%s171 + $0x1dc] sm:%s163] %v410
        %v412 = vld [vmem:[%s170 + $0x1e0] sm:%s163]
        %413 = vst [vmem:[%s171 + $0x1e0] sm:%s163] %v412
        %v414 = vld [vmem:[%s170 + $0x1e8] sm:%s163]
        %415 = vst [vmem:[%s171 + $0x1e4] sm:%s163] %v414
        %v416 = vld [vmem:[%s170 + $0x1e4] sm:%s163]
        %417 = vst [vmem:[%s171 + $0x1e8] sm:%s163] %v416
        %v418 = vld [vmem:[%s170 + $0x1ec] sm:%s163]
        %419 = vst [vmem:[%s171 + $0x1ec] sm:%s163] %v418
        %v420 = vld [vmem:[%s170 + $0x1f0] sm:%s163]
        %421 = vst [vmem:[%s171 + $0x1f0] sm:%s163] %v420
        %v422 = vld [vmem:[%s170 + $0x1f8] sm:%s163]
        %423 = vst [vmem:[%s171 + $0x1f4] sm:%s163] %v422
        %v424 = vld [vmem:[%s170 + $0x1f4] sm:%s163]
        %425 = vst [vmem:[%s171 + $0x1f8] sm:%s163] %v424
        %v426 = vld [vmem:[%s170 + $0x1fc] sm:%s163]
        %427 = vst [vmem:[%s171 + $0x1fc] sm:%s163] %v426
      $region122: #{cnn_forward.1} parent=116 // loop_footer
        %s169 = sadd.s32 1, %s165
      $region123: #{cnn_forward.1} parent=116 // loop_footer_branch
        %164 = sbr.rel target = $region119
      $region124: #{cnn_forward.1} parent=116 // loop_exit
        _
    $region117: #{cnn_forward.1} parent=1 // pred_fallthru
      _
    // Predicated region
    $region143: #{cnn_forward.1} parent=1 // pred_check
      _
    $region144: #{cnn_forward.1} parent=1 // pred_check_branch
      %713 = sbr.rel (0) target = $region146
    $region145: #{cnn_forward.1} parent=1 // pred_region
      %714 = vsyncadd [#allocation7], 8192
    $region146: #{cnn_forward.1} parent=1 // pred_fallthru
      _
    %s715 = scalar_lea.sflag [#allocation7], 1
    %s717 = sshll.u32 1, 14
    %s718 = sxor.u32 4294967295, %s717
    %s720 = sld [smem:[#allocation0]]
    %s721 = sadd.s32 2, %s720
    %s723 = sshll.u32 7, 26
    %s724 = sxor.u32 4294967295, %s723
    %s725 = sand.u32 0, %s724
    %s726 = sshll.u32 %s721, 26
    %s727 = sor.u32 %s725, %s726
    %s728 = sshll.u32 [#allocation3], 4
    %s729 = int_to_ptr.vmem [resolvable:$true] %s728
    %732 = sst [smem:[#allocation23]] 256
    %s733 = scalar_lea.smem [#allocation23], 1
    %734 = sst [smem:[%s733]] 256
    %s735 = scalar_lea.smem [#allocation23], 2
    %736 = sst [smem:[%s735]] 2
    %s737 = scalar_lea.smem [#allocation23], 3
    %738 = sst [smem:[%s737]] 64
    %s739 = scalar_lea.smem [#allocation23], 4
    %740 = sst [smem:[%s739]] 128
    %s741 = scalar_lea.smem [#allocation23], 5
    %742 = sst [smem:[%s741]] 2
    %s743 = scalar_lea.smem [#allocation23], 6
    %744 = sst [smem:[%s743]] 128
    %s745 = scalar_lea.smem [#allocation23], 7
    %746 = sst [smem:[%s745]] 64
    %s747 = scalar_lea.smem [#allocation23], 8
    %748 = sst [smem:[%s747]] 4
    %750 = dma.general %s21, 16384, %s729, %s715, [#allocation22], [#allocation23], %s727, 0
    %s751 = scalar_lea.sflag [#allocation7], 2
    %s753 = sshll.u32 1, 14
    %s754 = sxor.u32 4294967295, %s753
    %s756 = sadd.s32 2, %s720
    %s758 = sshll.u32 7, 26
    %s759 = sxor.u32 4294967295, %s758
    %s760 = sand.u32 0, %s759
    %s761 = sshll.u32 %s756, 26
    %s762 = sor.u32 %s760, %s761
    %s763 = sshll.u32 [#allocation4], 4
    %s764 = int_to_ptr.vmem [resolvable:$true] %s763
    %767 = sst [smem:[#allocation25]] 256
    %s768 = scalar_lea.smem [#allocation25], 1
    %769 = sst [smem:[%s768]] 256
    %s770 = scalar_lea.smem [#allocation25], 2
    %771 = sst [smem:[%s770]] 2
    %s772 = scalar_lea.smem [#allocation25], 3
    %773 = sst [smem:[%s772]] 64
    %s774 = scalar_lea.smem [#allocation25], 4
    %775 = sst [smem:[%s774]] 128
    %s776 = scalar_lea.smem [#allocation25], 5
    %777 = sst [smem:[%s776]] 2
    %s778 = scalar_lea.smem [#allocation25], 6
    %779 = sst [smem:[%s778]] 128
    %s780 = scalar_lea.smem [#allocation25], 7
    %781 = sst [smem:[%s780]] 64
    %s782 = scalar_lea.smem [#allocation25], 8
    %783 = sst [smem:[%s782]] 4
    %785 = dma.general %s22, 16384, %s764, %s751, [#allocation24], [#allocation25], %s762, 0
    %s786 = scalar_lea.sflag [#allocation7], 3
    // Predicated region
    $region147: #{cnn_forward.1} parent=1 // pred_check
      _
    $region148: #{cnn_forward.1} parent=1 // pred_check_branch
      %788 = sbr.rel target = $region150
    $region149: #{cnn_forward.1} parent=1 // pred_region
      %789 = sst [smem:[#allocation28]] [#allocation27]
      %790 = sst [smem:[#allocation29]] [#allocation26]
    $region150: #{cnn_forward.1} parent=1 // pred_fallthru
      _
    %792 = shalt.err (0)
    %s794 = sshll.u32 [#allocation5], 4
    %s795 = int_to_ptr.vmem [resolvable:$true] %s794
    %797 = dma.hbm_to_vmem [thread:$0]  %s23, 2048, %s795, %s786
    %s798 = scalar_lea.sflag [#allocation7], 4
    %p800 = scmp.lt.u32.totalorder 64, 8
    %p801 = pneg %p800
    // Predicated region
    $region151: #{cnn_forward.1} parent=1 // pred_check
      _
    $region152: #{cnn_forward.1} parent=1 // pred_check_branch
      %803 = sbr.rel (%p800) target = $region154
    $region153: #{cnn_forward.1} parent=1 // pred_region
      %s818 = sand.u32 64, 7
      %p819 = scmp.eq.s32.totalorder %s818, 0
      // Predicated region
      $region166: #{cnn_forward.1} parent=153 // pred_check
        %p820 = pneg %p819
      $region167: #{cnn_forward.1} parent=153 // pred_check_branch
        %822 = sbr.rel (%p820) target = $region169
      $region168: #{cnn_forward.1} parent=153 // pred_region
        loop: start=0, step=1, limit=1
        $region170: #{cnn_forward.1} parent=168 // loop_pre_header
          _
        $region171: #{cnn_forward.1} parent=168 // loop_header
          %s824 = sphi 0, %s828
          %p825 = scmp.ge.s32.totalorder %s824, 1
          %s829 = sphi %s24, %s24
          %s830 = sphi [#allocation6], [#allocation6]
        $region172: #{cnn_forward.1} parent=168 // loop_header_branch
          %827 = sbr.rel (%p825) target = $region176
        $region173: #{cnn_forward.1} parent=168 // loop_body
          %v831 = vld [vmem:[%s829] sm:$0xff]
          %832 = vst [vmem:[%s830] sm:$0xff] %v831
          %v833 = vld [vmem:[%s829 + $0x8] sm:$0xff]
          %834 = vst [vmem:[%s830 + $0x8] sm:$0xff] %v833
          %v835 = vld [vmem:[%s829 + $0x10] sm:$0xff]
          %836 = vst [vmem:[%s830 + $0x10] sm:$0xff] %v835
          %v837 = vld [vmem:[%s829 + $0x18] sm:$0xff]
          %838 = vst [vmem:[%s830 + $0x18] sm:$0xff] %v837
          %v839 = vld [vmem:[%s829 + $0x20] sm:$0xff]
          %840 = vst [vmem:[%s830 + $0x20] sm:$0xff] %v839
          %v841 = vld [vmem:[%s829 + $0x28] sm:$0xff]
          %842 = vst [vmem:[%s830 + $0x28] sm:$0xff] %v841
          %v843 = vld [vmem:[%s829 + $0x30] sm:$0xff]
          %844 = vst [vmem:[%s830 + $0x30] sm:$0xff] %v843
          %v845 = vld [vmem:[%s829 + $0x38] sm:$0xff]
          %846 = vst [vmem:[%s830 + $0x38] sm:$0xff] %v845
        $region174: #{cnn_forward.1} parent=168 // loop_footer
          %s828 = sadd.s32 1, %s824
        $region175: #{cnn_forward.1} parent=168 // loop_footer_branch
          %823 = sbr.rel target = $region171
        $region176: #{cnn_forward.1} parent=168 // loop_exit
          _
      $region169: #{cnn_forward.1} parent=153 // pred_fallthru
        _
      %p847 = pneg %p819
      // Predicated region
      $region177: #{cnn_forward.1} parent=153 // pred_check
        _
      $region178: #{cnn_forward.1} parent=153 // pred_check_branch
        %849 = sbr.rel (%p819) target = $region180
      $region179: #{cnn_forward.1} parent=153 // pred_region
        %s850 = sand.u32 64, 7
      $region180: #{cnn_forward.1} parent=153 // pred_fallthru
        _
    $region154: #{cnn_forward.1} parent=1 // pred_fallthru
      _
    // Predicated region
    $region155: #{cnn_forward.1} parent=1 // pred_check
      %p804 = pneg %p800
    $region156: #{cnn_forward.1} parent=1 // pred_check_branch
      %806 = sbr.rel (%p804) target = $region158
    $region157: #{cnn_forward.1} parent=1 // pred_region
      %s807 = sshllo.u32 0, 64
      loop: start=0, step=1, limit=1
      $region159: #{cnn_forward.1} parent=157 // loop_pre_header
        _
      $region160: #{cnn_forward.1} parent=157 // loop_header
        %s809 = sphi 0, %s813
        %p810 = scmp.ge.s32.totalorder %s809, 1
        %s814 = sphi %s24, %s24
        %s815 = sphi [#allocation6], [#allocation6]
      $region161: #{cnn_forward.1} parent=157 // loop_header_branch
        %812 = sbr.rel (%p810) target = $region165
      $region162: #{cnn_forward.1} parent=157 // loop_body
        %v816 = vld [vmem:[%s814] sm:%s807]
        %817 = vst [vmem:[%s815] sm:%s807] %v816
      $region163: #{cnn_forward.1} parent=157 // loop_footer
        %s813 = sadd.s32 1, %s809
      $region164: #{cnn_forward.1} parent=157 // loop_footer_branch
        %808 = sbr.rel target = $region160
      $region165: #{cnn_forward.1} parent=157 // loop_exit
        _
    $region158: #{cnn_forward.1} parent=1 // pred_fallthru
      _
    // Predicated region
    $region181: #{cnn_forward.1} parent=1 // pred_check
      _
    $region182: #{cnn_forward.1} parent=1 // pred_check_branch
      %853 = sbr.rel (0) target = $region184
    $region183: #{cnn_forward.1} parent=1 // pred_region
      %854 = vsyncadd %s798, 1024
    $region184: #{cnn_forward.1} parent=1 // pred_fallthru
      _
    %v855 = vld [vmem:[%s0] sm:$0xf]
    %v856 = vld [vmem:[%s0 + $0x4] sm:$0xf]
    %v857 = vld [vmem:[%s0 + $0x8] sm:$0xf]
    %v858 = vld [vmem:[%s0 + $0xc] sm:$0xf]
    %v859 = vld [vmem:[%s0 + $0x10] sm:$0xf]
    %v860 = vld [vmem:[%s0 + $0x14] sm:$0xf]
    %v861 = vld [vmem:[%s0 + $0x18] sm:$0xf]
    %v862 = vld [vmem:[%s0 + $0x1c] sm:$0xf]
    %v863 = vld [vmem:[%s0 + $0x20] sm:$0xf]
    %v864 = vld [vmem:[%s0 + $0x24] sm:$0xf]
    %v865 = vld [vmem:[%s0 + $0x28] sm:$0xf]
    %v866 = vld [vmem:[%s0 + $0x2c] sm:$0xf]
    %v867 = vld [vmem:[%s0 + $0x30] sm:$0xf]
    %v868 = vld [vmem:[#allocation8] sm:$0x3]
    %v869 = vld [vmem:[#allocation11] sm:$0x1]
    %v871 = vlaneseq
    %v872 = vshrl.u32 %v871, 7
    %v873 = vsub.s32 0, %v872
    %v874 = vrot.slane %v869, %v873
    %v889 = vunpack.c.l.b16 %v855
    %v890 = vunpack.c.l.b16 %v856
    %v891 = vunpack.c.l.b16 %v857
    %v892 = vunpack.c.l.b16 %v858
    %v893 = vunpack.c.l.b16 %v859
    %v894 = vunpack.c.l.b16 %v860
    %v895 = vunpack.c.l.b16 %v861
    %v896 = vunpack.c.l.b16 %v862
    %v897 = vunpack.c.l.b16 %v863
    %v898 = vunpack.c.l.b16 %v864
    %v899 = vunpack.c.l.b16 %v865
    %v900 = vunpack.c.l.b16 %v866
    %v901 = vunpack.c.l.b16 %v867
    %v902 = vpack.c.b16 %v890, %v889
    %v903 = vpack.c.b16 %v892, %v891
    %v904 = vpack.c.b16 %v894, %v893
    %v905 = vpack.c.b16 %v896, %v895
    %v906 = vpack.c.b16 %v898, %v897
    %v907 = vpack.c.b16 %v900, %v899
    %v908 = vpack.c.b16 %v901, %v901
    %vm909 = vcmask 31744
    %v911 = vsel %vm909, %v902, 0
    %v914 = vsel %vm909, %v903, 0
    %v917 = vsel %vm909, %v904, 0
    %v920 = vsel %vm909, %v905, 0
    %v923 = vsel %vm909, %v906, 0
    %v926 = vsel %vm909, %v907, 0
    %v929 = vsel %vm909, %v908, 0
    %vm931 = vcmask 1041408
    %v933 = vsel %vm931, %v868, 0
    %935 = vmatprep.subr.bf16.mxu0 0
    %936 = vmatpush1.bf16.msra.mxu0 %v933
    %937 = vmatprep.subr.bf16.mxu0 0
    %938 = vmatpush1.bf16.msra.mxu0 0
    %939 = vmatprep.subr.bf16.mxu0 0
    %940 = vmatpush1.bf16.msra.mxu0 0
    %941 = vmatprep.subr.bf16.mxu0 0
    %942 = vmatpush1.bf16.msra.mxu0 0
    %943 = vmatprep.subr.bf16.mxu0 0
    %944 = vmatpush1.bf16.msra.mxu0 0
    %945 = vmatprep.subr.bf16.mxu0 0
    %946 = vmatpush1.bf16.msra.mxu0 0
    %947 = vmatprep.subr.bf16.mxu0 0
    %948 = vmatpush1.bf16.msra.mxu0 0
    %949 = vmatprep.subr.bf16.mxu0 0
    %950 = vmatpush1.bf16.msra.mxu0 0
    %951 = vmatprep.subr.bf16.mxu0 0
    %952 = vmatpush1.bf16.msra.mxu0 0
    %953 = vmatprep.subr.bf16.mxu0 0
    %954 = vmatpush1.bf16.msra.mxu0 0
    %955 = vmatprep.subr.bf16.mxu0 0
    %956 = vmatpush1.bf16.msra.mxu0 0
    %957 = vmatprep.subr.bf16.mxu0 0
    %958 = vmatpush1.bf16.msra.mxu0 0
    %959 = vmatprep.subr.bf16.mxu0 0
    %960 = vmatpush1.bf16.msra.mxu0 0
    %961 = vmatprep.subr.bf16.mxu0 0
    %962 = vmatpush1.bf16.msra.mxu0 0
    %963 = vmatprep.subr.bf16.mxu0 0
    %964 = vmatpush1.bf16.msra.mxu0 0
    %965 = vmatprep.subr.bf16.mxu0 0
    %966 = vmatpush1.bf16.msra.mxu0 0
    %967 = vmatprep.mubr.bf16.mxu0 0
    %968 = vmatmul.mubr.bf16.gmra.mrb[0].mxu0 %v911
    %v969 = vpop.f32.mrb[0].mxu0
    %v970 = vadd.f32 %v874, %v969
    %v971 = vpop.f32.mrb[0].mxu0
    %v972 = vpop.f32.mrb[0].mxu0
    %v973 = vadd.f32 %v874, %v972
    %v974 = vpop.f32.mrb[0].mxu0
    %975 = vmatprep.mubr.bf16.mxu0 0
    %976 = vmatmul.mubr.bf16.gmra.mrb[0].mxu0 %v914
    %v977 = vpop.f32.mrb[0].mxu0
    %v978 = vadd.f32 %v874, %v977
    %v979 = vpop.f32.mrb[0].mxu0
    %v980 = vpop.f32.mrb[0].mxu0
    %v981 = vadd.f32 %v874, %v980
    %v982 = vpop.f32.mrb[0].mxu0
    %983 = vmatprep.mubr.bf16.mxu0 0
    %984 = vmatmul.mubr.bf16.gmra.mrb[0].mxu0 %v917
    %v985 = vpop.f32.mrb[0].mxu0
    %v986 = vadd.f32 %v874, %v985
    %v987 = vpop.f32.mrb[0].mxu0
    %v988 = vpop.f32.mrb[0].mxu0
    %v989 = vadd.f32 %v874, %v988
    %v990 = vpop.f32.mrb[0].mxu0
    %991 = vmatprep.mubr.bf16.mxu0 0
    %992 = vmatmul.mubr.bf16.gmra.mrb[0].mxu0 %v920
    %v993 = vpop.f32.mrb[0].mxu0
    %v994 = vadd.f32 %v874, %v993
    %v995 = vpop.f32.mrb[0].mxu0
    %v996 = vpop.f32.mrb[0].mxu0
    %v997 = vadd.f32 %v874, %v996
    %v998 = vpop.f32.mrb[0].mxu0
    %999 = vmatprep.mubr.bf16.mxu0 0
    %1000 = vmatmul.mubr.bf16.gmra.mrb[0].mxu0 %v923
    %v1001 = vpop.f32.mrb[0].mxu0
    %v1002 = vadd.f32 %v874, %v1001
    %v1003 = vpop.f32.mrb[0].mxu0
    %v1004 = vpop.f32.mrb[0].mxu0
    %v1005 = vadd.f32 %v874, %v1004
    %v1006 = vpop.f32.mrb[0].mxu0
    %1007 = vmatprep.mubr.bf16.mxu0 0
    %1008 = vmatmul.mubr.bf16.gmra.mrb[0].mxu0 %v926
    %v1009 = vpop.f32.mrb[0].mxu0
    %v1010 = vadd.f32 %v874, %v1009
    %v1011 = vpop.f32.mrb[0].mxu0
    %v1012 = vpop.f32.mrb[0].mxu0
    %v1013 = vadd.f32 %v874, %v1012
    %v1014 = vpop.f32.mrb[0].mxu0
    %1015 = vmatprep.mubr.bf16.mxu0 0
    %1016 = vmatmul.mubr.bf16.gmra.mrb[0].mxu0 %v929
    %v1017 = vpop.f32.mrb[0].mxu0
    %v1018 = vadd.f32 %v874, %v1017
    %v1019 = vpop.f32.mrb[0].mxu0
    %v1020 = vpop.f32.mrb[0].mxu0
    %v1021 = vpop.f32.mrb[0].mxu0
    %1022 = vdwg.mxu0
    %v1023 = vmax.f32 %v970, 0.0
    %v1024 = vmax.f32 %v973, 0.0
    %v1025 = vmax.f32 %v978, 0.0
    %v1026 = vmax.f32 %v981, 0.0
    %v1027 = vmax.f32 %v986, 0.0
    %v1028 = vmax.f32 %v989, 0.0
    %v1029 = vmax.f32 %v994, 0.0
    %v1030 = vmax.f32 %v997, 0.0
    %v1031 = vmax.f32 %v1002, 0.0
    %v1032 = vmax.f32 %v1005, 0.0
    %v1033 = vmax.f32 %v1010, 0.0
    %v1034 = vmax.f32 %v1013, 0.0
    %v1035 = vmax.f32 %v1018, 0.0
    %v1036 = vpack.c.bf16 %v1024, %v1023
    %v1037 = vpack.c.bf16 %v1026, %v1025
    %v1038 = vpack.c.bf16 %v1028, %v1027
    %v1039 = vpack.c.bf16 %v1030, %v1029
    %v1040 = vpack.c.bf16 %v1032, %v1031
    %v1041 = vpack.c.bf16 %v1034, %v1033
    %v1042 = vpack.c.bf16 %v1035, %v1035
    %v1043 = vld [vmem:[%s3] sm:$0xf]
    %v1044 = vld [vmem:[%s3 + $0x4] sm:$0xf]
    %v1045 = vld [vmem:[%s3 + $0x8] sm:$0xf]
    %v1046 = vld [vmem:[%s3 + $0xc] sm:$0xf]
    %v1047 = vld [vmem:[%s3 + $0x10] sm:$0xf]
    %v1048 = vld [vmem:[%s3 + $0x14] sm:$0xf]
    %v1049 = vld [vmem:[%s3 + $0x18] sm:$0xf]
    %v1050 = vld [vmem:[%s3 + $0x1c] sm:$0xf]
    %v1051 = vld [vmem:[%s3 + $0x20] sm:$0xf]
    %v1052 = vld [vmem:[%s3 + $0x24] sm:$0xf]
    %v1053 = vld [vmem:[%s3 + $0x28] sm:$0xf]
    %v1054 = vld [vmem:[%s3 + $0x2c] sm:$0xf]
    %v1055 = vld [vmem:[%s3 + $0x30] sm:$0xf]
    %v1056 = vld [vmem:[%s3 + $0x34] sm:$0xf]
    %v1057 = vld [vmem:[%s3 + $0x38] sm:$0xf]
    %v1058 = vld [vmem:[%s3 + $0x3c] sm:$0xf]
    %v1059 = vld [vmem:[%s3 + $0x40] sm:$0xf]
    %v1060 = vld [vmem:[%s3 + $0x44] sm:$0xf]
    %v1061 = vld [vmem:[%s3 + $0x48] sm:$0xf]
    %v1062 = vld [vmem:[%s3 + $0x4c] sm:$0xf]
    %v1063 = vld [vmem:[%s3 + $0x50] sm:$0xf]
    %v1064 = vld [vmem:[%s3 + $0x54] sm:$0xf]
    %v1065 = vld [vmem:[%s3 + $0x58] sm:$0xf]
    %v1066 = vld [vmem:[%s3 + $0x5c] sm:$0xf]
    %v1067 = vld [vmem:[%s3 + $0x60] sm:$0xf]
    %v1068 = vld [vmem:[%s3 + $0x64] sm:$0xf]
    %v1069 = vld [vmem:[%s3 + $0x68] sm:$0xf]
    %v1070 = vld [vmem:[%s3 + $0x6c] sm:$0xf]
    %v1071 = vld [vmem:[%s3 + $0x70] sm:$0xf]
    %v1072 = vld [vmem:[%s3 + $0x74] sm:$0xf]
    %v1073 = vld [vmem:[%s3 + $0x78] sm:$0xf]
    %v1074 = vld [vmem:[%s3 + $0x7c] sm:$0xf]
    %v1075 = vld [vmem:[%s3 + $0x80] sm:$0xf]
    %v1076 = vld [vmem:[%s3 + $0x84] sm:$0xf]
    %v1077 = vld [vmem:[%s3 + $0x88] sm:$0xf]
    %v1078 = vld [vmem:[%s3 + $0x8c] sm:$0xf]
    %v1115 = vunpack.c.l.b16 %v1043
    %v1116 = vunpack.c.l.b16 %v1044
    %v1117 = vunpack.c.l.b16 %v1045
    %v1118 = vunpack.c.l.b16 %v1046
    %v1119 = vunpack.c.l.b16 %v1047
    %v1120 = vunpack.c.l.b16 %v1048
    %v1121 = vunpack.c.l.b16 %v1049
    %v1122 = vunpack.c.l.b16 %v1050
    %v1123 = vunpack.c.l.b16 %v1051
    %v1124 = vunpack.c.l.b16 %v1052
    %v1125 = vunpack.c.l.b16 %v1053
    %v1126 = vunpack.c.l.b16 %v1054
    %v1127 = vunpack.c.l.b16 %v1055
    %v1128 = vunpack.c.l.b16 %v1056
    %v1129 = vunpack.c.l.b16 %v1057
    %v1130 = vunpack.c.l.b16 %v1058
    %v1131 = vunpack.c.l.b16 %v1059
    %v1132 = vunpack.c.l.b16 %v1060
    %v1133 = vunpack.c.l.b16 %v1061
    %v1134 = vunpack.c.l.b16 %v1062
    %v1135 = vunpack.c.l.b16 %v1063
    %v1136 = vunpack.c.l.b16 %v1064
    %v1137 = vunpack.c.l.b16 %v1065
    %v1138 = vunpack.c.l.b16 %v1066
    %v1139 = vunpack.c.l.b16 %v1067
    %v1140 = vunpack.c.l.b16 %v1068
    %v1141 = vunpack.c.l.b16 %v1069
    %v1142 = vunpack.c.l.b16 %v1070
    %v1143 = vunpack.c.l.b16 %v1071
    %v1144 = vunpack.c.l.b16 %v1072
    %v1145 = vunpack.c.l.b16 %v1073
    %v1146 = vunpack.c.l.b16 %v1074
    %v1147 = vunpack.c.l.b16 %v1075
    %v1148 = vunpack.c.l.b16 %v1076
    %v1149 = vunpack.c.l.b16 %v1077
    %v1150 = vunpack.c.l.b16 %v1078
    %v1151 = vpack.c.b16 %v1116, %v1115
    %v1152 = vpack.c.b16 %v1118, %v1117
    %v1153 = vpack.c.b16 %v1120, %v1119
    %v1154 = vpack.c.b16 %v1122, %v1121
    %v1155 = vpack.c.b16 %v1124, %v1123
    %v1156 = vpack.c.b16 %v1126, %v1125
    %v1157 = vpack.c.b16 %v1128, %v1127
    %v1158 = vpack.c.b16 %v1130, %v1129
    %v1159 = vpack.c.b16 %v1132, %v1131
    %v1160 = vpack.c.b16 %v1134, %v1133
    %v1161 = vpack.c.b16 %v1136, %v1135
    %v1162 = vpack.c.b16 %v1138, %v1137
    %v1163 = vpack.c.b16 %v1140, %v1139
    %v1164 = vpack.c.b16 %v1142, %v1141
    %v1165 = vpack.c.b16 %v1144, %v1143
    %v1166 = vpack.c.b16 %v1146, %v1145
    %v1167 = vpack.c.b16 %v1148, %v1147
    %v1168 = vpack.c.b16 %v1150, %v1149
    %vm1169 = vcmask 850944
    %v1171 = vsel %vm1169, %v1151, 0
    %v1174 = vsel %vm1169, %v1152, 0
    %v1177 = vsel %vm1169, %v1153, 0
    %v1180 = vsel %vm1169, %v1154, 0
    %v1183 = vsel %vm1169, %v1155, 0
    %v1186 = vsel %vm1169, %v1156, 0
    %v1189 = vsel %vm1169, %v1157, 0
    %v1192 = vsel %vm1169, %v1158, 0
    %v1195 = vsel %vm1169, %v1159, 0
    %v1198 = vsel %vm1169, %v1160, 0
    %v1201 = vsel %vm1169, %v1161, 0
    %v1204 = vsel %vm1169, %v1162, 0
    %v1207 = vsel %vm1169, %v1163, 0
    %v1210 = vsel %vm1169, %v1164, 0
    %v1213 = vsel %vm1169, %v1165, 0
    %v1216 = vsel %vm1169, %v1166, 0
    %v1219 = vsel %vm1169, %v1167, 0
    %v1222 = vsel %vm1169, %v1168, 0
    %vm1224 = vcmask 1043456
    %v1226 = vsel %vm1224, %v1042, 0
    %1228 = vmatprep.subr.bf16.mxu0 0
    %1229 = vmatpush1.bf16.msra.mxu0 %v1036
    %1230 = vmatprep.subr.bf16.mxu0 0
    %1231 = vmatpush1.bf16.msra.mxu0 %v1037
    %1232 = vmatprep.subr.bf16.mxu0 0
    %1233 = vmatpush1.bf16.msra.mxu0 %v1038
    %1234 = vmatprep.subr.bf16.mxu0 0
    %1235 = vmatpush1.bf16.msra.mxu0 %v1039
    %1236 = vmatprep.subr.bf16.mxu0 0
    %1237 = vmatpush1.bf16.msra.mxu0 %v1040
    %1238 = vmatprep.subr.bf16.mxu0 0
    %1239 = vmatpush1.bf16.msra.mxu0 %v1041
    %1240 = vmatprep.subr.bf16.mxu0 0
    %1241 = vmatpush1.bf16.msra.mxu0 %v1226
    %1242 = vmatprep.subr.bf16.mxu0 0
    %1243 = vmatpush1.bf16.msra.mxu0 0
    %1244 = vmatprep.subr.bf16.mxu0 0
    %1245 = vmatpush1.bf16.msra.mxu0 0
    %1246 = vmatprep.subr.bf16.mxu0 0
    %1247 = vmatpush1.bf16.msra.mxu0 0
    %1248 = vmatprep.subr.bf16.mxu0 0
    %1249 = vmatpush1.bf16.msra.mxu0 0
    %1250 = vmatprep.subr.bf16.mxu0 0
    %1251 = vmatpush1.bf16.msra.mxu0 0
    %1252 = vmatprep.subr.bf16.mxu0 0
    %1253 = vmatpush1.bf16.msra.mxu0 0
    %1254 = vmatprep.subr.bf16.mxu0 0
    %1255 = vmatpush1.bf16.msra.mxu0 0
    %1256 = vmatprep.subr.bf16.mxu0 0
    %1257 = vmatpush1.bf16.msra.mxu0 0
    %1258 = vmatprep.subr.bf16.mxu0 0
    %1259 = vmatpush1.bf16.msra.mxu0 0
    %1260 = vmatprep.mubr.bf16.mxu0 0
    %1261 = vmatmul.mubr.bf16.gmra.mrb[0].mxu0 %v1171
    %v1262 = vpop.f32.mrb[0].mxu0
    %v1263 = vadd.f32 0.0, %v1262
    %v1264 = vpop.f32.mrb[0].mxu0
    %v1265 = vpop.f32.mrb[0].mxu0
    %v1266 = vadd.f32 0.0, %v1265
    %v1267 = vpop.f32.mrb[0].mxu0
    %1268 = vmatprep.mubr.bf16.mxu0 0
    %1269 = vmatmul.mubr.bf16.gmra.mrb[0].mxu0 %v1174
    %v1270 = vpop.f32.mrb[0].mxu0
    %v1271 = vadd.f32 0.0, %v1270
    %v1272 = vpop.f32.mrb[0].mxu0
    %v1273 = vpop.f32.mrb[0].mxu0
    %v1274 = vadd.f32 0.0, %v1273
    %v1275 = vpop.f32.mrb[0].mxu0
    %1276 = vmatprep.mubr.bf16.mxu0 0
    %1277 = vmatmul.mubr.bf16.gmra.mrb[0].mxu0 %v1177
    %v1278 = vpop.f32.mrb[0].mxu0
    %v1279 = vadd.f32 0.0, %v1278
    %v1280 = vpop.f32.mrb[0].mxu0
    %v1281 = vpop.f32.mrb[0].mxu0
    %v1282 = vadd.f32 0.0, %v1281
    %v1283 = vpop.f32.mrb[0].mxu0
    %1284 = vmatprep.mubr.bf16.mxu0 0
    %1285 = vmatmul.mubr.bf16.gmra.mrb[0].mxu0 %v1180
    %v1286 = vpop.f32.mrb[0].mxu0
    %v1287 = vadd.f32 0.0, %v1286
    %v1288 = vpop.f32.mrb[0].mxu0
    %v1289 = vpop.f32.mrb[0].mxu0
    %v1290 = vadd.f32 0.0, %v1289
    %v1291 = vpop.f32.mrb[0].mxu0
    %1292 = vmatprep.mubr.bf16.mxu0 0
    %1293 = vmatmul.mubr.bf16.gmra.mrb[0].mxu0 %v1183
    %v1294 = vpop.f32.mrb[0].mxu0
    %v1295 = vadd.f32 0.0, %v1294
    %v1296 = vpop.f32.mrb[0].mxu0
    %v1297 = vpop.f32.mrb[0].mxu0
    %v1298 = vadd.f32 0.0, %v1297
    %v1299 = vpop.f32.mrb[0].mxu0
    %1300 = vmatprep.mubr.bf16.mxu0 0
    %1301 = vmatmul.mubr.bf16.gmra.mrb[0].mxu0 %v1186
    %v1302 = vpop.f32.mrb[0].mxu0
    %v1303 = vadd.f32 0.0, %v1302
    %v1304 = vpop.f32.mrb[0].mxu0
    %v1305 = vpop.f32.mrb[0].mxu0
    %v1306 = vadd.f32 0.0, %v1305
    %v1307 = vpop.f32.mrb[0].mxu0
    %1308 = vmatprep.mubr.bf16.mxu0 0
    %1309 = vmatmul.mubr.bf16.gmra.mrb[0].mxu0 %v1189
    %v1310 = vpop.f32.mrb[0].mxu0
    %v1311 = vadd.f32 0.0, %v1310
    %v1312 = vpop.f32.mrb[0].mxu0
    %v1313 = vpop.f32.mrb[0].mxu0
    %v1314 = vadd.f32 0.0, %v1313
    %v1315 = vpop.f32.mrb[0].mxu0
    %1316 = vmatprep.mubr.bf16.mxu0 0
    %1317 = vmatmul.mubr.bf16.gmra.mrb[0].mxu0 %v1192
    %v1318 = vpop.f32.mrb[0].mxu0
    %v1319 = vadd.f32 0.0, %v1318
    %v1320 = vpop.f32.mrb[0].mxu0
    %v1321 = vpop.f32.mrb[0].mxu0
    %v1322 = vadd.f32 0.0, %v1321
    %v1323 = vpop.f32.mrb[0].mxu0
    %1324 = vmatprep.mubr.bf16.mxu0 0
    %1325 = vmatmul.mubr.bf16.gmra.mrb[0].mxu0 %v1195
    %v1326 = vpop.f32.mrb[0].mxu0
    %v1327 = vadd.f32 0.0, %v1326
    %v1328 = vpop.f32.mrb[0].mxu0
    %v1329 = vpop.f32.mrb[0].mxu0
    %v1330 = vadd.f32 0.0, %v1329
    %v1331 = vpop.f32.mrb[0].mxu0
    %1332 = vmatprep.mubr.bf16.mxu0 0
    %1333 = vmatmul.mubr.bf16.gmra.mrb[0].mxu0 %v1198
    %v1334 = vpop.f32.mrb[0].mxu0
    %v1335 = vadd.f32 0.0, %v1334
    %v1336 = vpop.f32.mrb[0].mxu0
    %v1337 = vpop.f32.mrb[0].mxu0
    %v1338 = vadd.f32 0.0, %v1337
    %v1339 = vpop.f32.mrb[0].mxu0
    %1340 = vmatprep.mubr.bf16.mxu0 0
    %1341 = vmatmul.mubr.bf16.gmra.mrb[0].mxu0 %v1201
    %v1342 = vpop.f32.mrb[0].mxu0
    %v1343 = vadd.f32 0.0, %v1342
    %v1344 = vpop.f32.mrb[0].mxu0
    %v1345 = vpop.f32.mrb[0].mxu0
    %v1346 = vadd.f32 0.0, %v1345
    %v1347 = vpop.f32.mrb[0].mxu0
    %1348 = vmatprep.mubr.bf16.mxu0 0
    %1349 = vmatmul.mubr.bf16.gmra.mrb[0].mxu0 %v1204
    %v1350 = vpop.f32.mrb[0].mxu0
    %v1351 = vadd.f32 0.0, %v1350
    %v1352 = vpop.f32.mrb[0].mxu0
    %v1353 = vpop.f32.mrb[0].mxu0
    %v1354 = vadd.f32 0.0, %v1353
    %v1355 = vpop.f32.mrb[0].mxu0
    %1356 = vmatprep.mubr.bf16.mxu0 0
    %1357 = vmatmul.mubr.bf16.gmra.mrb[0].mxu0 %v1207
    %v1358 = vpop.f32.mrb[0].mxu0
    %v1359 = vadd.f32 0.0, %v1358
    %v1360 = vpop.f32.mrb[0].mxu0
    %v1361 = vpop.f32.mrb[0].mxu0
    %v1362 = vadd.f32 0.0, %v1361
    %v1363 = vpop.f32.mrb[0].mxu0
    %1364 = vmatprep.mubr.bf16.mxu0 0
    %1365 = vmatmul.mubr.bf16.gmra.mrb[0].mxu0 %v1210
    %v1366 = vpop.f32.mrb[0].mxu0
    %v1367 = vadd.f32 0.0, %v1366
    %v1368 = vpop.f32.mrb[0].mxu0
    %v1369 = vpop.f32.mrb[0].mxu0
    %v1370 = vadd.f32 0.0, %v1369
    %v1371 = vpop.f32.mrb[0].mxu0
    %1372 = vmatprep.mubr.bf16.mxu0 0
    %1373 = vmatmul.mubr.bf16.gmra.mrb[0].mxu0 %v1213
    %v1374 = vpop.f32.mrb[0].mxu0
    %v1375 = vadd.f32 0.0, %v1374
    %v1376 = vpop.f32.mrb[0].mxu0
    %v1377 = vpop.f32.mrb[0].mxu0
    %v1378 = vadd.f32 0.0, %v1377
    %v1379 = vpop.f32.mrb[0].mxu0
    %1380 = vmatprep.mubr.bf16.mxu0 0
    %1381 = vmatmul.mubr.bf16.gmra.mrb[0].mxu0 %v1216
    %v1382 = vpop.f32.mrb[0].mxu0
    %v1383 = vadd.f32 0.0, %v1382
    %v1384 = vpop.f32.mrb[0].mxu0
    %v1385 = vpop.f32.mrb[0].mxu0
    %v1386 = vadd.f32 0.0, %v1385
    %v1387 = vpop.f32.mrb[0].mxu0
    %1388 = vmatprep.mubr.bf16.mxu0 0
    %1389 = vmatmul.mubr.bf16.gmra.mrb[0].mxu0 %v1219
    %v1390 = vpop.f32.mrb[0].mxu0
    %v1391 = vadd.f32 0.0, %v1390
    %v1392 = vpop.f32.mrb[0].mxu0
    %v1393 = vpop.f32.mrb[0].mxu0
    %v1394 = vadd.f32 0.0, %v1393
    %v1395 = vpop.f32.mrb[0].mxu0
    %1396 = vmatprep.mubr.bf16.mxu0 0
    %1397 = vmatmul.mubr.bf16.gmra.mrb[0].mxu0 %v1222
    %v1398 = vpop.f32.mrb[0].mxu0
    %v1399 = vadd.f32 0.0, %v1398
    %v1400 = vpop.f32.mrb[0].mxu0
    %v1401 = vpop.f32.mrb[0].mxu0
    %v1402 = vadd.f32 0.0, %v1401
    %v1403 = vpop.f32.mrb[0].mxu0
    %1404 = vdwg.mxu0
    %v1405 = vpack.c.bf16 %v1266, %v1263
    %v1406 = vpack.c.bf16 %v1274, %v1271
    %v1407 = vpack.c.bf16 %v1282, %v1279
    %v1408 = vpack.c.bf16 %v1290, %v1287
    %v1409 = vpack.c.bf16 %v1298, %v1295
    %v1410 = vpack.c.bf16 %v1306, %v1303
    %v1411 = vpack.c.bf16 %v1314, %v1311
    %v1412 = vpack.c.bf16 %v1322, %v1319
    %v1413 = vpack.c.bf16 %v1330, %v1327
    %v1414 = vpack.c.bf16 %v1338, %v1335
    %v1415 = vpack.c.bf16 %v1346, %v1343
    %v1416 = vpack.c.bf16 %v1354, %v1351
    %v1417 = vpack.c.bf16 %v1362, %v1359
    %v1418 = vpack.c.bf16 %v1370, %v1367
    %v1419 = vpack.c.bf16 %v1378, %v1375
    %v1420 = vpack.c.bf16 %v1386, %v1383
    %v1421 = vpack.c.bf16 %v1394, %v1391
    %v1422 = vpack.c.bf16 %v1402, %v1399
    %v1423 = vld [vmem:[%s4] sm:$0xf]
    %v1424 = vld [vmem:[%s4 + $0x4] sm:$0xf]
    %v1425 = vld [vmem:[%s4 + $0x8] sm:$0xf]
    %v1426 = vld [vmem:[%s4 + $0xc] sm:$0xf]
    %v1427 = vld [vmem:[%s4 + $0x10] sm:$0xf]
    %v1428 = vld [vmem:[%s4 + $0x14] sm:$0xf]
    %v1429 = vld [vmem:[%s4 + $0x18] sm:$0xf]
    %v1430 = vld [vmem:[%s4 + $0x1c] sm:$0xf]
    %v1431 = vld [vmem:[%s4 + $0x20] sm:$0xf]
    %v1432 = vld [vmem:[%s4 + $0x24] sm:$0xf]
    %v1433 = vld [vmem:[%s4 + $0x28] sm:$0xf]
    %v1434 = vld [vmem:[%s4 + $0x2c] sm:$0xf]
    %v1435 = vld [vmem:[%s4 + $0x30] sm:$0xf]
    %v1436 = vld [vmem:[%s4 + $0x34] sm:$0xf]
    %v1437 = vld [vmem:[%s4 + $0x38] sm:$0xf]
    %v1438 = vld [vmem:[%s4 + $0x3c] sm:$0xf]
    %vm1444 = vcmask 1043456
    %v1445 = vrot.slane %v1409, 4
    %v1446 = vrot.slane %v1410, 4
    %v1447 = vsel %vm1444, %v1445, %v1446
    %v1448 = vrot.slane %v1411, 4
    %v1449 = vsel %vm1444, %v1446, %v1448
    %v1450 = vrot.slane %v1412, 4
    %v1451 = vsel %vm1444, %v1448, %v1450
    %v1452 = vrot.slane %v1413, 4
    %v1453 = vsel %vm1444, %v1450, %v1452
    %v1462 = vunpack.c.l.b16 %v1431
    %v1463 = vunpack.c.l.b16 %v1432
    %v1464 = vunpack.c.l.b16 %v1433
    %v1465 = vunpack.c.l.b16 %v1434
    %v1466 = vunpack.c.l.b16 %v1435
    %v1467 = vunpack.c.l.b16 %v1436
    %v1468 = vunpack.c.l.b16 %v1437
    %v1469 = vunpack.c.l.b16 %v1438
    %v1470 = vpack.c.b16 %v1463, %v1462
    %v1471 = vpack.c.b16 %v1465, %v1464
    %v1472 = vpack.c.b16 %v1467, %v1466
    %v1473 = vpack.c.b16 %v1469, %v1468
    %vm1478 = vcmask 523264
    %v1480 = vsel %vm1478, %v1447, 0
    %v1483 = vsel %vm1478, %v1449, 0
    %v1486 = vsel %vm1478, %v1451, 0
    %v1489 = vsel %vm1478, %v1453, 0
    %v1492 = vsel %vm1478, %v1452, 0
    %1494 = vmatprep.subr.bf16.mxu0 0
    %1495 = vmatpush1.bf16.msra.mxu0 %v1470
    %1496 = vmatprep.subr.bf16.mxu0 0
    %1497 = vmatpush1.bf16.msra.mxu0 %v1471
    %1498 = vmatprep.subr.bf16.mxu0 0
    %1499 = vmatpush1.bf16.msra.mxu0 %v1472
    %1500 = vmatprep.subr.bf16.mxu0 0
    %1501 = vmatpush1.bf16.msra.mxu0 %v1473
    %1502 = vmatprep.subr.bf16.mxu0 0
    %1503 = vmatpush1.bf16.msra.mxu0 0
    %1504 = vmatprep.subr.bf16.mxu0 0
    %1505 = vmatpush1.bf16.msra.mxu0 0
    %1506 = vmatprep.subr.bf16.mxu0 0
    %1507 = vmatpush1.bf16.msra.mxu0 0
    %1508 = vmatprep.subr.bf16.mxu0 0
    %1509 = vmatpush1.bf16.msra.mxu0 0
    %1510 = vmatprep.subr.bf16.mxu0 0
    %1511 = vmatpush1.bf16.msra.mxu0 0
    %1512 = vmatprep.subr.bf16.mxu0 0
    %1513 = vmatpush1.bf16.msra.mxu0 0
    %1514 = vmatprep.subr.bf16.mxu0 0
    %1515 = vmatpush1.bf16.msra.mxu0 0
    %1516 = vmatprep.subr.bf16.mxu0 0
    %1517 = vmatpush1.bf16.msra.mxu0 0
    %1518 = vmatprep.subr.bf16.mxu0 0
    %1519 = vmatpush1.bf16.msra.mxu0 0
    %1520 = vmatprep.subr.bf16.mxu0 0
    %1521 = vmatpush1.bf16.msra.mxu0 0
    %1522 = vmatprep.subr.bf16.mxu0 0
    %1523 = vmatpush1.bf16.msra.mxu0 0
    %1524 = vmatprep.subr.bf16.mxu0 0
    %1525 = vmatpush1.bf16.msra.mxu0 0
    %1526 = vmatprep.mubr.bf16.mxu0 0
    %1527 = vmatmul.mubr.bf16.gmra.mrb[0].mxu0 %v1480
    %v1528 = vpop.f32.mrb[0].mxu0
    %v1529 = vadd.f32 0.0, %v1528
    %v1530 = vpop.f32.mrb[0].mxu0
    %v1531 = vpop.f32.mrb[0].mxu0
    %v1532 = vadd.f32 0.0, %v1531
    %v1533 = vpop.f32.mrb[0].mxu0
    %1534 = vmatprep.mubr.bf16.mxu0 0
    %1535 = vmatmul.mubr.bf16.gmra.mrb[0].mxu0 %v1483
    %v1536 = vpop.f32.mrb[0].mxu0
    %v1537 = vadd.f32 0.0, %v1536
    %v1538 = vpop.f32.mrb[0].mxu0
    %v1539 = vpop.f32.mrb[0].mxu0
    %v1540 = vadd.f32 0.0, %v1539
    %v1541 = vpop.f32.mrb[0].mxu0
    %1542 = vmatprep.mubr.bf16.mxu0 0
    %1543 = vmatmul.mubr.bf16.gmra.mrb[0].mxu0 %v1486
    %v1544 = vpop.f32.mrb[0].mxu0
    %v1545 = vadd.f32 0.0, %v1544
    %v1546 = vpop.f32.mrb[0].mxu0
    %v1547 = vpop.f32.mrb[0].mxu0
    %v1548 = vadd.f32 0.0, %v1547
    %v1549 = vpop.f32.mrb[0].mxu0
    %1550 = vmatprep.mubr.bf16.mxu0 0
    %1551 = vmatmul.mubr.bf16.gmra.mrb[0].mxu0 %v1489
    %v1552 = vpop.f32.mrb[0].mxu0
    %v1553 = vadd.f32 0.0, %v1552
    %v1554 = vpop.f32.mrb[0].mxu0
    %v1555 = vpop.f32.mrb[0].mxu0
    %v1556 = vadd.f32 0.0, %v1555
    %v1557 = vpop.f32.mrb[0].mxu0
    %1558 = vmatprep.mubr.bf16.mxu0 0
    %1559 = vmatmul.mubr.bf16.gmra.mrb[0].mxu0 %v1492
    %v1560 = vpop.f32.mrb[0].mxu0
    %v1561 = vadd.f32 0.0, %v1560
    %v1562 = vpop.f32.mrb[0].mxu0
    %v1563 = vpop.f32.mrb[0].mxu0
    %v1564 = vpop.f32.mrb[0].mxu0
    %1565 = vdwg.mxu0
    %v1574 = vunpack.c.l.b16 %v1423
    %v1575 = vunpack.c.l.b16 %v1424
    %v1576 = vunpack.c.l.b16 %v1425
    %v1577 = vunpack.c.l.b16 %v1426
    %v1578 = vunpack.c.l.b16 %v1427
    %v1579 = vunpack.c.l.b16 %v1428
    %v1580 = vunpack.c.l.b16 %v1429
    %v1581 = vunpack.c.l.b16 %v1430
    %v1582 = vpack.c.b16 %v1575, %v1574
    %v1583 = vpack.c.b16 %v1577, %v1576
    %v1584 = vpack.c.b16 %v1579, %v1578
    %v1585 = vpack.c.b16 %v1581, %v1580
    %v1591 = vsel %vm1478, %v1405, 0
    %v1594 = vsel %vm1478, %v1406, 0
    %v1597 = vsel %vm1478, %v1407, 0
    %v1600 = vsel %vm1478, %v1408, 0
    %v1603 = vsel %vm1478, %v1409, 0
    %1605 = vmatprep.subr.bf16.mxu0 0
    %1606 = vmatpush1.bf16.msra.mxu0 %v1582
    %1607 = vmatprep.subr.bf16.mxu0 0
    %1608 = vmatpush1.bf16.msra.mxu0 %v1583
    %1609 = vmatprep.subr.bf16.mxu0 0
    %1610 = vmatpush1.bf16.msra.mxu0 %v1584
    %1611 = vmatprep.subr.bf16.mxu0 0
    %1612 = vmatpush1.bf16.msra.mxu0 %v1585
    %1613 = vmatprep.subr.bf16.mxu0 0
    %1614 = vmatpush1.bf16.msra.mxu0 0
    %1615 = vmatprep.subr.bf16.mxu0 0
    %1616 = vmatpush1.bf16.msra.mxu0 0
    %1617 = vmatprep.subr.bf16.mxu0 0
    %1618 = vmatpush1.bf16.msra.mxu0 0
    %1619 = vmatprep.subr.bf16.mxu0 0
    %1620 = vmatpush1.bf16.msra.mxu0 0
    %1621 = vmatprep.subr.bf16.mxu0 0
    %1622 = vmatpush1.bf16.msra.mxu0 0
    %1623 = vmatprep.subr.bf16.mxu0 0
    %1624 = vmatpush1.bf16.msra.mxu0 0
    %1625 = vmatprep.subr.bf16.mxu0 0
    %1626 = vmatpush1.bf16.msra.mxu0 0
    %1627 = vmatprep.subr.bf16.mxu0 0
    %1628 = vmatpush1.bf16.msra.mxu0 0
    %1629 = vmatprep.subr.bf16.mxu0 0
    %1630 = vmatpush1.bf16.msra.mxu0 0
    %1631 = vmatprep.subr.bf16.mxu0 0
    %1632 = vmatpush1.bf16.msra.mxu0 0
    %1633 = vmatprep.subr.bf16.mxu0 0
    %1634 = vmatpush1.bf16.msra.mxu0 0
    %1635 = vmatprep.subr.bf16.mxu0 0
    %1636 = vmatpush1.bf16.msra.mxu0 0
    %1637 = vmatprep.mubr.bf16.mxu0 0
    %1638 = vmatmul.mubr.bf16.gmra.mrb[0].mxu0 %v1591
    %v1639 = vpop.f32.mrb[0].mxu0
    %v1640 = vadd.f32 %v1529, %v1639
    %v1641 = vpop.f32.mrb[0].mxu0
    %v1642 = vpop.f32.mrb[0].mxu0
    %v1643 = vadd.f32 %v1532, %v1642
    %v1644 = vpop.f32.mrb[0].mxu0
    %1645 = vmatprep.mubr.bf16.mxu0 0
    %1646 = vmatmul.mubr.bf16.gmra.mrb[0].mxu0 %v1594
    %v1647 = vpop.f32.mrb[0].mxu0
    %v1648 = vadd.f32 %v1537, %v1647
    %v1649 = vpop.f32.mrb[0].mxu0
    %v1650 = vpop.f32.mrb[0].mxu0
    %v1651 = vadd.f32 %v1540, %v1650
    %v1652 = vpop.f32.mrb[0].mxu0
    %1653 = vmatprep.mubr.bf16.mxu0 0
    %1654 = vmatmul.mubr.bf16.gmra.mrb[0].mxu0 %v1597
    %v1655 = vpop.f32.mrb[0].mxu0
    %v1656 = vadd.f32 %v1545, %v1655
    %v1657 = vpop.f32.mrb[0].mxu0
    %v1658 = vpop.f32.mrb[0].mxu0
    %v1659 = vadd.f32 %v1548, %v1658
    %v1660 = vpop.f32.mrb[0].mxu0
    %1661 = vmatprep.mubr.bf16.mxu0 0
    %1662 = vmatmul.mubr.bf16.gmra.mrb[0].mxu0 %v1600
    %v1663 = vpop.f32.mrb[0].mxu0
    %v1664 = vadd.f32 %v1553, %v1663
    %v1665 = vpop.f32.mrb[0].mxu0
    %v1666 = vpop.f32.mrb[0].mxu0
    %v1667 = vadd.f32 %v1556, %v1666
    %v1668 = vpop.f32.mrb[0].mxu0
    %1669 = vmatprep.mubr.bf16.mxu0 0
    %1670 = vmatmul.mubr.bf16.gmra.mrb[0].mxu0 %v1603
    %v1671 = vpop.f32.mrb[0].mxu0
    %v1672 = vadd.f32 %v1561, %v1671
    %v1673 = vpop.f32.mrb[0].mxu0
    %v1674 = vpop.f32.mrb[0].mxu0
    %v1675 = vpop.f32.mrb[0].mxu0
    %1676 = vdwg.mxu0
    %v1677 = vld [vmem:[%s4 + $0x40] sm:$0xf]
    %v1678 = vld [vmem:[%s4 + $0x44] sm:$0xf]
    %v1679 = vld [vmem:[%s4 + $0x48] sm:$0xf]
    %v1680 = vld [vmem:[%s4 + $0x4c] sm:$0xf]
    %v1681 = vld [vmem:[%s4 + $0x50] sm:$0xf]
    %v1682 = vld [vmem:[%s4 + $0x54] sm:$0xf]
    %v1683 = vld [vmem:[%s4 + $0x58] sm:$0xf]
    %v1684 = vld [vmem:[%s4 + $0x5c] sm:$0xf]
    %v1693 = vunpack.c.l.b16 %v1677
    %v1694 = vunpack.c.l.b16 %v1678
    %v1695 = vunpack.c.l.b16 %v1679
    %v1696 = vunpack.c.l.b16 %v1680
    %v1697 = vunpack.c.l.b16 %v1681
    %v1698 = vunpack.c.l.b16 %v1682
    %v1699 = vunpack.c.l.b16 %v1683
    %v1700 = vunpack.c.l.b16 %v1684
    %v1701 = vpack.c.b16 %v1694, %v1693
    %v1702 = vpack.c.b16 %v1696, %v1695
    %v1703 = vpack.c.b16 %v1698, %v1697
    %v1704 = vpack.c.b16 %v1700, %v1699
    %v1710 = vsel %vm1478, %v1414, 0
    %v1713 = vsel %vm1478, %v1415, 0
    %v1716 = vsel %vm1478, %v1416, 0
    %v1719 = vsel %vm1478, %v1417, 0
    %v1722 = vsel %vm1478, %v1418, 0
    %1724 = vmatprep.subr.bf16.mxu0 0
    %1725 = vmatpush1.bf16.msra.mxu0 %v1701
    %1726 = vmatprep.subr.bf16.mxu0 0
    %1727 = vmatpush1.bf16.msra.mxu0 %v1702
    %1728 = vmatprep.subr.bf16.mxu0 0
    %1729 = vmatpush1.bf16.msra.mxu0 %v1703
    %1730 = vmatprep.subr.bf16.mxu0 0
    %1731 = vmatpush1.bf16.msra.mxu0 %v1704
    %1732 = vmatprep.subr.bf16.mxu0 0
    %1733 = vmatpush1.bf16.msra.mxu0 0
    %1734 = vmatprep.subr.bf16.mxu0 0
    %1735 = vmatpush1.bf16.msra.mxu0 0
    %1736 = vmatprep.subr.bf16.mxu0 0
    %1737 = vmatpush1.bf16.msra.mxu0 0
    %1738 = vmatprep.subr.bf16.mxu0 0
    %1739 = vmatpush1.bf16.msra.mxu0 0
    %1740 = vmatprep.subr.bf16.mxu0 0
    %1741 = vmatpush1.bf16.msra.mxu0 0
    %1742 = vmatprep.subr.bf16.mxu0 0
    %1743 = vmatpush1.bf16.msra.mxu0 0
    %1744 = vmatprep.subr.bf16.mxu0 0
    %1745 = vmatpush1.bf16.msra.mxu0 0
    %1746 = vmatprep.subr.bf16.mxu0 0
    %1747 = vmatpush1.bf16.msra.mxu0 0
    %1748 = vmatprep.subr.bf16.mxu0 0
    %1749 = vmatpush1.bf16.msra.mxu0 0
    %1750 = vmatprep.subr.bf16.mxu0 0
    %1751 = vmatpush1.bf16.msra.mxu0 0
    %1752 = vmatprep.subr.bf16.mxu0 0
    %1753 = vmatpush1.bf16.msra.mxu0 0
    %1754 = vmatprep.subr.bf16.mxu0 0
    %1755 = vmatpush1.bf16.msra.mxu0 0
    %1756 = vmatprep.mubr.bf16.mxu0 0
    %1757 = vmatmul.mubr.bf16.gmra.mrb[0].mxu0 %v1710
    %v1758 = vpop.f32.mrb[0].mxu0
    %v1759 = vadd.f32 0.0, %v1758
    %v1760 = vpop.f32.mrb[0].mxu0
    %v1761 = vpop.f32.mrb[0].mxu0
    %v1762 = vadd.f32 0.0, %v1761
    %v1763 = vpop.f32.mrb[0].mxu0
    %1764 = vmatprep.mubr.bf16.mxu0 0
    %1765 = vmatmul.mubr.bf16.gmra.mrb[0].mxu0 %v1713
    %v1766 = vpop.f32.mrb[0].mxu0
    %v1767 = vadd.f32 0.0, %v1766
    %v1768 = vpop.f32.mrb[0].mxu0
    %v1769 = vpop.f32.mrb[0].mxu0
    %v1770 = vadd.f32 0.0, %v1769
    %v1771 = vpop.f32.mrb[0].mxu0
    %1772 = vmatprep.mubr.bf16.mxu0 0
    %1773 = vmatmul.mubr.bf16.gmra.mrb[0].mxu0 %v1716
    %v1774 = vpop.f32.mrb[0].mxu0
    %v1775 = vadd.f32 0.0, %v1774
    %v1776 = vpop.f32.mrb[0].mxu0
    %v1777 = vpop.f32.mrb[0].mxu0
    %v1778 = vadd.f32 0.0, %v1777
    %v1779 = vpop.f32.mrb[0].mxu0
    %1780 = vmatprep.mubr.bf16.mxu0 0
    %1781 = vmatmul.mubr.bf16.gmra.mrb[0].mxu0 %v1719
    %v1782 = vpop.f32.mrb[0].mxu0
    %v1783 = vadd.f32 0.0, %v1782
    %v1784 = vpop.f32.mrb[0].mxu0
    %v1785 = vpop.f32.mrb[0].mxu0
    %v1786 = vadd.f32 0.0, %v1785
    %v1787 = vpop.f32.mrb[0].mxu0
    %1788 = vmatprep.mubr.bf16.mxu0 0
    %1789 = vmatmul.mubr.bf16.gmra.mrb[0].mxu0 %v1722
    %v1790 = vpop.f32.mrb[0].mxu0
    %v1791 = vadd.f32 0.0, %v1790
    %v1792 = vpop.f32.mrb[0].mxu0
    %v1793 = vpop.f32.mrb[0].mxu0
    %v1794 = vpop.f32.mrb[0].mxu0
    %1795 = vdwg.mxu0
    %v1796 = vadd.f32 %v1640, %v1759
    %v1797 = vadd.f32 %v1643, %v1762
    %v1798 = vadd.f32 %v1648, %v1767
    %v1799 = vadd.f32 %v1651, %v1770
    %v1800 = vadd.f32 %v1656, %v1775
    %v1801 = vadd.f32 %v1659, %v1778
    %v1802 = vadd.f32 %v1664, %v1783
    %v1803 = vadd.f32 %v1667, %v1786
    %v1804 = vadd.f32 %v1672, %v1791
    %v1805 = vld [vmem:[%s4 + $0x60] sm:$0xf]
    %v1806 = vld [vmem:[%s4 + $0x64] sm:$0xf]
    %v1807 = vld [vmem:[%s4 + $0x68] sm:$0xf]
    %v1808 = vld [vmem:[%s4 + $0x6c] sm:$0xf]
    %v1809 = vld [vmem:[%s4 + $0x70] sm:$0xf]
    %v1810 = vld [vmem:[%s4 + $0x74] sm:$0xf]
    %v1811 = vld [vmem:[%s4 + $0x78] sm:$0xf]
    %v1812 = vld [vmem:[%s4 + $0x7c] sm:$0xf]
    %v1818 = vrot.slane %v1418, 4
    %v1819 = vrot.slane %v1419, 4
    %v1820 = vsel %vm1444, %v1818, %v1819
    %v1821 = vrot.slane %v1420, 4
    %v1822 = vsel %vm1444, %v1819, %v1821
    %v1823 = vrot.slane %v1421, 4
    %v1824 = vsel %vm1444, %v1821, %v1823
    %v1825 = vrot.slane %v1422, 4
    %v1826 = vsel %vm1444, %v1823, %v1825
    %v1835 = vunpack.c.l.b16 %v1805
    %v1836 = vunpack.c.l.b16 %v1806
    %v1837 = vunpack.c.l.b16 %v1807
    %v1838 = vunpack.c.l.b16 %v1808
    %v1839 = vunpack.c.l.b16 %v1809
    %v1840 = vunpack.c.l.b16 %v1810
    %v1841 = vunpack.c.l.b16 %v1811
    %v1842 = vunpack.c.l.b16 %v1812
    %v1843 = vpack.c.b16 %v1836, %v1835
    %v1844 = vpack.c.b16 %v1838, %v1837
    %v1845 = vpack.c.b16 %v1840, %v1839
    %v1846 = vpack.c.b16 %v1842, %v1841
    %v1852 = vsel %vm1478, %v1820, 0
    %v1855 = vsel %vm1478, %v1822, 0
    %v1858 = vsel %vm1478, %v1824, 0
    %v1861 = vsel %vm1478, %v1826, 0
    %v1864 = vsel %vm1478, %v1825, 0
    %1866 = vmatprep.subr.bf16.mxu0 0
    %1867 = vmatpush1.bf16.msra.mxu0 %v1843
    %1868 = vmatprep.subr.bf16.mxu0 0
    %1869 = vmatpush1.bf16.msra.mxu0 %v1844
    %1870 = vmatprep.subr.bf16.mxu0 0
    %1871 = vmatpush1.bf16.msra.mxu0 %v1845
    %1872 = vmatprep.subr.bf16.mxu0 0
    %1873 = vmatpush1.bf16.msra.mxu0 %v1846
    %1874 = vmatprep.subr.bf16.mxu0 0
    %1875 = vmatpush1.bf16.msra.mxu0 0
    %1876 = vmatprep.subr.bf16.mxu0 0
    %1877 = vmatpush1.bf16.msra.mxu0 0
    %1878 = vmatprep.subr.bf16.mxu0 0
    %1879 = vmatpush1.bf16.msra.mxu0 0
    %1880 = vmatprep.subr.bf16.mxu0 0
    %1881 = vmatpush1.bf16.msra.mxu0 0
    %1882 = vmatprep.subr.bf16.mxu0 0
    %1883 = vmatpush1.bf16.msra.mxu0 0
    %1884 = vmatprep.subr.bf16.mxu0 0
    %1885 = vmatpush1.bf16.msra.mxu0 0
    %1886 = vmatprep.subr.bf16.mxu0 0
    %1887 = vmatpush1.bf16.msra.mxu0 0
    %1888 = vmatprep.subr.bf16.mxu0 0
    %1889 = vmatpush1.bf16.msra.mxu0 0
    %1890 = vmatprep.subr.bf16.mxu0 0
    %1891 = vmatpush1.bf16.msra.mxu0 0
    %1892 = vmatprep.subr.bf16.mxu0 0
    %1893 = vmatpush1.bf16.msra.mxu0 0
    %1894 = vmatprep.subr.bf16.mxu0 0
    %1895 = vmatpush1.bf16.msra.mxu0 0
    %1896 = vmatprep.subr.bf16.mxu0 0
    %1897 = vmatpush1.bf16.msra.mxu0 0
    %1898 = vmatprep.mubr.bf16.mxu0 0
    %1899 = vmatmul.mubr.bf16.gmra.mrb[0].mxu0 %v1852
    %v1900 = vpop.f32.mrb[0].mxu0
    %v1901 = vadd.f32 0.0, %v1900
    %v1902 = vpop.f32.mrb[0].mxu0
    %v1903 = vpop.f32.mrb[0].mxu0
    %v1904 = vadd.f32 0.0, %v1903
    %v1905 = vpop.f32.mrb[0].mxu0
    %1906 = vmatprep.mubr.bf16.mxu0 0
    %1907 = vmatmul.mubr.bf16.gmra.mrb[0].mxu0 %v1855
    %v1908 = vpop.f32.mrb[0].mxu0
    %v1909 = vadd.f32 0.0, %v1908
    %v1910 = vpop.f32.mrb[0].mxu0
    %v1911 = vpop.f32.mrb[0].mxu0
    %v1912 = vadd.f32 0.0, %v1911
    %v1913 = vpop.f32.mrb[0].mxu0
    %1914 = vmatprep.mubr.bf16.mxu0 0
    %1915 = vmatmul.mubr.bf16.gmra.mrb[0].mxu0 %v1858
    %v1916 = vpop.f32.mrb[0].mxu0
    %v1917 = vadd.f32 0.0, %v1916
    %v1918 = vpop.f32.mrb[0].mxu0
    %v1919 = vpop.f32.mrb[0].mxu0
    %v1920 = vadd.f32 0.0, %v1919
    %v1921 = vpop.f32.mrb[0].mxu0
    %1922 = vmatprep.mubr.bf16.mxu0 0
    %1923 = vmatmul.mubr.bf16.gmra.mrb[0].mxu0 %v1861
    %v1924 = vpop.f32.mrb[0].mxu0
    %v1925 = vadd.f32 0.0, %v1924
    %v1926 = vpop.f32.mrb[0].mxu0
    %v1927 = vpop.f32.mrb[0].mxu0
    %v1928 = vadd.f32 0.0, %v1927
    %v1929 = vpop.f32.mrb[0].mxu0
    %1930 = vmatprep.mubr.bf16.mxu0 0
    %1931 = vmatmul.mubr.bf16.gmra.mrb[0].mxu0 %v1864
    %v1932 = vpop.f32.mrb[0].mxu0
    %v1933 = vadd.f32 0.0, %v1932
    %v1934 = vpop.f32.mrb[0].mxu0
    %v1935 = vpop.f32.mrb[0].mxu0
    %v1936 = vpop.f32.mrb[0].mxu0
    %1937 = vdwg.mxu0
    %v1938 = vadd.f32 %v1796, %v1901
    %v1939 = vadd.f32 %v1797, %v1904
    %v1940 = vadd.f32 %v1798, %v1909
    %v1941 = vadd.f32 %v1799, %v1912
    %v1942 = vadd.f32 %v1800, %v1917
    %v1943 = vadd.f32 %v1801, %v1920
    %v1944 = vadd.f32 %v1802, %v1925
    %v1945 = vadd.f32 %v1803, %v1928
    %v1946 = vadd.f32 %v1804, %v1933
    %v1947 = vld [vmem:[#allocation13] sm:$0x1]
    %v1949 = vlaneseq
    %v1950 = vshrl.u32 %v1949, 7
    %v1951 = vsub.s32 0, %v1950
    %v1952 = vrot.slane %v1947, %v1951
    %v1954 = vadd.f32 %v1938, %v1952
    %v1955 = vadd.f32 %v1939, %v1952
    %v1956 = vadd.f32 %v1940, %v1952
    %v1957 = vadd.f32 %v1941, %v1952
    %v1958 = vadd.f32 %v1942, %v1952
    %v1959 = vadd.f32 %v1943, %v1952
    %v1960 = vadd.f32 %v1944, %v1952
    %v1961 = vadd.f32 %v1945, %v1952
    %v1962 = vadd.f32 %v1946, %v1952
    %v1963 = vmax.f32 %v1954, 0.0
    %v1964 = vmax.f32 %v1955, 0.0
    %v1965 = vmax.f32 %v1956, 0.0
    %v1966 = vmax.f32 %v1957, 0.0
    %v1967 = vmax.f32 %v1958, 0.0
    %v1968 = vmax.f32 %v1959, 0.0
    %v1969 = vmax.f32 %v1960, 0.0
    %v1970 = vmax.f32 %v1961, 0.0
    %v1971 = vmax.f32 %v1962, 0.0
    %v1972 = vpack.c.bf16 %v1964, %v1963
    %v1973 = vpack.c.bf16 %v1966, %v1965
    %v1974 = vpack.c.bf16 %v1968, %v1967
    %v1975 = vpack.c.bf16 %v1970, %v1969
    %v1976 = vpack.c.bf16 %v1971, %v1971
    %v1977 = vld [vmem:[%s6] sm:$0xf]
    %v1978 = vld [vmem:[%s6 + $0x4] sm:$0xf]
    %v1979 = vld [vmem:[%s6 + $0x8] sm:$0xf]
    %v1980 = vld [vmem:[%s6 + $0xc] sm:$0xf]
    %v1981 = vld [vmem:[%s6 + $0x10] sm:$0xf]
    %v1982 = vld [vmem:[%s6 + $0x14] sm:$0xf]
    %v1983 = vld [vmem:[%s6 + $0x18] sm:$0xf]
    %v1984 = vld [vmem:[%s6 + $0x1c] sm:$0xf]
    %v1985 = vld [vmem:[%s6 + $0x20] sm:$0xf]
    %v1986 = vld [vmem:[%s6 + $0x24] sm:$0xf]
    %v1987 = vld [vmem:[%s6 + $0x28] sm:$0xf]
    %v1988 = vld [vmem:[%s6 + $0x2c] sm:$0xf]
    %v1989 = vld [vmem:[%s6 + $0x30] sm:$0xf]
    %v1990 = vld [vmem:[%s6 + $0x34] sm:$0xf]
    %v1991 = vld [vmem:[%s6 + $0x38] sm:$0xf]
    %v1992 = vld [vmem:[%s6 + $0x3c] sm:$0xf]
    %v1993 = vld [vmem:[%s6 + $0x40] sm:$0xf]
    %v1994 = vld [vmem:[%s6 + $0x44] sm:$0xf]
    %v1995 = vld [vmem:[%s6 + $0x48] sm:$0xf]
    %v1996 = vld [vmem:[%s6 + $0x4c] sm:$0xf]
    %v1997 = vld [vmem:[%s6 + $0x50] sm:$0xf]
    %v1998 = vld [vmem:[%s6 + $0x54] sm:$0xf]
    %v1999 = vld [vmem:[%s6 + $0x58] sm:$0xf]
    %v2000 = vld [vmem:[%s6 + $0x5c] sm:$0xf]
    %v2001 = vld [vmem:[%s6 + $0x60] sm:$0xf]
    %v2002 = vld [vmem:[%s6 + $0x64] sm:$0xf]
    %v2003 = vld [vmem:[%s6 + $0x68] sm:$0xf]
    %v2004 = vld [vmem:[%s6 + $0x6c] sm:$0xf]
    %v2033 = vunpack.c.l.b16 %v1977
    %v2034 = vunpack.c.l.b16 %v1978
    %v2035 = vunpack.c.l.b16 %v1979
    %v2036 = vunpack.c.l.b16 %v1980
    %v2037 = vunpack.c.l.b16 %v1981
    %v2038 = vunpack.c.l.b16 %v1982
    %v2039 = vunpack.c.l.b16 %v1983
    %v2040 = vunpack.c.l.b16 %v1984
    %v2041 = vunpack.c.l.b16 %v1985
    %v2042 = vunpack.c.l.b16 %v1986
    %v2043 = vunpack.c.l.b16 %v1987
    %v2044 = vunpack.c.l.b16 %v1988
    %v2045 = vunpack.c.l.b16 %v1989
    %v2046 = vunpack.c.l.b16 %v1990
    %v2047 = vunpack.c.l.b16 %v1991
    %v2048 = vunpack.c.l.b16 %v1992
    %v2049 = vunpack.c.l.b16 %v1993
    %v2050 = vunpack.c.l.b16 %v1994
    %v2051 = vunpack.c.l.b16 %v1995
    %v2052 = vunpack.c.l.b16 %v1996
    %v2053 = vunpack.c.l.b16 %v1997
    %v2054 = vunpack.c.l.b16 %v1998
    %v2055 = vunpack.c.l.b16 %v1999
    %v2056 = vunpack.c.l.b16 %v2000
    %v2057 = vunpack.c.l.b16 %v2001
    %v2058 = vunpack.c.l.b16 %v2002
    %v2059 = vunpack.c.l.b16 %v2003
    %v2060 = vunpack.c.l.b16 %v2004
    %v2061 = vpack.c.b16 %v2034, %v2033
    %v2062 = vpack.c.b16 %v2036, %v2035
    %v2063 = vpack.c.b16 %v2038, %v2037
    %v2064 = vpack.c.b16 %v2040, %v2039
    %v2065 = vpack.c.b16 %v2042, %v2041
    %v2066 = vpack.c.b16 %v2044, %v2043
    %v2067 = vpack.c.b16 %v2046, %v2045
    %v2068 = vpack.c.b16 %v2048, %v2047
    %v2069 = vpack.c.b16 %v2050, %v2049
    %v2070 = vpack.c.b16 %v2052, %v2051
    %v2071 = vpack.c.b16 %v2054, %v2053
    %v2072 = vpack.c.b16 %v2056, %v2055
    %v2073 = vpack.c.b16 %v2058, %v2057
    %v2074 = vpack.c.b16 %v2060, %v2059
    %vm2075 = vcmask 588800
    %v2077 = vsel %vm2075, %v2061, 0
    %v2080 = vsel %vm2075, %v2062, 0
    %v2083 = vsel %vm2075, %v2063, 0
    %v2086 = vsel %vm2075, %v2064, 0
    %v2089 = vsel %vm2075, %v2065, 0
    %v2092 = vsel %vm2075, %v2066, 0
    %v2095 = vsel %vm2075, %v2067, 0
    %v2098 = vsel %vm2075, %v2068, 0
    %v2101 = vsel %vm2075, %v2069, 0
    %v2104 = vsel %vm2075, %v2070, 0
    %v2107 = vsel %vm2075, %v2071, 0
    %v2110 = vsel %vm2075, %v2072, 0
    %v2113 = vsel %vm2075, %v2073, 0
    %v2116 = vsel %vm2075, %v2074, 0
    %v2119 = vsel %vm1224, %v1976, 0
    %2121 = vmatprep.subr.bf16.mxu0 0
    %2122 = vmatpush1.bf16.msra.mxu0 %v1972
    %2123 = vmatprep.subr.bf16.mxu0 0
    %2124 = vmatpush1.bf16.msra.mxu0 %v1973
    %2125 = vmatprep.subr.bf16.mxu0 0
    %2126 = vmatpush1.bf16.msra.mxu0 %v1974
    %2127 = vmatprep.subr.bf16.mxu0 0
    %2128 = vmatpush1.bf16.msra.mxu0 %v1975
    %2129 = vmatprep.subr.bf16.mxu0 0
    %2130 = vmatpush1.bf16.msra.mxu0 %v2119
    %2131 = vmatprep.subr.bf16.mxu0 0
    %2132 = vmatpush1.bf16.msra.mxu0 0
    %2133 = vmatprep.subr.bf16.mxu0 0
    %2134 = vmatpush1.bf16.msra.mxu0 0
    %2135 = vmatprep.subr.bf16.mxu0 0
    %2136 = vmatpush1.bf16.msra.mxu0 0
    %2137 = vmatprep.subr.bf16.mxu0 0
    %2138 = vmatpush1.bf16.msra.mxu0 0
    %2139 = vmatprep.subr.bf16.mxu0 0
    %2140 = vmatpush1.bf16.msra.mxu0 0
    %2141 = vmatprep.subr.bf16.mxu0 0
    %2142 = vmatpush1.bf16.msra.mxu0 0
    %2143 = vmatprep.subr.bf16.mxu0 0
    %2144 = vmatpush1.bf16.msra.mxu0 0
    %2145 = vmatprep.subr.bf16.mxu0 0
    %2146 = vmatpush1.bf16.msra.mxu0 0
    %2147 = vmatprep.subr.bf16.mxu0 0
    %2148 = vmatpush1.bf16.msra.mxu0 0
    %2149 = vmatprep.subr.bf16.mxu0 0
    %2150 = vmatpush1.bf16.msra.mxu0 0
    %2151 = vmatprep.subr.bf16.mxu0 0
    %2152 = vmatpush1.bf16.msra.mxu0 0
    %2153 = vmatprep.mubr.bf16.mxu0 0
    %2154 = vmatmul.mubr.bf16.gmra.mrb[0].mxu0 %v2077
    %v2155 = vpop.f32.mrb[0].mxu0
    %v2156 = vadd.f32 0.0, %v2155
    %v2157 = vpop.f32.mrb[0].mxu0
    %v2158 = vpop.f32.mrb[0].mxu0
    %v2159 = vadd.f32 0.0, %v2158
    %v2160 = vpop.f32.mrb[0].mxu0
    %2161 = vmatprep.mubr.bf16.mxu0 0
    %2162 = vmatmul.mubr.bf16.gmra.mrb[0].mxu0 %v2080
    %v2163 = vpop.f32.mrb[0].mxu0
    %v2164 = vadd.f32 0.0, %v2163
    %v2165 = vpop.f32.mrb[0].mxu0
    %v2166 = vpop.f32.mrb[0].mxu0
    %v2167 = vadd.f32 0.0, %v2166
    %v2168 = vpop.f32.mrb[0].mxu0
    %2169 = vmatprep.mubr.bf16.mxu0 0
    %2170 = vmatmul.mubr.bf16.gmra.mrb[0].mxu0 %v2083
    %v2171 = vpop.f32.mrb[0].mxu0
    %v2172 = vadd.f32 0.0, %v2171
    %v2173 = vpop.f32.mrb[0].mxu0
    %v2174 = vpop.f32.mrb[0].mxu0
    %v2175 = vadd.f32 0.0, %v2174
    %v2176 = vpop.f32.mrb[0].mxu0
    %2177 = vmatprep.mubr.bf16.mxu0 0
    %2178 = vmatmul.mubr.bf16.gmra.mrb[0].mxu0 %v2086
    %v2179 = vpop.f32.mrb[0].mxu0
    %v2180 = vadd.f32 0.0, %v2179
    %v2181 = vpop.f32.mrb[0].mxu0
    %v2182 = vpop.f32.mrb[0].mxu0
    %v2183 = vadd.f32 0.0, %v2182
    %v2184 = vpop.f32.mrb[0].mxu0
    %2185 = vmatprep.mubr.bf16.mxu0 0
    %2186 = vmatmul.mubr.bf16.gmra.mrb[0].mxu0 %v2089
    %v2187 = vpop.f32.mrb[0].mxu0
    %v2188 = vadd.f32 0.0, %v2187
    %v2189 = vpop.f32.mrb[0].mxu0
    %v2190 = vpop.f32.mrb[0].mxu0
    %v2191 = vadd.f32 0.0, %v2190
    %v2192 = vpop.f32.mrb[0].mxu0
    %2193 = vmatprep.mubr.bf16.mxu0 0
    %2194 = vmatmul.mubr.bf16.gmra.mrb[0].mxu0 %v2092
    %v2195 = vpop.f32.mrb[0].mxu0
    %v2196 = vadd.f32 0.0, %v2195
    %v2197 = vpop.f32.mrb[0].mxu0
    %v2198 = vpop.f32.mrb[0].mxu0
    %v2199 = vadd.f32 0.0, %v2198
    %v2200 = vpop.f32.mrb[0].mxu0
    %2201 = vmatprep.mubr.bf16.mxu0 0
    %2202 = vmatmul.mubr.bf16.gmra.mrb[0].mxu0 %v2095
    %v2203 = vpop.f32.mrb[0].mxu0
    %v2204 = vadd.f32 0.0, %v2203
    %v2205 = vpop.f32.mrb[0].mxu0
    %v2206 = vpop.f32.mrb[0].mxu0
    %v2207 = vadd.f32 0.0, %v2206
    %v2208 = vpop.f32.mrb[0].mxu0
    %2209 = vmatprep.mubr.bf16.mxu0 0
    %2210 = vmatmul.mubr.bf16.gmra.mrb[0].mxu0 %v2098
    %v2211 = vpop.f32.mrb[0].mxu0
    %v2212 = vadd.f32 0.0, %v2211
    %v2213 = vpop.f32.mrb[0].mxu0
    %v2214 = vpop.f32.mrb[0].mxu0
    %v2215 = vadd.f32 0.0, %v2214
    %v2216 = vpop.f32.mrb[0].mxu0
    %2217 = vmatprep.mubr.bf16.mxu0 0
    %2218 = vmatmul.mubr.bf16.gmra.mrb[0].mxu0 %v2101
    %v2219 = vpop.f32.mrb[0].mxu0
    %v2220 = vadd.f32 0.0, %v2219
    %v2221 = vpop.f32.mrb[0].mxu0
    %v2222 = vpop.f32.mrb[0].mxu0
    %v2223 = vadd.f32 0.0, %v2222
    %v2224 = vpop.f32.mrb[0].mxu0
    %2225 = vmatprep.mubr.bf16.mxu0 0
    %2226 = vmatmul.mubr.bf16.gmra.mrb[0].mxu0 %v2104
    %v2227 = vpop.f32.mrb[0].mxu0
    %v2228 = vadd.f32 0.0, %v2227
    %v2229 = vpop.f32.mrb[0].mxu0
    %v2230 = vpop.f32.mrb[0].mxu0
    %v2231 = vadd.f32 0.0, %v2230
    %v2232 = vpop.f32.mrb[0].mxu0
    %2233 = vmatprep.mubr.bf16.mxu0 0
    %2234 = vmatmul.mubr.bf16.gmra.mrb[0].mxu0 %v2107
    %v2235 = vpop.f32.mrb[0].mxu0
    %v2236 = vadd.f32 0.0, %v2235
    %v2237 = vpop.f32.mrb[0].mxu0
    %v2238 = vpop.f32.mrb[0].mxu0
    %v2239 = vadd.f32 0.0, %v2238
    %v2240 = vpop.f32.mrb[0].mxu0
    %2241 = vmatprep.mubr.bf16.mxu0 0
    %2242 = vmatmul.mubr.bf16.gmra.mrb[0].mxu0 %v2110
    %v2243 = vpop.f32.mrb[0].mxu0
    %v2244 = vadd.f32 0.0, %v2243
    %v2245 = vpop.f32.mrb[0].mxu0
    %v2246 = vpop.f32.mrb[0].mxu0
    %v2247 = vadd.f32 0.0, %v2246
    %v2248 = vpop.f32.mrb[0].mxu0
    %2249 = vmatprep.mubr.bf16.mxu0 0
    %2250 = vmatmul.mubr.bf16.gmra.mrb[0].mxu0 %v2113
    %v2251 = vpop.f32.mrb[0].mxu0
    %v2252 = vadd.f32 0.0, %v2251
    %v2253 = vpop.f32.mrb[0].mxu0
    %v2254 = vpop.f32.mrb[0].mxu0
    %v2255 = vadd.f32 0.0, %v2254
    %v2256 = vpop.f32.mrb[0].mxu0
    %2257 = vmatprep.mubr.bf16.mxu0 0
    %2258 = vmatmul.mubr.bf16.gmra.mrb[0].mxu0 %v2116
    %v2259 = vpop.f32.mrb[0].mxu0
    %v2260 = vadd.f32 0.0, %v2259
    %v2261 = vpop.f32.mrb[0].mxu0
    %v2262 = vpop.f32.mrb[0].mxu0
    %v2263 = vadd.f32 0.0, %v2262
    %v2264 = vpop.f32.mrb[0].mxu0
    %2265 = vdwg.mxu0
    %v2266 = vpack.c.bf16 %v2159, %v2156
    %v2267 = vpack.c.bf16 %v2167, %v2164
    %v2268 = vpack.c.bf16 %v2175, %v2172
    %v2269 = vpack.c.bf16 %v2183, %v2180
    %v2270 = vpack.c.bf16 %v2191, %v2188
    %v2271 = vpack.c.bf16 %v2199, %v2196
    %v2272 = vpack.c.bf16 %v2207, %v2204
    %v2273 = vpack.c.bf16 %v2215, %v2212
    %v2274 = vpack.c.bf16 %v2223, %v2220
    %v2275 = vpack.c.bf16 %v2231, %v2228
    %v2276 = vpack.c.bf16 %v2239, %v2236
    %v2277 = vpack.c.bf16 %v2247, %v2244
    %v2278 = vpack.c.bf16 %v2255, %v2252
    %v2279 = vpack.c.bf16 %v2263, %v2260
    %v2280 = vld [vmem:[#allocation14] sm:$0xf]
    %v2281 = vld [vmem:[#allocation14 + $0x4] sm:$0xf]
    %v2282 = vld [vmem:[#allocation14 + $0x8] sm:$0xf]
    %v2283 = vld [vmem:[#allocation14 + $0xc] sm:$0xf]
    %v2284 = vld [vmem:[#allocation14 + $0x10] sm:$0xf]
    %v2285 = vld [vmem:[#allocation14 + $0x14] sm:$0xf]
    %v2286 = vld [vmem:[#allocation14 + $0x18] sm:$0xf]
    %v2287 = vld [vmem:[#allocation14 + $0x1c] sm:$0xf]
    %v2288 = vld [vmem:[#allocation14 + $0x20] sm:$0xf]
    %v2289 = vld [vmem:[#allocation14 + $0x24] sm:$0xf]
    %v2290 = vld [vmem:[#allocation14 + $0x28] sm:$0xf]
    %v2291 = vld [vmem:[#allocation14 + $0x2c] sm:$0xf]
    %v2292 = vld [vmem:[#allocation14 + $0x30] sm:$0xf]
    %v2293 = vld [vmem:[#allocation14 + $0x34] sm:$0xf]
    %v2294 = vld [vmem:[#allocation14 + $0x38] sm:$0xf]
    %v2295 = vld [vmem:[#allocation14 + $0x3c] sm:$0xf]
    %v2300 = vrot.slane %v2269, 4
    %v2301 = vrot.slane %v2270, 4
    %v2302 = vsel %vm1444, %v2300, %v2301
    %v2303 = vrot.slane %v2271, 4
    %v2304 = vsel %vm1444, %v2301, %v2303
    %v2305 = vrot.slane %v2272, 4
    %v2306 = vsel %vm1444, %v2303, %v2305
    %v2315 = vunpack.c.l.b16 %v2288
    %v2316 = vunpack.c.l.b16 %v2289
    %v2317 = vunpack.c.l.b16 %v2290
    %v2318 = vunpack.c.l.b16 %v2291
    %v2319 = vunpack.c.l.b16 %v2292
    %v2320 = vunpack.c.l.b16 %v2293
    %v2321 = vunpack.c.l.b16 %v2294
    %v2322 = vunpack.c.l.b16 %v2295
    %v2323 = vpack.c.b16 %v2316, %v2315
    %v2324 = vpack.c.b16 %v2318, %v2317
    %v2325 = vpack.c.b16 %v2320, %v2319
    %v2326 = vpack.c.b16 %v2322, %v2321
    %v2332 = vsel %vm1478, %v2302, 0
    %v2335 = vsel %vm1478, %v2304, 0
    %v2338 = vsel %vm1478, %v2306, 0
    %v2341 = vsel %vm1478, %v2305, 0
    %2343 = vmatprep.subr.bf16.mxu0 0
    %2344 = vmatpush1.bf16.msra.mxu0 %v2323
    %2345 = vmatprep.subr.bf16.mxu0 0
    %2346 = vmatpush1.bf16.msra.mxu0 %v2324
    %2347 = vmatprep.subr.bf16.mxu0 0
    %2348 = vmatpush1.bf16.msra.mxu0 %v2325
    %2349 = vmatprep.subr.bf16.mxu0 0
    %2350 = vmatpush1.bf16.msra.mxu0 %v2326
    %2351 = vmatprep.subr.bf16.mxu0 0
    %2352 = vmatpush1.bf16.msra.mxu0 0
    %2353 = vmatprep.subr.bf16.mxu0 0
    %2354 = vmatpush1.bf16.msra.mxu0 0
    %2355 = vmatprep.subr.bf16.mxu0 0
    %2356 = vmatpush1.bf16.msra.mxu0 0
    %2357 = vmatprep.subr.bf16.mxu0 0
    %2358 = vmatpush1.bf16.msra.mxu0 0
    %2359 = vmatprep.subr.bf16.mxu0 0
    %2360 = vmatpush1.bf16.msra.mxu0 0
    %2361 = vmatprep.subr.bf16.mxu0 0
    %2362 = vmatpush1.bf16.msra.mxu0 0
    %2363 = vmatprep.subr.bf16.mxu0 0
    %2364 = vmatpush1.bf16.msra.mxu0 0
    %2365 = vmatprep.subr.bf16.mxu0 0
    %2366 = vmatpush1.bf16.msra.mxu0 0
    %2367 = vmatprep.subr.bf16.mxu0 0
    %2368 = vmatpush1.bf16.msra.mxu0 0
    %2369 = vmatprep.subr.bf16.mxu0 0
    %2370 = vmatpush1.bf16.msra.mxu0 0
    %2371 = vmatprep.subr.bf16.mxu0 0
    %2372 = vmatpush1.bf16.msra.mxu0 0
    %2373 = vmatprep.subr.bf16.mxu0 0
    %2374 = vmatpush1.bf16.msra.mxu0 0
    %2375 = vmatprep.mubr.bf16.mxu0 0
    %2376 = vmatmul.mubr.bf16.gmra.mrb[0].mxu0 %v2332
    %v2377 = vpop.f32.mrb[0].mxu0
    %v2378 = vadd.f32 0.0, %v2377
    %v2379 = vpop.f32.mrb[0].mxu0
    %v2380 = vpop.f32.mrb[0].mxu0
    %v2381 = vadd.f32 0.0, %v2380
    %v2382 = vpop.f32.mrb[0].mxu0
    %2383 = vmatprep.mubr.bf16.mxu0 0
    %2384 = vmatmul.mubr.bf16.gmra.mrb[0].mxu0 %v2335
    %v2385 = vpop.f32.mrb[0].mxu0
    %v2386 = vadd.f32 0.0, %v2385
    %v2387 = vpop.f32.mrb[0].mxu0
    %v2388 = vpop.f32.mrb[0].mxu0
    %v2389 = vadd.f32 0.0, %v2388
    %v2390 = vpop.f32.mrb[0].mxu0
    %2391 = vmatprep.mubr.bf16.mxu0 0
    %2392 = vmatmul.mubr.bf16.gmra.mrb[0].mxu0 %v2338
    %v2393 = vpop.f32.mrb[0].mxu0
    %v2394 = vadd.f32 0.0, %v2393
    %v2395 = vpop.f32.mrb[0].mxu0
    %v2396 = vpop.f32.mrb[0].mxu0
    %v2397 = vadd.f32 0.0, %v2396
    %v2398 = vpop.f32.mrb[0].mxu0
    %2399 = vmatprep.mubr.bf16.mxu0 0
    %2400 = vmatmul.mubr.bf16.gmra.mrb[0].mxu0 %v2341
    %v2401 = vpop.f32.mrb[0].mxu0
    %v2402 = vadd.f32 0.0, %v2401
    %v2403 = vpop.f32.mrb[0].mxu0
    %v2404 = vpop.f32.mrb[0].mxu0
    %v2405 = vpop.f32.mrb[0].mxu0
    %2406 = vdwg.mxu0
    %v2415 = vunpack.c.l.b16 %v2280
    %v2416 = vunpack.c.l.b16 %v2281
    %v2417 = vunpack.c.l.b16 %v2282
    %v2418 = vunpack.c.l.b16 %v2283
    %v2419 = vunpack.c.l.b16 %v2284
    %v2420 = vunpack.c.l.b16 %v2285
    %v2421 = vunpack.c.l.b16 %v2286
    %v2422 = vunpack.c.l.b16 %v2287
    %v2423 = vpack.c.b16 %v2416, %v2415
    %v2424 = vpack.c.b16 %v2418, %v2417
    %v2425 = vpack.c.b16 %v2420, %v2419
    %v2426 = vpack.c.b16 %v2422, %v2421
    %v2432 = vsel %vm1478, %v2266, 0
    %v2435 = vsel %vm1478, %v2267, 0
    %v2438 = vsel %vm1478, %v2268, 0
    %v2441 = vsel %vm1478, %v2269, 0
    %2443 = vmatprep.subr.bf16.mxu0 0
    %2444 = vmatpush1.bf16.msra.mxu0 %v2423
    %2445 = vmatprep.subr.bf16.mxu0 0
    %2446 = vmatpush1.bf16.msra.mxu0 %v2424
    %2447 = vmatprep.subr.bf16.mxu0 0
    %2448 = vmatpush1.bf16.msra.mxu0 %v2425
    %2449 = vmatprep.subr.bf16.mxu0 0
    %2450 = vmatpush1.bf16.msra.mxu0 %v2426
    %2451 = vmatprep.subr.bf16.mxu0 0
    %2452 = vmatpush1.bf16.msra.mxu0 0
    %2453 = vmatprep.subr.bf16.mxu0 0
    %2454 = vmatpush1.bf16.msra.mxu0 0
    %2455 = vmatprep.subr.bf16.mxu0 0
    %2456 = vmatpush1.bf16.msra.mxu0 0
    %2457 = vmatprep.subr.bf16.mxu0 0
    %2458 = vmatpush1.bf16.msra.mxu0 0
    %2459 = vmatprep.subr.bf16.mxu0 0
    %2460 = vmatpush1.bf16.msra.mxu0 0
    %2461 = vmatprep.subr.bf16.mxu0 0
    %2462 = vmatpush1.bf16.msra.mxu0 0
    %2463 = vmatprep.subr.bf16.mxu0 0
    %2464 = vmatpush1.bf16.msra.mxu0 0
    %2465 = vmatprep.subr.bf16.mxu0 0
    %2466 = vmatpush1.bf16.msra.mxu0 0
    %2467 = vmatprep.subr.bf16.mxu0 0
    %2468 = vmatpush1.bf16.msra.mxu0 0
    %2469 = vmatprep.subr.bf16.mxu0 0
    %2470 = vmatpush1.bf16.msra.mxu0 0
    %2471 = vmatprep.subr.bf16.mxu0 0
    %2472 = vmatpush1.bf16.msra.mxu0 0
    %2473 = vmatprep.subr.bf16.mxu0 0
    %2474 = vmatpush1.bf16.msra.mxu0 0
    %2475 = vmatprep.mubr.bf16.mxu0 0
    %2476 = vmatmul.mubr.bf16.gmra.mrb[0].mxu0 %v2432
    %v2477 = vpop.f32.mrb[0].mxu0
    %v2478 = vadd.f32 %v2378, %v2477
    %v2479 = vpop.f32.mrb[0].mxu0
    %v2480 = vpop.f32.mrb[0].mxu0
    %v2481 = vadd.f32 %v2381, %v2480
    %v2482 = vpop.f32.mrb[0].mxu0
    %2483 = vmatprep.mubr.bf16.mxu0 0
    %2484 = vmatmul.mubr.bf16.gmra.mrb[0].mxu0 %v2435
    %v2485 = vpop.f32.mrb[0].mxu0
    %v2486 = vadd.f32 %v2386, %v2485
    %v2487 = vpop.f32.mrb[0].mxu0
    %v2488 = vpop.f32.mrb[0].mxu0
    %v2489 = vadd.f32 %v2389, %v2488
    %v2490 = vpop.f32.mrb[0].mxu0
    %2491 = vmatprep.mubr.bf16.mxu0 0
    %2492 = vmatmul.mubr.bf16.gmra.mrb[0].mxu0 %v2438
    %v2493 = vpop.f32.mrb[0].mxu0
    %v2494 = vadd.f32 %v2394, %v2493
    %v2495 = vpop.f32.mrb[0].mxu0
    %v2496 = vpop.f32.mrb[0].mxu0
    %v2497 = vadd.f32 %v2397, %v2496
    %v2498 = vpop.f32.mrb[0].mxu0
    %2499 = vmatprep.mubr.bf16.mxu0 0
    %2500 = vmatmul.mubr.bf16.gmra.mrb[0].mxu0 %v2441
    %v2501 = vpop.f32.mrb[0].mxu0
    %v2502 = vadd.f32 %v2402, %v2501
    %v2503 = vpop.f32.mrb[0].mxu0
    %v2504 = vpop.f32.mrb[0].mxu0
    %v2505 = vpop.f32.mrb[0].mxu0
    %2506 = vdwg.mxu0
    %v2507 = vld [vmem:[#allocation14 + $0x40] sm:$0xf]
    %v2508 = vld [vmem:[#allocation14 + $0x44] sm:$0xf]
    %v2509 = vld [vmem:[#allocation14 + $0x48] sm:$0xf]
    %v2510 = vld [vmem:[#allocation14 + $0x4c] sm:$0xf]
    %v2511 = vld [vmem:[#allocation14 + $0x50] sm:$0xf]
    %v2512 = vld [vmem:[#allocation14 + $0x54] sm:$0xf]
    %v2513 = vld [vmem:[#allocation14 + $0x58] sm:$0xf]
    %v2514 = vld [vmem:[#allocation14 + $0x5c] sm:$0xf]
    %v2523 = vunpack.c.l.b16 %v2507
    %v2524 = vunpack.c.l.b16 %v2508
    %v2525 = vunpack.c.l.b16 %v2509
    %v2526 = vunpack.c.l.b16 %v2510
    %v2527 = vunpack.c.l.b16 %v2511
    %v2528 = vunpack.c.l.b16 %v2512
    %v2529 = vunpack.c.l.b16 %v2513
    %v2530 = vunpack.c.l.b16 %v2514
    %v2531 = vpack.c.b16 %v2524, %v2523
    %v2532 = vpack.c.b16 %v2526, %v2525
    %v2533 = vpack.c.b16 %v2528, %v2527
    %v2534 = vpack.c.b16 %v2530, %v2529
    %v2540 = vsel %vm1478, %v2273, 0
    %v2543 = vsel %vm1478, %v2274, 0
    %v2546 = vsel %vm1478, %v2275, 0
    %v2549 = vsel %vm1478, %v2276, 0
    %2551 = vmatprep.subr.bf16.mxu0 0
    %2552 = vmatpush1.bf16.msra.mxu0 %v2531
    %2553 = vmatprep.subr.bf16.mxu0 0
    %2554 = vmatpush1.bf16.msra.mxu0 %v2532
    %2555 = vmatprep.subr.bf16.mxu0 0
    %2556 = vmatpush1.bf16.msra.mxu0 %v2533
    %2557 = vmatprep.subr.bf16.mxu0 0
    %2558 = vmatpush1.bf16.msra.mxu0 %v2534
    %2559 = vmatprep.subr.bf16.mxu0 0
    %2560 = vmatpush1.bf16.msra.mxu0 0
    %2561 = vmatprep.subr.bf16.mxu0 0
    %2562 = vmatpush1.bf16.msra.mxu0 0
    %2563 = vmatprep.subr.bf16.mxu0 0
    %2564 = vmatpush1.bf16.msra.mxu0 0
    %2565 = vmatprep.subr.bf16.mxu0 0
    %2566 = vmatpush1.bf16.msra.mxu0 0
    %2567 = vmatprep.subr.bf16.mxu0 0
    %2568 = vmatpush1.bf16.msra.mxu0 0
    %2569 = vmatprep.subr.bf16.mxu0 0
    %2570 = vmatpush1.bf16.msra.mxu0 0
    %2571 = vmatprep.subr.bf16.mxu0 0
    %2572 = vmatpush1.bf16.msra.mxu0 0
    %2573 = vmatprep.subr.bf16.mxu0 0
    %2574 = vmatpush1.bf16.msra.mxu0 0
    %2575 = vmatprep.subr.bf16.mxu0 0
    %2576 = vmatpush1.bf16.msra.mxu0 0
    %2577 = vmatprep.subr.bf16.mxu0 0
    %2578 = vmatpush1.bf16.msra.mxu0 0
    %2579 = vmatprep.subr.bf16.mxu0 0
    %2580 = vmatpush1.bf16.msra.mxu0 0
    %2581 = vmatprep.subr.bf16.mxu0 0
    %2582 = vmatpush1.bf16.msra.mxu0 0
    %2583 = vmatprep.mubr.bf16.mxu0 0
    %2584 = vmatmul.mubr.bf16.gmra.mrb[0].mxu0 %v2540
    %v2585 = vpop.f32.mrb[0].mxu0
    %v2586 = vadd.f32 0.0, %v2585
    %v2587 = vpop.f32.mrb[0].mxu0
    %v2588 = vpop.f32.mrb[0].mxu0
    %v2589 = vadd.f32 0.0, %v2588
    %v2590 = vpop.f32.mrb[0].mxu0
    %2591 = vmatprep.mubr.bf16.mxu0 0
    %2592 = vmatmul.mubr.bf16.gmra.mrb[0].mxu0 %v2543
    %v2593 = vpop.f32.mrb[0].mxu0
    %v2594 = vadd.f32 0.0, %v2593
    %v2595 = vpop.f32.mrb[0].mxu0
    %v2596 = vpop.f32.mrb[0].mxu0
    %v2597 = vadd.f32 0.0, %v2596
    %v2598 = vpop.f32.mrb[0].mxu0
    %2599 = vmatprep.mubr.bf16.mxu0 0
    %2600 = vmatmul.mubr.bf16.gmra.mrb[0].mxu0 %v2546
    %v2601 = vpop.f32.mrb[0].mxu0
    %v2602 = vadd.f32 0.0, %v2601
    %v2603 = vpop.f32.mrb[0].mxu0
    %v2604 = vpop.f32.mrb[0].mxu0
    %v2605 = vadd.f32 0.0, %v2604
    %v2606 = vpop.f32.mrb[0].mxu0
    %2607 = vmatprep.mubr.bf16.mxu0 0
    %2608 = vmatmul.mubr.bf16.gmra.mrb[0].mxu0 %v2549
    %v2609 = vpop.f32.mrb[0].mxu0
    %v2610 = vadd.f32 0.0, %v2609
    %v2611 = vpop.f32.mrb[0].mxu0
    %v2612 = vpop.f32.mrb[0].mxu0
    %v2613 = vpop.f32.mrb[0].mxu0
    %2614 = vdwg.mxu0
    %v2615 = vadd.f32 %v2478, %v2586
    %v2616 = vadd.f32 %v2481, %v2589
    %v2617 = vadd.f32 %v2486, %v2594
    %v2618 = vadd.f32 %v2489, %v2597
    %v2619 = vadd.f32 %v2494, %v2602
    %v2620 = vadd.f32 %v2497, %v2605
    %v2621 = vadd.f32 %v2502, %v2610
    %v2622 = vld [vmem:[#allocation14 + $0x60] sm:$0xf]
    %v2623 = vld [vmem:[#allocation14 + $0x64] sm:$0xf]
    %v2624 = vld [vmem:[#allocation14 + $0x68] sm:$0xf]
    %v2625 = vld [vmem:[#allocation14 + $0x6c] sm:$0xf]
    %v2626 = vld [vmem:[#allocation14 + $0x70] sm:$0xf]
    %v2627 = vld [vmem:[#allocation14 + $0x74] sm:$0xf]
    %v2628 = vld [vmem:[#allocation14 + $0x78] sm:$0xf]
    %v2629 = vld [vmem:[#allocation14 + $0x7c] sm:$0xf]
    %v2634 = vrot.slane %v2276, 4
    %v2635 = vrot.slane %v2277, 4
    %v2636 = vsel %vm1444, %v2634, %v2635
    %v2637 = vrot.slane %v2278, 4
    %v2638 = vsel %vm1444, %v2635, %v2637
    %v2639 = vrot.slane %v2279, 4
    %v2640 = vsel %vm1444, %v2637, %v2639
    %v2649 = vunpack.c.l.b16 %v2622
    %v2650 = vunpack.c.l.b16 %v2623
    %v2651 = vunpack.c.l.b16 %v2624
    %v2652 = vunpack.c.l.b16 %v2625
    %v2653 = vunpack.c.l.b16 %v2626
    %v2654 = vunpack.c.l.b16 %v2627
    %v2655 = vunpack.c.l.b16 %v2628
    %v2656 = vunpack.c.l.b16 %v2629
    %v2657 = vpack.c.b16 %v2650, %v2649
    %v2658 = vpack.c.b16 %v2652, %v2651
    %v2659 = vpack.c.b16 %v2654, %v2653
    %v2660 = vpack.c.b16 %v2656, %v2655
    %v2666 = vsel %vm1478, %v2636, 0
    %v2669 = vsel %vm1478, %v2638, 0
    %v2672 = vsel %vm1478, %v2640, 0
    %v2675 = vsel %vm1478, %v2639, 0
    %2677 = vmatprep.subr.bf16.mxu0 0
    %2678 = vmatpush1.bf16.msra.mxu0 %v2657
    %2679 = vmatprep.subr.bf16.mxu0 0
    %2680 = vmatpush1.bf16.msra.mxu0 %v2658
    %2681 = vmatprep.subr.bf16.mxu0 0
    %2682 = vmatpush1.bf16.msra.mxu0 %v2659
    %2683 = vmatprep.subr.bf16.mxu0 0
    %2684 = vmatpush1.bf16.msra.mxu0 %v2660
    %2685 = vmatprep.subr.bf16.mxu0 0
    %2686 = vmatpush1.bf16.msra.mxu0 0
    %2687 = vmatprep.subr.bf16.mxu0 0
    %2688 = vmatpush1.bf16.msra.mxu0 0
    %2689 = vmatprep.subr.bf16.mxu0 0
    %2690 = vmatpush1.bf16.msra.mxu0 0
    %2691 = vmatprep.subr.bf16.mxu0 0
    %2692 = vmatpush1.bf16.msra.mxu0 0
    %2693 = vmatprep.subr.bf16.mxu0 0
    %2694 = vmatpush1.bf16.msra.mxu0 0
    %2695 = vmatprep.subr.bf16.mxu0 0
    %2696 = vmatpush1.bf16.msra.mxu0 0
    %2697 = vmatprep.subr.bf16.mxu0 0
    %2698 = vmatpush1.bf16.msra.mxu0 0
    %2699 = vmatprep.subr.bf16.mxu0 0
    %2700 = vmatpush1.bf16.msra.mxu0 0
    %2701 = vmatprep.subr.bf16.mxu0 0
    %2702 = vmatpush1.bf16.msra.mxu0 0
    %2703 = vmatprep.subr.bf16.mxu0 0
    %2704 = vmatpush1.bf16.msra.mxu0 0
    %2705 = vmatprep.subr.bf16.mxu0 0
    %2706 = vmatpush1.bf16.msra.mxu0 0
    %2707 = vmatprep.subr.bf16.mxu0 0
    %2708 = vmatpush1.bf16.msra.mxu0 0
    %2709 = vmatprep.mubr.bf16.mxu0 0
    %2710 = vmatmul.mubr.bf16.gmra.mrb[0].mxu0 %v2666
    %v2711 = vpop.f32.mrb[0].mxu0
    %v2712 = vadd.f32 0.0, %v2711
    %v2713 = vpop.f32.mrb[0].mxu0
    %v2714 = vpop.f32.mrb[0].mxu0
    %v2715 = vadd.f32 0.0, %v2714
    %v2716 = vpop.f32.mrb[0].mxu0
    %2717 = vmatprep.mubr.bf16.mxu0 0
    %2718 = vmatmul.mubr.bf16.gmra.mrb[0].mxu0 %v2669
    %v2719 = vpop.f32.mrb[0].mxu0
    %v2720 = vadd.f32 0.0, %v2719
    %v2721 = vpop.f32.mrb[0].mxu0
    %v2722 = vpop.f32.mrb[0].mxu0
    %v2723 = vadd.f32 0.0, %v2722
    %v2724 = vpop.f32.mrb[0].mxu0
    %2725 = vmatprep.mubr.bf16.mxu0 0
    %2726 = vmatmul.mubr.bf16.gmra.mrb[0].mxu0 %v2672
    %v2727 = vpop.f32.mrb[0].mxu0
    %v2728 = vadd.f32 0.0, %v2727
    %v2729 = vpop.f32.mrb[0].mxu0
    %v2730 = vpop.f32.mrb[0].mxu0
    %v2731 = vadd.f32 0.0, %v2730
    %v2732 = vpop.f32.mrb[0].mxu0
    %2733 = vmatprep.mubr.bf16.mxu0 0
    %2734 = vmatmul.mubr.bf16.gmra.mrb[0].mxu0 %v2675
    %v2735 = vpop.f32.mrb[0].mxu0
    %v2736 = vadd.f32 0.0, %v2735
    %v2737 = vpop.f32.mrb[0].mxu0
    %v2738 = vpop.f32.mrb[0].mxu0
    %v2739 = vpop.f32.mrb[0].mxu0
    %2740 = vdwg.mxu0
    %v2741 = vadd.f32 %v2615, %v2712
    %v2742 = vadd.f32 %v2616, %v2715
    %v2743 = vadd.f32 %v2617, %v2720
    %v2744 = vadd.f32 %v2618, %v2723
    %v2745 = vadd.f32 %v2619, %v2728
    %v2746 = vadd.f32 %v2620, %v2731
    %v2747 = vadd.f32 %v2621, %v2736
    %v2748 = vld [vmem:[#allocation16] sm:$0x1]
    %v2750 = vlaneseq
    %v2751 = vshrl.u32 %v2750, 7
    %v2752 = vsub.s32 0, %v2751
    %v2753 = vrot.slane %v2748, %v2752
    %v2755 = vadd.f32 %v2741, %v2753
    %v2756 = vadd.f32 %v2742, %v2753
    %v2757 = vadd.f32 %v2743, %v2753
    %v2758 = vadd.f32 %v2744, %v2753
    %v2759 = vadd.f32 %v2745, %v2753
    %v2760 = vadd.f32 %v2746, %v2753
    %v2761 = vadd.f32 %v2747, %v2753
    %v2762 = vmax.f32 %v2755, 0.0
    %v2763 = vmax.f32 %v2756, 0.0
    %v2764 = vmax.f32 %v2757, 0.0
    %v2765 = vmax.f32 %v2758, 0.0
    %v2766 = vmax.f32 %v2759, 0.0
    %v2767 = vmax.f32 %v2760, 0.0
    %v2768 = vmax.f32 %v2761, 0.0
    %v2769 = vpack.c.bf16 %v2763, %v2762
    %v2770 = vpack.c.bf16 %v2765, %v2764
    %v2771 = vpack.c.bf16 %v2767, %v2766
    %v2772 = vpack.c.bf16 %v2768, %v2768
    %v2773 = vld [vmem:[%s9] sm:$0xf]
    %v2774 = vld [vmem:[%s9 + $0x4] sm:$0xf]
    %v2775 = vld [vmem:[%s9 + $0x8] sm:$0xf]
    %v2776 = vld [vmem:[%s9 + $0xc] sm:$0xf]
    %v2777 = vld [vmem:[%s9 + $0x10] sm:$0xf]
    %v2778 = vld [vmem:[%s9 + $0x14] sm:$0xf]
    %v2779 = vld [vmem:[%s9 + $0x18] sm:$0xf]
    %v2780 = vld [vmem:[%s9 + $0x1c] sm:$0xf]
    %v2781 = vld [vmem:[%s9 + $0x20] sm:$0xf]
    %v2782 = vld [vmem:[%s9 + $0x24] sm:$0xf]
    %v2783 = vld [vmem:[%s9 + $0x28] sm:$0xf]
    %v2784 = vld [vmem:[%s9 + $0x2c] sm:$0xf]
    %v2785 = vld [vmem:[%s9 + $0x30] sm:$0xf]
    %v2786 = vld [vmem:[%s9 + $0x34] sm:$0xf]
    %v2787 = vld [vmem:[%s9 + $0x38] sm:$0xf]
    %v2788 = vld [vmem:[%s9 + $0x3c] sm:$0xf]
    %v2805 = vunpack.c.l.b16 %v2773
    %v2806 = vunpack.c.l.b16 %v2774
    %v2807 = vunpack.c.l.b16 %v2775
    %v2808 = vunpack.c.l.b16 %v2776
    %v2809 = vunpack.c.l.b16 %v2777
    %v2810 = vunpack.c.l.b16 %v2778
    %v2811 = vunpack.c.l.b16 %v2779
    %v2812 = vunpack.c.l.b16 %v2780
    %v2813 = vunpack.c.l.b16 %v2781
    %v2814 = vunpack.c.l.b16 %v2782
    %v2815 = vunpack.c.l.b16 %v2783
    %v2816 = vunpack.c.l.b16 %v2784
    %v2817 = vunpack.c.l.b16 %v2785
    %v2818 = vunpack.c.l.b16 %v2786
    %v2819 = vunpack.c.l.b16 %v2787
    %v2820 = vunpack.c.l.b16 %v2788
    %v2821 = vpack.c.b16 %v2806, %v2805
    %v2822 = vpack.c.b16 %v2808, %v2807
    %v2823 = vpack.c.b16 %v2810, %v2809
    %v2824 = vpack.c.b16 %v2812, %v2811
    %v2825 = vpack.c.b16 %v2814, %v2813
    %v2826 = vpack.c.b16 %v2816, %v2815
    %v2827 = vpack.c.b16 %v2818, %v2817
    %v2828 = vpack.c.b16 %v2820, %v2819
    %vm2829 = vcmask 457728
    %v2831 = vsel %vm2829, %v2821, 0
    %v2834 = vsel %vm2829, %v2822, 0
    %v2837 = vsel %vm2829, %v2823, 0
    %v2840 = vsel %vm2829, %v2824, 0
    %v2843 = vsel %vm2829, %v2825, 0
    %v2846 = vsel %vm2829, %v2826, 0
    %v2849 = vsel %vm2829, %v2827, 0
    %v2852 = vsel %vm2829, %v2828, 0
    %v2855 = vsel %vm1224, %v2772, 0
    %2857 = vmatprep.subr.bf16.mxu0 0
    %2858 = vmatpush1.bf16.msra.mxu0 %v2769
    %2859 = vmatprep.subr.bf16.mxu0 0
    %2860 = vmatpush1.bf16.msra.mxu0 %v2770
    %2861 = vmatprep.subr.bf16.mxu0 0
    %2862 = vmatpush1.bf16.msra.mxu0 %v2771
    %2863 = vmatprep.subr.bf16.mxu0 0
    %2864 = vmatpush1.bf16.msra.mxu0 %v2855
    %2865 = vmatprep.subr.bf16.mxu0 0
    %2866 = vmatpush1.bf16.msra.mxu0 0
    %2867 = vmatprep.subr.bf16.mxu0 0
    %2868 = vmatpush1.bf16.msra.mxu0 0
    %2869 = vmatprep.subr.bf16.mxu0 0
    %2870 = vmatpush1.bf16.msra.mxu0 0
    %2871 = vmatprep.subr.bf16.mxu0 0
    %2872 = vmatpush1.bf16.msra.mxu0 0
    %2873 = vmatprep.subr.bf16.mxu0 0
    %2874 = vmatpush1.bf16.msra.mxu0 0
    %2875 = vmatprep.subr.bf16.mxu0 0
    %2876 = vmatpush1.bf16.msra.mxu0 0
    %2877 = vmatprep.subr.bf16.mxu0 0
    %2878 = vmatpush1.bf16.msra.mxu0 0
    %2879 = vmatprep.subr.bf16.mxu0 0
    %2880 = vmatpush1.bf16.msra.mxu0 0
    %2881 = vmatprep.subr.bf16.mxu0 0
    %2882 = vmatpush1.bf16.msra.mxu0 0
    %2883 = vmatprep.subr.bf16.mxu0 0
    %2884 = vmatpush1.bf16.msra.mxu0 0
    %2885 = vmatprep.subr.bf16.mxu0 0
    %2886 = vmatpush1.bf16.msra.mxu0 0
    %2887 = vmatprep.subr.bf16.mxu0 0
    %2888 = vmatpush1.bf16.msra.mxu0 0
    %2889 = vmatprep.mubr.bf16.mxu0 0
    %2890 = vmatmul.mubr.bf16.gmra.mrb[0].mxu0 %v2831
    %v2891 = vpop.f32.mrb[0].mxu0
    %v2892 = vadd.f32 0.0, %v2891
    %v2893 = vpop.f32.mrb[0].mxu0
    %v2894 = vpop.f32.mrb[0].mxu0
    %v2895 = vadd.f32 0.0, %v2894
    %v2896 = vpop.f32.mrb[0].mxu0
    %2897 = vmatprep.mubr.bf16.mxu0 0
    %2898 = vmatmul.mubr.bf16.gmra.mrb[0].mxu0 %v2834
    %v2899 = vpop.f32.mrb[0].mxu0
    %v2900 = vadd.f32 0.0, %v2899
    %v2901 = vpop.f32.mrb[0].mxu0
    %v2902 = vpop.f32.mrb[0].mxu0
    %v2903 = vadd.f32 0.0, %v2902
    %v2904 = vpop.f32.mrb[0].mxu0
    %2905 = vmatprep.mubr.bf16.mxu0 0
    %2906 = vmatmul.mubr.bf16.gmra.mrb[0].mxu0 %v2837
    %v2907 = vpop.f32.mrb[0].mxu0
    %v2908 = vadd.f32 0.0, %v2907
    %v2909 = vpop.f32.mrb[0].mxu0
    %v2910 = vpop.f32.mrb[0].mxu0
    %v2911 = vadd.f32 0.0, %v2910
    %v2912 = vpop.f32.mrb[0].mxu0
    %2913 = vmatprep.mubr.bf16.mxu0 0
    %2914 = vmatmul.mubr.bf16.gmra.mrb[0].mxu0 %v2840
    %v2915 = vpop.f32.mrb[0].mxu0
    %v2916 = vadd.f32 0.0, %v2915
    %v2917 = vpop.f32.mrb[0].mxu0
    %v2918 = vpop.f32.mrb[0].mxu0
    %v2919 = vadd.f32 0.0, %v2918
    %v2920 = vpop.f32.mrb[0].mxu0
    %2921 = vmatprep.mubr.bf16.mxu0 0
    %2922 = vmatmul.mubr.bf16.gmra.mrb[0].mxu0 %v2843
    %v2923 = vpop.f32.mrb[0].mxu0
    %v2924 = vadd.f32 0.0, %v2923
    %v2925 = vpop.f32.mrb[0].mxu0
    %v2926 = vpop.f32.mrb[0].mxu0
    %v2927 = vadd.f32 0.0, %v2926
    %v2928 = vpop.f32.mrb[0].mxu0
    %2929 = vmatprep.mubr.bf16.mxu0 0
    %2930 = vmatmul.mubr.bf16.gmra.mrb[0].mxu0 %v2846
    %v2931 = vpop.f32.mrb[0].mxu0
    %v2932 = vadd.f32 0.0, %v2931
    %v2933 = vpop.f32.mrb[0].mxu0
    %v2934 = vpop.f32.mrb[0].mxu0
    %v2935 = vadd.f32 0.0, %v2934
    %v2936 = vpop.f32.mrb[0].mxu0
    %2937 = vmatprep.mubr.bf16.mxu0 0
    %2938 = vmatmul.mubr.bf16.gmra.mrb[0].mxu0 %v2849
    %v2939 = vpop.f32.mrb[0].mxu0
    %v2940 = vadd.f32 0.0, %v2939
    %v2941 = vpop.f32.mrb[0].mxu0
    %v2942 = vpop.f32.mrb[0].mxu0
    %v2943 = vadd.f32 0.0, %v2942
    %v2944 = vpop.f32.mrb[0].mxu0
    %2945 = vmatprep.mubr.bf16.mxu0 0
    %2946 = vmatmul.mubr.bf16.gmra.mrb[0].mxu0 %v2852
    %v2947 = vpop.f32.mrb[0].mxu0
    %v2948 = vadd.f32 0.0, %v2947
    %v2949 = vpop.f32.mrb[0].mxu0
    %v2950 = vpop.f32.mrb[0].mxu0
    %v2951 = vadd.f32 0.0, %v2950
    %v2952 = vpop.f32.mrb[0].mxu0
    %2953 = vdwg.mxu0
    %v2954 = vpack.c.bf16 %v2895, %v2892
    %v2955 = vpack.c.bf16 %v2903, %v2900
    %v2956 = vpack.c.bf16 %v2911, %v2908
    %v2957 = vpack.c.bf16 %v2919, %v2916
    %v2958 = vpack.c.bf16 %v2927, %v2924
    %v2959 = vpack.c.bf16 %v2935, %v2932
    %v2960 = vpack.c.bf16 %v2943, %v2940
    %v2961 = vpack.c.bf16 %v2951, %v2948
    %v2962 = vld [vmem:[%s10] sm:$0xf]
    %v2963 = vld [vmem:[%s10 + $0x4] sm:$0xf]
    %v2964 = vld [vmem:[%s10 + $0x8] sm:$0xf]
    %v2965 = vld [vmem:[%s10 + $0xc] sm:$0xf]
    %v2966 = vld [vmem:[%s10 + $0x10] sm:$0xf]
    %v2967 = vld [vmem:[%s10 + $0x14] sm:$0xf]
    %v2968 = vld [vmem:[%s10 + $0x18] sm:$0xf]
    %v2969 = vld [vmem:[%s10 + $0x1c] sm:$0xf]
    %v2970 = vld [vmem:[%s10 + $0x20] sm:$0xf]
    %v2971 = vld [vmem:[%s10 + $0x24] sm:$0xf]
    %v2972 = vld [vmem:[%s10 + $0x28] sm:$0xf]
    %v2973 = vld [vmem:[%s10 + $0x2c] sm:$0xf]
    %v2974 = vld [vmem:[%s10 + $0x30] sm:$0xf]
    %v2975 = vld [vmem:[%s10 + $0x34] sm:$0xf]
    %v2976 = vld [vmem:[%s10 + $0x38] sm:$0xf]
    %v2977 = vld [vmem:[%s10 + $0x3c] sm:$0xf]
    %v2978 = vld [vmem:[%s10 + $0x40] sm:$0xf]
    %v2979 = vld [vmem:[%s10 + $0x44] sm:$0xf]
    %v2980 = vld [vmem:[%s10 + $0x48] sm:$0xf]
    %v2981 = vld [vmem:[%s10 + $0x4c] sm:$0xf]
    %v2982 = vld [vmem:[%s10 + $0x50] sm:$0xf]
    %v2983 = vld [vmem:[%s10 + $0x54] sm:$0xf]
    %v2984 = vld [vmem:[%s10 + $0x58] sm:$0xf]
    %v2985 = vld [vmem:[%s10 + $0x5c] sm:$0xf]
    %v2986 = vld [vmem:[%s10 + $0x60] sm:$0xf]
    %v2987 = vld [vmem:[%s10 + $0x64] sm:$0xf]
    %v2988 = vld [vmem:[%s10 + $0x68] sm:$0xf]
    %v2989 = vld [vmem:[%s10 + $0x6c] sm:$0xf]
    %v2990 = vld [vmem:[%s10 + $0x70] sm:$0xf]
    %v2991 = vld [vmem:[%s10 + $0x74] sm:$0xf]
    %v2992 = vld [vmem:[%s10 + $0x78] sm:$0xf]
    %v2993 = vld [vmem:[%s10 + $0x7c] sm:$0xf]
    %v3010 = vunpack.c.l.b16 %v2978
    %v3011 = vunpack.c.l.b16 %v2979
    %v3012 = vunpack.c.l.b16 %v2980
    %v3013 = vunpack.c.l.b16 %v2981
    %v3014 = vunpack.c.l.b16 %v2982
    %v3015 = vunpack.c.l.b16 %v2983
    %v3016 = vunpack.c.l.b16 %v2984
    %v3017 = vunpack.c.l.b16 %v2985
    %v3018 = vunpack.c.l.b16 %v2986
    %v3019 = vunpack.c.l.b16 %v2987
    %v3020 = vunpack.c.l.b16 %v2988
    %v3021 = vunpack.c.l.b16 %v2989
    %v3022 = vunpack.c.l.b16 %v2990
    %v3023 = vunpack.c.l.b16 %v2991
    %v3024 = vunpack.c.l.b16 %v2992
    %v3025 = vunpack.c.l.b16 %v2993
    %v3026 = vpack.c.b16 %v3011, %v3010
    %v3027 = vpack.c.b16 %v3013, %v3012
    %v3028 = vpack.c.b16 %v3015, %v3014
    %v3029 = vpack.c.b16 %v3017, %v3016
    %v3030 = vpack.c.b16 %v3019, %v3018
    %v3031 = vpack.c.b16 %v3021, %v3020
    %v3032 = vpack.c.b16 %v3023, %v3022
    %v3033 = vpack.c.b16 %v3025, %v3024
    %3042 = vmatprep.subr.bf16.mxu0 0
    %3043 = vmatpush1.bf16.msra.mxu0 %v3026
    %3044 = vmatprep.subr.bf16.mxu0 0
    %3045 = vmatpush1.bf16.msra.mxu0 %v3027
    %3046 = vmatprep.subr.bf16.mxu0 0
    %3047 = vmatpush1.bf16.msra.mxu0 %v3028
    %3048 = vmatprep.subr.bf16.mxu0 0
    %3049 = vmatpush1.bf16.msra.mxu0 %v3029
    %3050 = vmatprep.subr.bf16.mxu0 0
    %3051 = vmatpush1.bf16.msra.mxu0 %v3030
    %3052 = vmatprep.subr.bf16.mxu0 0
    %3053 = vmatpush1.bf16.msra.mxu0 %v3031
    %3054 = vmatprep.subr.bf16.mxu0 0
    %3055 = vmatpush1.bf16.msra.mxu0 %v3032
    %3056 = vmatprep.subr.bf16.mxu0 0
    %3057 = vmatpush1.bf16.msra.mxu0 %v3033
    %3058 = vmatprep.subr.bf16.mxu0 0
    %3059 = vmatpush1.bf16.msra.mxu0 0
    %3060 = vmatprep.subr.bf16.mxu0 0
    %3061 = vmatpush1.bf16.msra.mxu0 0
    %3062 = vmatprep.subr.bf16.mxu0 0
    %3063 = vmatpush1.bf16.msra.mxu0 0
    %3064 = vmatprep.subr.bf16.mxu0 0
    %3065 = vmatpush1.bf16.msra.mxu0 0
    %3066 = vmatprep.subr.bf16.mxu0 0
    %3067 = vmatpush1.bf16.msra.mxu0 0
    %3068 = vmatprep.subr.bf16.mxu0 0
    %3069 = vmatpush1.bf16.msra.mxu0 0
    %3070 = vmatprep.subr.bf16.mxu0 0
    %3071 = vmatpush1.bf16.msra.mxu0 0
    %3072 = vmatprep.subr.bf16.mxu0 0
    %3073 = vmatpush1.bf16.msra.mxu0 0
    %3074 = vmatprep.mubr.bf16.mxu0 0
    %3075 = vmatmul.mubr.bf16.gmra.mrb[0].mxu0 %v2956
    %v3076 = vpop.f32.mrb[0].mxu0
    %v3077 = vadd.f32 0.0, %v3076
    %v3078 = vpop.f32.mrb[0].mxu0
    %v3079 = vpop.f32.mrb[0].mxu0
    %v3080 = vadd.f32 0.0, %v3079
    %v3081 = vpop.f32.mrb[0].mxu0
    %3082 = vmatprep.mubr.bf16.mxu0 0
    %3083 = vmatmul.mubr.bf16.gmra.mrb[0].mxu0 %v2957
    %v3084 = vpop.f32.mrb[0].mxu0
    %v3085 = vadd.f32 0.0, %v3084
    %v3086 = vpop.f32.mrb[0].mxu0
    %v3087 = vpop.f32.mrb[0].mxu0
    %v3088 = vadd.f32 0.0, %v3087
    %v3089 = vpop.f32.mrb[0].mxu0
    %3090 = vdwg.mxu0
    %v3107 = vunpack.c.l.b16 %v2962
    %v3108 = vunpack.c.l.b16 %v2963
    %v3109 = vunpack.c.l.b16 %v2964
    %v3110 = vunpack.c.l.b16 %v2965
    %v3111 = vunpack.c.l.b16 %v2966
    %v3112 = vunpack.c.l.b16 %v2967
    %v3113 = vunpack.c.l.b16 %v2968
    %v3114 = vunpack.c.l.b16 %v2969
    %v3115 = vunpack.c.l.b16 %v2970
    %v3116 = vunpack.c.l.b16 %v2971
    %v3117 = vunpack.c.l.b16 %v2972
    %v3118 = vunpack.c.l.b16 %v2973
    %v3119 = vunpack.c.l.b16 %v2974
    %v3120 = vunpack.c.l.b16 %v2975
    %v3121 = vunpack.c.l.b16 %v2976
    %v3122 = vunpack.c.l.b16 %v2977
    %v3123 = vpack.c.b16 %v3108, %v3107
    %v3124 = vpack.c.b16 %v3110, %v3109
    %v3125 = vpack.c.b16 %v3112, %v3111
    %v3126 = vpack.c.b16 %v3114, %v3113
    %v3127 = vpack.c.b16 %v3116, %v3115
    %v3128 = vpack.c.b16 %v3118, %v3117
    %v3129 = vpack.c.b16 %v3120, %v3119
    %v3130 = vpack.c.b16 %v3122, %v3121
    %3139 = vmatprep.subr.bf16.mxu0 0
    %3140 = vmatpush1.bf16.msra.mxu0 %v3123
    %3141 = vmatprep.subr.bf16.mxu0 0
    %3142 = vmatpush1.bf16.msra.mxu0 %v3124
    %3143 = vmatprep.subr.bf16.mxu0 0
    %3144 = vmatpush1.bf16.msra.mxu0 %v3125
    %3145 = vmatprep.subr.bf16.mxu0 0
    %3146 = vmatpush1.bf16.msra.mxu0 %v3126
    %3147 = vmatprep.subr.bf16.mxu0 0
    %3148 = vmatpush1.bf16.msra.mxu0 %v3127
    %3149 = vmatprep.subr.bf16.mxu0 0
    %3150 = vmatpush1.bf16.msra.mxu0 %v3128
    %3151 = vmatprep.subr.bf16.mxu0 0
    %3152 = vmatpush1.bf16.msra.mxu0 %v3129
    %3153 = vmatprep.subr.bf16.mxu0 0
    %3154 = vmatpush1.bf16.msra.mxu0 %v3130
    %3155 = vmatprep.subr.bf16.mxu0 0
    %3156 = vmatpush1.bf16.msra.mxu0 0
    %3157 = vmatprep.subr.bf16.mxu0 0
    %3158 = vmatpush1.bf16.msra.mxu0 0
    %3159 = vmatprep.subr.bf16.mxu0 0
    %3160 = vmatpush1.bf16.msra.mxu0 0
    %3161 = vmatprep.subr.bf16.mxu0 0
    %3162 = vmatpush1.bf16.msra.mxu0 0
    %3163 = vmatprep.subr.bf16.mxu0 0
    %3164 = vmatpush1.bf16.msra.mxu0 0
    %3165 = vmatprep.subr.bf16.mxu0 0
    %3166 = vmatpush1.bf16.msra.mxu0 0
    %3167 = vmatprep.subr.bf16.mxu0 0
    %3168 = vmatpush1.bf16.msra.mxu0 0
    %3169 = vmatprep.subr.bf16.mxu0 0
    %3170 = vmatpush1.bf16.msra.mxu0 0
    %3171 = vmatprep.mubr.bf16.mxu0 0
    %3172 = vmatmul.mubr.bf16.gmra.mrb[0].mxu0 %v2954
    %v3173 = vpop.f32.mrb[0].mxu0
    %v3174 = vadd.f32 %v3077, %v3173
    %v3175 = vpop.f32.mrb[0].mxu0
    %v3176 = vpop.f32.mrb[0].mxu0
    %v3177 = vadd.f32 %v3080, %v3176
    %v3178 = vpop.f32.mrb[0].mxu0
    %3179 = vmatprep.mubr.bf16.mxu0 0
    %3180 = vmatmul.mubr.bf16.gmra.mrb[0].mxu0 %v2955
    %v3181 = vpop.f32.mrb[0].mxu0
    %v3182 = vadd.f32 %v3085, %v3181
    %v3183 = vpop.f32.mrb[0].mxu0
    %v3184 = vpop.f32.mrb[0].mxu0
    %v3185 = vadd.f32 %v3088, %v3184
    %v3186 = vpop.f32.mrb[0].mxu0
    %3187 = vdwg.mxu0
    %v3188 = vld [vmem:[%s10 + $0x80] sm:$0xf]
    %v3189 = vld [vmem:[%s10 + $0x84] sm:$0xf]
    %v3190 = vld [vmem:[%s10 + $0x88] sm:$0xf]
    %v3191 = vld [vmem:[%s10 + $0x8c] sm:$0xf]
    %v3192 = vld [vmem:[%s10 + $0x90] sm:$0xf]
    %v3193 = vld [vmem:[%s10 + $0x94] sm:$0xf]
    %v3194 = vld [vmem:[%s10 + $0x98] sm:$0xf]
    %v3195 = vld [vmem:[%s10 + $0x9c] sm:$0xf]
    %v3196 = vld [vmem:[%s10 + $0xa0] sm:$0xf]
    %v3197 = vld [vmem:[%s10 + $0xa4] sm:$0xf]
    %v3198 = vld [vmem:[%s10 + $0xa8] sm:$0xf]
    %v3199 = vld [vmem:[%s10 + $0xac] sm:$0xf]
    %v3200 = vld [vmem:[%s10 + $0xb0] sm:$0xf]
    %v3201 = vld [vmem:[%s10 + $0xb4] sm:$0xf]
    %v3202 = vld [vmem:[%s10 + $0xb8] sm:$0xf]
    %v3203 = vld [vmem:[%s10 + $0xbc] sm:$0xf]
    %v3220 = vunpack.c.l.b16 %v3188
    %v3221 = vunpack.c.l.b16 %v3189
    %v3222 = vunpack.c.l.b16 %v3190
    %v3223 = vunpack.c.l.b16 %v3191
    %v3224 = vunpack.c.l.b16 %v3192
    %v3225 = vunpack.c.l.b16 %v3193
    %v3226 = vunpack.c.l.b16 %v3194
    %v3227 = vunpack.c.l.b16 %v3195
    %v3228 = vunpack.c.l.b16 %v3196
    %v3229 = vunpack.c.l.b16 %v3197
    %v3230 = vunpack.c.l.b16 %v3198
    %v3231 = vunpack.c.l.b16 %v3199
    %v3232 = vunpack.c.l.b16 %v3200
    %v3233 = vunpack.c.l.b16 %v3201
    %v3234 = vunpack.c.l.b16 %v3202
    %v3235 = vunpack.c.l.b16 %v3203
    %v3236 = vpack.c.b16 %v3221, %v3220
    %v3237 = vpack.c.b16 %v3223, %v3222
    %v3238 = vpack.c.b16 %v3225, %v3224
    %v3239 = vpack.c.b16 %v3227, %v3226
    %v3240 = vpack.c.b16 %v3229, %v3228
    %v3241 = vpack.c.b16 %v3231, %v3230
    %v3242 = vpack.c.b16 %v3233, %v3232
    %v3243 = vpack.c.b16 %v3235, %v3234
    %3252 = vmatprep.subr.bf16.mxu0 0
    %3253 = vmatpush1.bf16.msra.mxu0 %v3236
    %3254 = vmatprep.subr.bf16.mxu0 0
    %3255 = vmatpush1.bf16.msra.mxu0 %v3237
    %3256 = vmatprep.subr.bf16.mxu0 0
    %3257 = vmatpush1.bf16.msra.mxu0 %v3238
    %3258 = vmatprep.subr.bf16.mxu0 0
    %3259 = vmatpush1.bf16.msra.mxu0 %v3239
    %3260 = vmatprep.subr.bf16.mxu0 0
    %3261 = vmatpush1.bf16.msra.mxu0 %v3240
    %3262 = vmatprep.subr.bf16.mxu0 0
    %3263 = vmatpush1.bf16.msra.mxu0 %v3241
    %3264 = vmatprep.subr.bf16.mxu0 0
    %3265 = vmatpush1.bf16.msra.mxu0 %v3242
    %3266 = vmatprep.subr.bf16.mxu0 0
    %3267 = vmatpush1.bf16.msra.mxu0 %v3243
    %3268 = vmatprep.subr.bf16.mxu0 0
    %3269 = vmatpush1.bf16.msra.mxu0 0
    %3270 = vmatprep.subr.bf16.mxu0 0
    %3271 = vmatpush1.bf16.msra.mxu0 0
    %3272 = vmatprep.subr.bf16.mxu0 0
    %3273 = vmatpush1.bf16.msra.mxu0 0
    %3274 = vmatprep.subr.bf16.mxu0 0
    %3275 = vmatpush1.bf16.msra.mxu0 0
    %3276 = vmatprep.subr.bf16.mxu0 0
    %3277 = vmatpush1.bf16.msra.mxu0 0
    %3278 = vmatprep.subr.bf16.mxu0 0
    %3279 = vmatpush1.bf16.msra.mxu0 0
    %3280 = vmatprep.subr.bf16.mxu0 0
    %3281 = vmatpush1.bf16.msra.mxu0 0
    %3282 = vmatprep.subr.bf16.mxu0 0
    %3283 = vmatpush1.bf16.msra.mxu0 0
    %3284 = vmatprep.mubr.bf16.mxu0 0
    %3285 = vmatmul.mubr.bf16.gmra.mrb[0].mxu0 %v2958
    %v3286 = vpop.f32.mrb[0].mxu0
    %v3287 = vadd.f32 0.0, %v3286
    %v3288 = vpop.f32.mrb[0].mxu0
    %v3289 = vpop.f32.mrb[0].mxu0
    %v3290 = vadd.f32 0.0, %v3289
    %v3291 = vpop.f32.mrb[0].mxu0
    %3292 = vmatprep.mubr.bf16.mxu0 0
    %3293 = vmatmul.mubr.bf16.gmra.mrb[0].mxu0 %v2959
    %v3294 = vpop.f32.mrb[0].mxu0
    %v3295 = vadd.f32 0.0, %v3294
    %v3296 = vpop.f32.mrb[0].mxu0
    %v3297 = vpop.f32.mrb[0].mxu0
    %v3298 = vadd.f32 0.0, %v3297
    %v3299 = vpop.f32.mrb[0].mxu0
    %3300 = vdwg.mxu0
    %v3301 = vadd.f32 %v3174, %v3287
    %v3302 = vadd.f32 %v3177, %v3290
    %v3303 = vadd.f32 %v3182, %v3295
    %v3304 = vadd.f32 %v3185, %v3298
    %v3305 = vld [vmem:[%s10 + $0xc0] sm:$0xf]
    %v3306 = vld [vmem:[%s10 + $0xc4] sm:$0xf]
    %v3307 = vld [vmem:[%s10 + $0xc8] sm:$0xf]
    %v3308 = vld [vmem:[%s10 + $0xcc] sm:$0xf]
    %v3309 = vld [vmem:[%s10 + $0xd0] sm:$0xf]
    %v3310 = vld [vmem:[%s10 + $0xd4] sm:$0xf]
    %v3311 = vld [vmem:[%s10 + $0xd8] sm:$0xf]
    %v3312 = vld [vmem:[%s10 + $0xdc] sm:$0xf]
    %v3313 = vld [vmem:[%s10 + $0xe0] sm:$0xf]
    %v3314 = vld [vmem:[%s10 + $0xe4] sm:$0xf]
    %v3315 = vld [vmem:[%s10 + $0xe8] sm:$0xf]
    %v3316 = vld [vmem:[%s10 + $0xec] sm:$0xf]
    %v3317 = vld [vmem:[%s10 + $0xf0] sm:$0xf]
    %v3318 = vld [vmem:[%s10 + $0xf4] sm:$0xf]
    %v3319 = vld [vmem:[%s10 + $0xf8] sm:$0xf]
    %v3320 = vld [vmem:[%s10 + $0xfc] sm:$0xf]
    %v3337 = vunpack.c.l.b16 %v3305
    %v3338 = vunpack.c.l.b16 %v3306
    %v3339 = vunpack.c.l.b16 %v3307
    %v3340 = vunpack.c.l.b16 %v3308
    %v3341 = vunpack.c.l.b16 %v3309
    %v3342 = vunpack.c.l.b16 %v3310
    %v3343 = vunpack.c.l.b16 %v3311
    %v3344 = vunpack.c.l.b16 %v3312
    %v3345 = vunpack.c.l.b16 %v3313
    %v3346 = vunpack.c.l.b16 %v3314
    %v3347 = vunpack.c.l.b16 %v3315
    %v3348 = vunpack.c.l.b16 %v3316
    %v3349 = vunpack.c.l.b16 %v3317
    %v3350 = vunpack.c.l.b16 %v3318
    %v3351 = vunpack.c.l.b16 %v3319
    %v3352 = vunpack.c.l.b16 %v3320
    %v3353 = vpack.c.b16 %v3338, %v3337
    %v3354 = vpack.c.b16 %v3340, %v3339
    %v3355 = vpack.c.b16 %v3342, %v3341
    %v3356 = vpack.c.b16 %v3344, %v3343
    %v3357 = vpack.c.b16 %v3346, %v3345
    %v3358 = vpack.c.b16 %v3348, %v3347
    %v3359 = vpack.c.b16 %v3350, %v3349
    %v3360 = vpack.c.b16 %v3352, %v3351
    %3369 = vmatprep.subr.bf16.mxu0 0
    %3370 = vmatpush1.bf16.msra.mxu0 %v3353
    %3371 = vmatprep.subr.bf16.mxu0 0
    %3372 = vmatpush1.bf16.msra.mxu0 %v3354
    %3373 = vmatprep.subr.bf16.mxu0 0
    %3374 = vmatpush1.bf16.msra.mxu0 %v3355
    %3375 = vmatprep.subr.bf16.mxu0 0
    %3376 = vmatpush1.bf16.msra.mxu0 %v3356
    %3377 = vmatprep.subr.bf16.mxu0 0
    %3378 = vmatpush1.bf16.msra.mxu0 %v3357
    %3379 = vmatprep.subr.bf16.mxu0 0
    %3380 = vmatpush1.bf16.msra.mxu0 %v3358
    %3381 = vmatprep.subr.bf16.mxu0 0
    %3382 = vmatpush1.bf16.msra.mxu0 %v3359
    %3383 = vmatprep.subr.bf16.mxu0 0
    %3384 = vmatpush1.bf16.msra.mxu0 %v3360
    %3385 = vmatprep.subr.bf16.mxu0 0
    %3386 = vmatpush1.bf16.msra.mxu0 0
    %3387 = vmatprep.subr.bf16.mxu0 0
    %3388 = vmatpush1.bf16.msra.mxu0 0
    %3389 = vmatprep.subr.bf16.mxu0 0
    %3390 = vmatpush1.bf16.msra.mxu0 0
    %3391 = vmatprep.subr.bf16.mxu0 0
    %3392 = vmatpush1.bf16.msra.mxu0 0
    %3393 = vmatprep.subr.bf16.mxu0 0
    %3394 = vmatpush1.bf16.msra.mxu0 0
    %3395 = vmatprep.subr.bf16.mxu0 0
    %3396 = vmatpush1.bf16.msra.mxu0 0
    %3397 = vmatprep.subr.bf16.mxu0 0
    %3398 = vmatpush1.bf16.msra.mxu0 0
    %3399 = vmatprep.subr.bf16.mxu0 0
    %3400 = vmatpush1.bf16.msra.mxu0 0
    %3401 = vmatprep.mubr.bf16.mxu0 0
    %3402 = vmatmul.mubr.bf16.gmra.mrb[0].mxu0 %v2960
    %v3403 = vpop.f32.mrb[0].mxu0
    %v3404 = vadd.f32 0.0, %v3403
    %v3405 = vpop.f32.mrb[0].mxu0
    %v3406 = vpop.f32.mrb[0].mxu0
    %v3407 = vadd.f32 0.0, %v3406
    %v3408 = vpop.f32.mrb[0].mxu0
    %3409 = vmatprep.mubr.bf16.mxu0 0
    %3410 = vmatmul.mubr.bf16.gmra.mrb[0].mxu0 %v2961
    %v3411 = vpop.f32.mrb[0].mxu0
    %v3412 = vadd.f32 0.0, %v3411
    %v3413 = vpop.f32.mrb[0].mxu0
    %v3414 = vpop.f32.mrb[0].mxu0
    %v3415 = vadd.f32 0.0, %v3414
    %v3416 = vpop.f32.mrb[0].mxu0
    %3417 = vdwg.mxu0
    %v3418 = vadd.f32 %v3301, %v3404
    %v3419 = vadd.f32 %v3302, %v3407
    %v3420 = vadd.f32 %v3303, %v3412
    %v3421 = vadd.f32 %v3304, %v3415
    %v3422 = vld [vmem:[#allocation17] sm:$0x1]
    %v3424 = vlaneseq
    %v3425 = vshrl.u32 %v3424, 7
    %v3426 = vsub.s32 0, %v3425
    %v3427 = vrot.slane %v3422, %v3426
    %v3429 = vadd.f32 %v3418, %v3427
    %v3430 = vadd.f32 %v3419, %v3427
    %v3431 = vadd.f32 %v3420, %v3427
    %v3432 = vadd.f32 %v3421, %v3427
    %v3433 = vmax.f32 %v3429, 0.0
    %v3434 = vmax.f32 %v3430, 0.0
    %v3435 = vmax.f32 %v3431, 0.0
    %v3436 = vmax.f32 %v3432, 0.0
    %v3437 = vpack.c.bf16 %v3434, %v3433
    %v3438 = vpack.c.bf16 %v3436, %v3435
    %s3439 = smul.u32 4, 64
    %s3440 = smul.u32 %s3439, 2
    %s3441 = sshll.u32 %s3440, 4
    %3442 = dma.done [#allocation7], %s3441
    %v3443 = vld [vmem:[%s12] sm:$0xf]
    %v3444 = vld [vmem:[%s12 + $0x4] sm:$0xf]
    %v3445 = vld [vmem:[%s12 + $0x8] sm:$0xf]
    %v3446 = vld [vmem:[%s12 + $0xc] sm:$0xf]
    %v3447 = vld [vmem:[%s12 + $0x10] sm:$0xf]
    %v3448 = vld [vmem:[%s12 + $0x14] sm:$0xf]
    %v3449 = vld [vmem:[%s12 + $0x18] sm:$0xf]
    %v3450 = vld [vmem:[%s12 + $0x1c] sm:$0xf]
    %v3451 = vld [vmem:[%s12 + $0x20] sm:$0xf]
    %v3452 = vld [vmem:[%s12 + $0x24] sm:$0xf]
    %v3453 = vld [vmem:[%s12 + $0x28] sm:$0xf]
    %v3454 = vld [vmem:[%s12 + $0x2c] sm:$0xf]
    %v3467 = vunpack.c.l.b16 %v3443
    %v3468 = vunpack.c.l.b16 %v3444
    %v3469 = vunpack.c.l.b16 %v3445
    %v3470 = vunpack.c.l.b16 %v3446
    %v3471 = vunpack.c.l.b16 %v3447
    %v3472 = vunpack.c.l.b16 %v3448
    %v3473 = vunpack.c.l.b16 %v3449
    %v3474 = vunpack.c.l.b16 %v3450
    %v3475 = vunpack.c.l.b16 %v3451
    %v3476 = vunpack.c.l.b16 %v3452
    %v3477 = vunpack.c.l.b16 %v3453
    %v3478 = vunpack.c.l.b16 %v3454
    %v3479 = vpack.c.b16 %v3468, %v3467
    %v3480 = vpack.c.b16 %v3470, %v3469
    %v3481 = vpack.c.b16 %v3472, %v3471
    %v3482 = vpack.c.b16 %v3474, %v3473
    %v3483 = vpack.c.b16 %v3476, %v3475
    %v3484 = vpack.c.b16 %v3478, %v3477
    %vm3485 = vcmask 261120
    %v3487 = vsel %vm3485, %v3479, 0
    %v3490 = vsel %vm3485, %v3480, 0
    %v3493 = vsel %vm3485, %v3481, 0
    %v3496 = vsel %vm3485, %v3482, 0
    %v3499 = vsel %vm3485, %v3483, 0
    %v3502 = vsel %vm3485, %v3484, 0
    %3504 = vmatprep.subr.bf16.mxu0 0
    %3505 = vmatpush1.bf16.msra.mxu0 %v3437
    %3506 = vmatprep.subr.bf16.mxu0 0
    %3507 = vmatpush1.bf16.msra.mxu0 %v3438
    %3508 = vmatprep.subr.bf16.mxu0 0
    %3509 = vmatpush1.bf16.msra.mxu0 0
    %3510 = vmatprep.subr.bf16.mxu0 0
    %3511 = vmatpush1.bf16.msra.mxu0 0
    %3512 = vmatprep.subr.bf16.mxu0 0
    %3513 = vmatpush1.bf16.msra.mxu0 0
    %3514 = vmatprep.subr.bf16.mxu0 0
    %3515 = vmatpush1.bf16.msra.mxu0 0
    %3516 = vmatprep.subr.bf16.mxu0 0
    %3517 = vmatpush1.bf16.msra.mxu0 0
    %3518 = vmatprep.subr.bf16.mxu0 0
    %3519 = vmatpush1.bf16.msra.mxu0 0
    %3520 = vmatprep.subr.bf16.mxu0 0
    %3521 = vmatpush1.bf16.msra.mxu0 0
    %3522 = vmatprep.subr.bf16.mxu0 0
    %3523 = vmatpush1.bf16.msra.mxu0 0
    %3524 = vmatprep.subr.bf16.mxu0 0
    %3525 = vmatpush1.bf16.msra.mxu0 0
    %3526 = vmatprep.subr.bf16.mxu0 0
    %3527 = vmatpush1.bf16.msra.mxu0 0
    %3528 = vmatprep.subr.bf16.mxu0 0
    %3529 = vmatpush1.bf16.msra.mxu0 0
    %3530 = vmatprep.subr.bf16.mxu0 0
    %3531 = vmatpush1.bf16.msra.mxu0 0
    %3532 = vmatprep.subr.bf16.mxu0 0
    %3533 = vmatpush1.bf16.msra.mxu0 0
    %3534 = vmatprep.subr.bf16.mxu0 0
    %3535 = vmatpush1.bf16.msra.mxu0 0
    %3536 = vmatprep.mubr.bf16.mxu0 0
    %3537 = vmatmul.mubr.bf16.gmra.mrb[0].mxu0 %v3487
    %v3538 = vpop.f32.mrb[0].mxu0
    %v3539 = vadd.f32 0.0, %v3538
    %v3540 = vpop.f32.mrb[0].mxu0
    %v3541 = vpop.f32.mrb[0].mxu0
    %v3542 = vadd.f32 0.0, %v3541
    %v3543 = vpop.f32.mrb[0].mxu0
    %3544 = vmatprep.mubr.bf16.mxu0 0
    %3545 = vmatmul.mubr.bf16.gmra.mrb[0].mxu0 %v3490
    %v3546 = vpop.f32.mrb[0].mxu0
    %v3547 = vadd.f32 0.0, %v3546
    %v3548 = vpop.f32.mrb[0].mxu0
    %v3549 = vpop.f32.mrb[0].mxu0
    %v3550 = vadd.f32 0.0, %v3549
    %v3551 = vpop.f32.mrb[0].mxu0
    %3552 = vmatprep.mubr.bf16.mxu0 0
    %3553 = vmatmul.mubr.bf16.gmra.mrb[0].mxu0 %v3493
    %v3554 = vpop.f32.mrb[0].mxu0
    %v3555 = vadd.f32 0.0, %v3554
    %v3556 = vpop.f32.mrb[0].mxu0
    %v3557 = vpop.f32.mrb[0].mxu0
    %v3558 = vadd.f32 0.0, %v3557
    %v3559 = vpop.f32.mrb[0].mxu0
    %3560 = vmatprep.mubr.bf16.mxu0 0
    %3561 = vmatmul.mubr.bf16.gmra.mrb[0].mxu0 %v3496
    %v3562 = vpop.f32.mrb[0].mxu0
    %v3563 = vadd.f32 0.0, %v3562
    %v3564 = vpop.f32.mrb[0].mxu0
    %v3565 = vpop.f32.mrb[0].mxu0
    %v3566 = vadd.f32 0.0, %v3565
    %v3567 = vpop.f32.mrb[0].mxu0
    %3568 = vmatprep.mubr.bf16.mxu0 0
    %3569 = vmatmul.mubr.bf16.gmra.mrb[0].mxu0 %v3499
    %v3570 = vpop.f32.mrb[0].mxu0
    %v3571 = vadd.f32 0.0, %v3570
    %v3572 = vpop.f32.mrb[0].mxu0
    %v3573 = vpop.f32.mrb[0].mxu0
    %v3574 = vadd.f32 0.0, %v3573
    %v3575 = vpop.f32.mrb[0].mxu0
    %3576 = vmatprep.mubr.bf16.mxu0 0
    %3577 = vmatmul.mubr.bf16.gmra.mrb[0].mxu0 %v3502
    %v3578 = vpop.f32.mrb[0].mxu0
    %v3579 = vadd.f32 0.0, %v3578
    %v3580 = vpop.f32.mrb[0].mxu0
    %v3581 = vpop.f32.mrb[0].mxu0
    %v3582 = vadd.f32 0.0, %v3581
    %v3583 = vpop.f32.mrb[0].mxu0
    %3584 = vdwg.mxu0
    %v3585 = vpack.c.bf16 %v3542, %v3539
    %v3586 = vpack.c.bf16 %v3550, %v3547
    %v3587 = vpack.c.bf16 %v3558, %v3555
    %v3588 = vpack.c.bf16 %v3566, %v3563
    %v3589 = vpack.c.bf16 %v3574, %v3571
    %v3590 = vpack.c.bf16 %v3582, %v3579
    %v3591 = vld [vmem:[#allocation2] sm:$0xff]
    %v3592 = vld [vmem:[#allocation2 + $0x8] sm:$0xff]
    %v3593 = vld [vmem:[#allocation2 + $0x10] sm:$0xff]
    %v3594 = vld [vmem:[#allocation2 + $0x18] sm:$0xff]
    %v3595 = vld [vmem:[#allocation2 + $0x20] sm:$0xff]
    %v3596 = vld [vmem:[#allocation2 + $0x28] sm:$0xff]
    %v3597 = vld [vmem:[#allocation2 + $0x30] sm:$0xff]
    %v3598 = vld [vmem:[#allocation2 + $0x38] sm:$0xff]
    %v3599 = vld [vmem:[#allocation2 + $0x40] sm:$0xff]
    %v3600 = vld [vmem:[#allocation2 + $0x48] sm:$0xff]
    %v3601 = vld [vmem:[#allocation2 + $0x50] sm:$0xff]
    %v3602 = vld [vmem:[#allocation2 + $0x58] sm:$0xff]
    %v3603 = vld [vmem:[#allocation2 + $0x60] sm:$0xff]
    %v3604 = vld [vmem:[#allocation2 + $0x68] sm:$0xff]
    %v3605 = vld [vmem:[#allocation2 + $0x70] sm:$0xff]
    %v3606 = vld [vmem:[#allocation2 + $0x78] sm:$0xff]
    %v3607 = vld [vmem:[#allocation2 + $0x80] sm:$0xff]
    %v3608 = vld [vmem:[#allocation2 + $0x88] sm:$0xff]
    %v3609 = vld [vmem:[#allocation2 + $0x90] sm:$0xff]
    %v3610 = vld [vmem:[#allocation2 + $0x98] sm:$0xff]
    %v3611 = vld [vmem:[#allocation2 + $0xa0] sm:$0xff]
    %v3612 = vld [vmem:[#allocation2 + $0xa8] sm:$0xff]
    %v3613 = vld [vmem:[#allocation2 + $0xb0] sm:$0xff]
    %v3614 = vld [vmem:[#allocation2 + $0xb8] sm:$0xff]
    %v3615 = vld [vmem:[#allocation2 + $0xc0] sm:$0xff]
    %v3616 = vld [vmem:[#allocation2 + $0xc8] sm:$0xff]
    %v3617 = vld [vmem:[#allocation2 + $0xd0] sm:$0xff]
    %v3618 = vld [vmem:[#allocation2 + $0xd8] sm:$0xff]
    %v3619 = vld [vmem:[#allocation2 + $0xe0] sm:$0xff]
    %v3620 = vld [vmem:[#allocation2 + $0xe8] sm:$0xff]
    %v3621 = vld [vmem:[#allocation2 + $0xf0] sm:$0xff]
    %v3622 = vld [vmem:[#allocation2 + $0xf8] sm:$0xff]
    %v3625 = vrot.slane %v3586, 4
    %v3626 = vrot.slane %v3587, 4
    %v3627 = vsel %vm1444, %v3625, %v3626
    %3630 = vmatprep.subr.bf16.mxu0 %v3608
    %3631 = vmatpush1.bf16.msra.mxu0 %v3607
    %3632 = vmatprep.subr.bf16.mxu0 %v3610
    %3633 = vmatpush1.bf16.msra.mxu0 %v3609
    %3634 = vmatprep.subr.bf16.mxu0 %v3612
    %3635 = vmatpush1.bf16.msra.mxu0 %v3611
    %3636 = vmatprep.subr.bf16.mxu0 %v3614
    %3637 = vmatpush1.bf16.msra.mxu0 %v3613
    %3638 = vmatprep.subr.bf16.mxu0 %v3616
    %3639 = vmatpush1.bf16.msra.mxu0 %v3615
    %3640 = vmatprep.subr.bf16.mxu0 %v3618
    %3641 = vmatpush1.bf16.msra.mxu0 %v3617
    %3642 = vmatprep.subr.bf16.mxu0 %v3620
    %3643 = vmatpush1.bf16.msra.mxu0 %v3619
    %3644 = vmatprep.subr.bf16.mxu0 %v3622
    %3645 = vmatpush1.bf16.msra.mxu0 %v3621
    %3646 = vmatprep.subr.bf16.mxu0 0
    %3647 = vmatpush1.bf16.msra.mxu0 0
    %3648 = vmatprep.subr.bf16.mxu0 0
    %3649 = vmatpush1.bf16.msra.mxu0 0
    %3650 = vmatprep.subr.bf16.mxu0 0
    %3651 = vmatpush1.bf16.msra.mxu0 0
    %3652 = vmatprep.subr.bf16.mxu0 0
    %3653 = vmatpush1.bf16.msra.mxu0 0
    %3654 = vmatprep.subr.bf16.mxu0 0
    %3655 = vmatpush1.bf16.msra.mxu0 0
    %3656 = vmatprep.subr.bf16.mxu0 0
    %3657 = vmatpush1.bf16.msra.mxu0 0
    %3658 = vmatprep.subr.bf16.mxu0 0
    %3659 = vmatpush1.bf16.msra.mxu0 0
    %3660 = vmatprep.subr.bf16.mxu0 0
    %3661 = vmatpush1.bf16.msra.mxu0 0
    %3662 = vmatprep.mubr.bf16.mxu0 0
    %3663 = vmatmul.mubr.bf16.gmra.mrb[0].mxu0 %v3627
    %v3664 = vpop.f32.mrb[0].mxu0
    %v3665 = vadd.f32 0.0, %v3664
    %v3666 = vpop.f32.mrb[0].mxu0
    %v3667 = vadd.f32 0.0, %v3666
    %v3668 = vpop.f32.mrb[0].mxu0
    %v3669 = vadd.f32 0.0, %v3668
    %v3670 = vpop.f32.mrb[0].mxu0
    %v3671 = vadd.f32 0.0, %v3670
    %3672 = vmatprep.mubr.bf16.mxu0 0
    %3673 = vmatmul.mubr.bf16.gmra.mrb[0].mxu0 %v3626
    %v3674 = vpop.f32.mrb[0].mxu0
    %v3675 = vadd.f32 0.0, %v3674
    %v3676 = vpop.f32.mrb[0].mxu0
    %v3677 = vadd.f32 0.0, %v3676
    %v3678 = vpop.f32.mrb[0].mxu0
    %v3679 = vpop.f32.mrb[0].mxu0
    %3680 = vdwg.mxu0
    %3681 = vmatprep.subr.bf16.mxu0 %v3592
    %3682 = vmatpush1.bf16.msra.mxu0 %v3591
    %3683 = vmatprep.subr.bf16.mxu0 %v3594
    %3684 = vmatpush1.bf16.msra.mxu0 %v3593
    %3685 = vmatprep.subr.bf16.mxu0 %v3596
    %3686 = vmatpush1.bf16.msra.mxu0 %v3595
    %3687 = vmatprep.subr.bf16.mxu0 %v3598
    %3688 = vmatpush1.bf16.msra.mxu0 %v3597
    %3689 = vmatprep.subr.bf16.mxu0 %v3600
    %3690 = vmatpush1.bf16.msra.mxu0 %v3599
    %3691 = vmatprep.subr.bf16.mxu0 %v3602
    %3692 = vmatpush1.bf16.msra.mxu0 %v3601
    %3693 = vmatprep.subr.bf16.mxu0 %v3604
    %3694 = vmatpush1.bf16.msra.mxu0 %v3603
    %3695 = vmatprep.subr.bf16.mxu0 %v3606
    %3696 = vmatpush1.bf16.msra.mxu0 %v3605
    %3697 = vmatprep.subr.bf16.mxu0 0
    %3698 = vmatpush1.bf16.msra.mxu0 0
    %3699 = vmatprep.subr.bf16.mxu0 0
    %3700 = vmatpush1.bf16.msra.mxu0 0
    %3701 = vmatprep.subr.bf16.mxu0 0
    %3702 = vmatpush1.bf16.msra.mxu0 0
    %3703 = vmatprep.subr.bf16.mxu0 0
    %3704 = vmatpush1.bf16.msra.mxu0 0
    %3705 = vmatprep.subr.bf16.mxu0 0
    %3706 = vmatpush1.bf16.msra.mxu0 0
    %3707 = vmatprep.subr.bf16.mxu0 0
    %3708 = vmatpush1.bf16.msra.mxu0 0
    %3709 = vmatprep.subr.bf16.mxu0 0
    %3710 = vmatpush1.bf16.msra.mxu0 0
    %3711 = vmatprep.subr.bf16.mxu0 0
    %3712 = vmatpush1.bf16.msra.mxu0 0
    %3713 = vmatprep.mubr.bf16.mxu0 0
    %3714 = vmatmul.mubr.bf16.gmra.mrb[0].mxu0 %v3585
    %v3715 = vpop.f32.mrb[0].mxu0
    %v3716 = vadd.f32 %v3665, %v3715
    %v3717 = vpop.f32.mrb[0].mxu0
    %v3718 = vadd.f32 %v3667, %v3717
    %v3719 = vpop.f32.mrb[0].mxu0
    %v3720 = vadd.f32 %v3669, %v3719
    %v3721 = vpop.f32.mrb[0].mxu0
    %v3722 = vadd.f32 %v3671, %v3721
    %3723 = vmatprep.mubr.bf16.mxu0 0
    %3724 = vmatmul.mubr.bf16.gmra.mrb[0].mxu0 %v3586
    %v3725 = vpop.f32.mrb[0].mxu0
    %v3726 = vadd.f32 %v3675, %v3725
    %v3727 = vpop.f32.mrb[0].mxu0
    %v3728 = vadd.f32 %v3677, %v3727
    %v3729 = vpop.f32.mrb[0].mxu0
    %v3730 = vpop.f32.mrb[0].mxu0
    %3731 = vdwg.mxu0
    %v3732 = vld [vmem:[#allocation2 + $0x100] sm:$0xff]
    %v3733 = vld [vmem:[#allocation2 + $0x108] sm:$0xff]
    %v3734 = vld [vmem:[#allocation2 + $0x110] sm:$0xff]
    %v3735 = vld [vmem:[#allocation2 + $0x118] sm:$0xff]
    %v3736 = vld [vmem:[#allocation2 + $0x120] sm:$0xff]
    %v3737 = vld [vmem:[#allocation2 + $0x128] sm:$0xff]
    %v3738 = vld [vmem:[#allocation2 + $0x130] sm:$0xff]
    %v3739 = vld [vmem:[#allocation2 + $0x138] sm:$0xff]
    %v3740 = vld [vmem:[#allocation2 + $0x140] sm:$0xff]
    %v3741 = vld [vmem:[#allocation2 + $0x148] sm:$0xff]
    %v3742 = vld [vmem:[#allocation2 + $0x150] sm:$0xff]
    %v3743 = vld [vmem:[#allocation2 + $0x158] sm:$0xff]
    %v3744 = vld [vmem:[#allocation2 + $0x160] sm:$0xff]
    %v3745 = vld [vmem:[#allocation2 + $0x168] sm:$0xff]
    %v3746 = vld [vmem:[#allocation2 + $0x170] sm:$0xff]
    %v3747 = vld [vmem:[#allocation2 + $0x178] sm:$0xff]
    %3748 = vmatprep.subr.bf16.mxu0 %v3733
    %3749 = vmatpush1.bf16.msra.mxu0 %v3732
    %3750 = vmatprep.subr.bf16.mxu0 %v3735
    %3751 = vmatpush1.bf16.msra.mxu0 %v3734
    %3752 = vmatprep.subr.bf16.mxu0 %v3737
    %3753 = vmatpush1.bf16.msra.mxu0 %v3736
    %3754 = vmatprep.subr.bf16.mxu0 %v3739
    %3755 = vmatpush1.bf16.msra.mxu0 %v3738
    %3756 = vmatprep.subr.bf16.mxu0 %v3741
    %3757 = vmatpush1.bf16.msra.mxu0 %v3740
    %3758 = vmatprep.subr.bf16.mxu0 %v3743
    %3759 = vmatpush1.bf16.msra.mxu0 %v3742
    %3760 = vmatprep.subr.bf16.mxu0 %v3745
    %3761 = vmatpush1.bf16.msra.mxu0 %v3744
    %3762 = vmatprep.subr.bf16.mxu0 %v3747
    %3763 = vmatpush1.bf16.msra.mxu0 %v3746
    %3764 = vmatprep.subr.bf16.mxu0 0
    %3765 = vmatpush1.bf16.msra.mxu0 0
    %3766 = vmatprep.subr.bf16.mxu0 0
    %3767 = vmatpush1.bf16.msra.mxu0 0
    %3768 = vmatprep.subr.bf16.mxu0 0
    %3769 = vmatpush1.bf16.msra.mxu0 0
    %3770 = vmatprep.subr.bf16.mxu0 0
    %3771 = vmatpush1.bf16.msra.mxu0 0
    %3772 = vmatprep.subr.bf16.mxu0 0
    %3773 = vmatpush1.bf16.msra.mxu0 0
    %3774 = vmatprep.subr.bf16.mxu0 0
    %3775 = vmatpush1.bf16.msra.mxu0 0
    %3776 = vmatprep.subr.bf16.mxu0 0
    %3777 = vmatpush1.bf16.msra.mxu0 0
    %3778 = vmatprep.subr.bf16.mxu0 0
    %3779 = vmatpush1.bf16.msra.mxu0 0
    %3780 = vmatprep.mubr.bf16.mxu0 0
    %3781 = vmatmul.mubr.bf16.gmra.mrb[0].mxu0 %v3588
    %v3782 = vpop.f32.mrb[0].mxu0
    %v3783 = vadd.f32 0.0, %v3782
    %v3784 = vpop.f32.mrb[0].mxu0
    %v3785 = vadd.f32 0.0, %v3784
    %v3786 = vpop.f32.mrb[0].mxu0
    %v3787 = vadd.f32 0.0, %v3786
    %v3788 = vpop.f32.mrb[0].mxu0
    %v3789 = vadd.f32 0.0, %v3788
    %3790 = vmatprep.mubr.bf16.mxu0 0
    %3791 = vmatmul.mubr.bf16.gmra.mrb[0].mxu0 %v3589
    %v3792 = vpop.f32.mrb[0].mxu0
    %v3793 = vadd.f32 0.0, %v3792
    %v3794 = vpop.f32.mrb[0].mxu0
    %v3795 = vadd.f32 0.0, %v3794
    %v3796 = vpop.f32.mrb[0].mxu0
    %v3797 = vpop.f32.mrb[0].mxu0
    %3798 = vdwg.mxu0
    %v3799 = vadd.f32 %v3716, %v3783
    %v3800 = vadd.f32 %v3718, %v3785
    %v3801 = vadd.f32 %v3720, %v3787
    %v3802 = vadd.f32 %v3722, %v3789
    %v3803 = vadd.f32 %v3726, %v3793
    %v3804 = vadd.f32 %v3728, %v3795
    %v3805 = vld [vmem:[#allocation2 + $0x180] sm:$0xff]
    %v3806 = vld [vmem:[#allocation2 + $0x188] sm:$0xff]
    %v3807 = vld [vmem:[#allocation2 + $0x190] sm:$0xff]
    %v3808 = vld [vmem:[#allocation2 + $0x198] sm:$0xff]
    %v3809 = vld [vmem:[#allocation2 + $0x1a0] sm:$0xff]
    %v3810 = vld [vmem:[#allocation2 + $0x1a8] sm:$0xff]
    %v3811 = vld [vmem:[#allocation2 + $0x1b0] sm:$0xff]
    %v3812 = vld [vmem:[#allocation2 + $0x1b8] sm:$0xff]
    %v3813 = vld [vmem:[#allocation2 + $0x1c0] sm:$0xff]
    %v3814 = vld [vmem:[#allocation2 + $0x1c8] sm:$0xff]
    %v3815 = vld [vmem:[#allocation2 + $0x1d0] sm:$0xff]
    %v3816 = vld [vmem:[#allocation2 + $0x1d8] sm:$0xff]
    %v3817 = vld [vmem:[#allocation2 + $0x1e0] sm:$0xff]
    %v3818 = vld [vmem:[#allocation2 + $0x1e8] sm:$0xff]
    %v3819 = vld [vmem:[#allocation2 + $0x1f0] sm:$0xff]
    %v3820 = vld [vmem:[#allocation2 + $0x1f8] sm:$0xff]
    %v3823 = vrot.slane %v3589, 4
    %v3824 = vrot.slane %v3590, 4
    %v3825 = vsel %vm1444, %v3823, %v3824
    %3828 = vmatprep.subr.bf16.mxu0 %v3806
    %3829 = vmatpush1.bf16.msra.mxu0 %v3805
    %3830 = vmatprep.subr.bf16.mxu0 %v3808
    %3831 = vmatpush1.bf16.msra.mxu0 %v3807
    %3832 = vmatprep.subr.bf16.mxu0 %v3810
    %3833 = vmatpush1.bf16.msra.mxu0 %v3809
    %3834 = vmatprep.subr.bf16.mxu0 %v3812
    %3835 = vmatpush1.bf16.msra.mxu0 %v3811
    %3836 = vmatprep.subr.bf16.mxu0 %v3814
    %3837 = vmatpush1.bf16.msra.mxu0 %v3813
    %3838 = vmatprep.subr.bf16.mxu0 %v3816
    %3839 = vmatpush1.bf16.msra.mxu0 %v3815
    %3840 = vmatprep.subr.bf16.mxu0 %v3818
    %3841 = vmatpush1.bf16.msra.mxu0 %v3817
    %3842 = vmatprep.subr.bf16.mxu0 %v3820
    %3843 = vmatpush1.bf16.msra.mxu0 %v3819
    %3844 = vmatprep.subr.bf16.mxu0 0
    %3845 = vmatpush1.bf16.msra.mxu0 0
    %3846 = vmatprep.subr.bf16.mxu0 0
    %3847 = vmatpush1.bf16.msra.mxu0 0
    %3848 = vmatprep.subr.bf16.mxu0 0
    %3849 = vmatpush1.bf16.msra.mxu0 0
    %3850 = vmatprep.subr.bf16.mxu0 0
    %3851 = vmatpush1.bf16.msra.mxu0 0
    %3852 = vmatprep.subr.bf16.mxu0 0
    %3853 = vmatpush1.bf16.msra.mxu0 0
    %3854 = vmatprep.subr.bf16.mxu0 0
    %3855 = vmatpush1.bf16.msra.mxu0 0
    %3856 = vmatprep.subr.bf16.mxu0 0
    %3857 = vmatpush1.bf16.msra.mxu0 0
    %3858 = vmatprep.subr.bf16.mxu0 0
    %3859 = vmatpush1.bf16.msra.mxu0 0
    %3860 = vmatprep.mubr.bf16.mxu0 0
    %3861 = vmatmul.mubr.bf16.gmra.mrb[0].mxu0 %v3825
    %v3862 = vpop.f32.mrb[0].mxu0
    %v3863 = vadd.f32 0.0, %v3862
    %v3864 = vpop.f32.mrb[0].mxu0
    %v3865 = vadd.f32 0.0, %v3864
    %v3866 = vpop.f32.mrb[0].mxu0
    %v3867 = vadd.f32 0.0, %v3866
    %v3868 = vpop.f32.mrb[0].mxu0
    %v3869 = vadd.f32 0.0, %v3868
    %3870 = vmatprep.mubr.bf16.mxu0 0
    %3871 = vmatmul.mubr.bf16.gmra.mrb[0].mxu0 %v3824
    %v3872 = vpop.f32.mrb[0].mxu0
    %v3873 = vadd.f32 0.0, %v3872
    %v3874 = vpop.f32.mrb[0].mxu0
    %v3875 = vadd.f32 0.0, %v3874
    %v3876 = vpop.f32.mrb[0].mxu0
    %v3877 = vpop.f32.mrb[0].mxu0
    %3878 = vdwg.mxu0
    %v3879 = vadd.f32 %v3799, %v3863
    %v3880 = vadd.f32 %v3800, %v3865
    %v3881 = vadd.f32 %v3801, %v3867
    %v3882 = vadd.f32 %v3802, %v3869
    %v3883 = vadd.f32 %v3803, %v3873
    %v3884 = vadd.f32 %v3804, %v3875
    %v3885 = vld [vmem:[#allocation19] sm:$0x3]
    %v3887 = vlaneseq
    %v3888 = vshrl.u32 %v3887, 7
    %v3889 = vsub.s32 0, %v3888
    %v3890 = vrot.slane %v3885, %v3889
    %v3891 = vlaneseq
    %v3892 = vshrl.u32 %v3891, 7
    %v3893 = vsub.s32 1, %v3892
    %v3894 = vrot.slane %v3885, %v3893
    %v3897 = vadd.f32 %v3879, %v3890
    %v3898 = vadd.f32 %v3880, %v3894
    %v3899 = vadd.f32 %v3881, %v3890
    %v3900 = vadd.f32 %v3882, %v3894
    %v3901 = vadd.f32 %v3883, %v3890
    %v3902 = vadd.f32 %v3884, %v3894
    %v3903 = vmax.f32 %v3897, 0.0
    %v3904 = vmax.f32 %v3898, 0.0
    %v3905 = vmax.f32 %v3899, 0.0
    %v3906 = vmax.f32 %v3900, 0.0
    %v3907 = vmax.f32 %v3901, 0.0
    %v3908 = vmax.f32 %v3902, 0.0
    %v3909 = vpack.c.bf16 %v3905, %v3903
    %v3910 = vpack.c.bf16 %v3906, %v3904
    %v3911 = vpack.c.bf16 %v3907, %v3907
    %v3912 = vpack.c.bf16 %v3908, %v3908
    %s3913 = smul.u32 4, 128
    %s3914 = smul.u32 %s3913, 2
    %s3915 = sshll.u32 %s3914, 4
    %3916 = dma.done %s715, %s3915
    %v3917 = vld [vmem:[%s14] sm:$0xf]
    %v3918 = vld [vmem:[%s14 + $0x4] sm:$0xf]
    %v3919 = vld [vmem:[%s14 + $0x8] sm:$0xf]
    %v3920 = vld [vmem:[%s14 + $0xc] sm:$0xf]
    %v3925 = vunpack.c.l.b16 %v3917
    %v3926 = vunpack.c.l.b16 %v3918
    %v3927 = vunpack.c.l.b16 %v3919
    %v3928 = vunpack.c.l.b16 %v3920
    %v3929 = vpack.c.b16 %v3926, %v3925
    %v3930 = vpack.c.b16 %v3928, %v3927
    %vm3931 = vcmask 195584
    %v3933 = vsel %vm3931, %v3929, 0
    %v3936 = vsel %vm3931, %v3930, 0
    %v3939 = vsel %vm1224, %v3911, 0
    %v3942 = vsel %vm1224, %v3912, 0
    %3944 = vmatprep.subr.bf16.mxu0 %v3910
    %3945 = vmatpush1.bf16.msra.mxu0 %v3909
    %3946 = vmatprep.subr.bf16.mxu0 %v3942
    %3947 = vmatpush1.bf16.msra.mxu0 %v3939
    %3948 = vmatprep.subr.bf16.mxu0 0
    %3949 = vmatpush1.bf16.msra.mxu0 0
    %3950 = vmatprep.subr.bf16.mxu0 0
    %3951 = vmatpush1.bf16.msra.mxu0 0
    %3952 = vmatprep.subr.bf16.mxu0 0
    %3953 = vmatpush1.bf16.msra.mxu0 0
    %3954 = vmatprep.subr.bf16.mxu0 0
    %3955 = vmatpush1.bf16.msra.mxu0 0
    %3956 = vmatprep.subr.bf16.mxu0 0
    %3957 = vmatpush1.bf16.msra.mxu0 0
    %3958 = vmatprep.subr.bf16.mxu0 0
    %3959 = vmatpush1.bf16.msra.mxu0 0
    %3960 = vmatprep.subr.bf16.mxu0 0
    %3961 = vmatpush1.bf16.msra.mxu0 0
    %3962 = vmatprep.subr.bf16.mxu0 0
    %3963 = vmatpush1.bf16.msra.mxu0 0
    %3964 = vmatprep.subr.bf16.mxu0 0
    %3965 = vmatpush1.bf16.msra.mxu0 0
    %3966 = vmatprep.subr.bf16.mxu0 0
    %3967 = vmatpush1.bf16.msra.mxu0 0
    %3968 = vmatprep.subr.bf16.mxu0 0
    %3969 = vmatpush1.bf16.msra.mxu0 0
    %3970 = vmatprep.subr.bf16.mxu0 0
    %3971 = vmatpush1.bf16.msra.mxu0 0
    %3972 = vmatprep.subr.bf16.mxu0 0
    %3973 = vmatpush1.bf16.msra.mxu0 0
    %3974 = vmatprep.subr.bf16.mxu0 0
    %3975 = vmatpush1.bf16.msra.mxu0 0
    %3976 = vmatprep.mubr.bf16.mxu0 0
    %3977 = vmatmul.mubr.bf16.gmra.mrb[0].mxu0 %v3933
    %v3978 = vpop.f32.mrb[0].mxu0
    %v3979 = vadd.f32 0.0, %v3978
    %v3980 = vpop.f32.mrb[0].mxu0
    %v3981 = vadd.f32 0.0, %v3980
    %v3982 = vpop.f32.mrb[0].mxu0
    %v3983 = vadd.f32 0.0, %v3982
    %v3984 = vpop.f32.mrb[0].mxu0
    %v3985 = vadd.f32 0.0, %v3984
    %3986 = vmatprep.mubr.bf16.mxu0 0
    %3987 = vmatmul.mubr.bf16.gmra.mrb[0].mxu0 %v3936
    %v3988 = vpop.f32.mrb[0].mxu0
    %v3989 = vadd.f32 0.0, %v3988
    %v3990 = vpop.f32.mrb[0].mxu0
    %v3991 = vadd.f32 0.0, %v3990
    %v3992 = vpop.f32.mrb[0].mxu0
    %v3993 = vadd.f32 0.0, %v3992
    %v3994 = vpop.f32.mrb[0].mxu0
    %v3995 = vadd.f32 0.0, %v3994
    %3996 = vdwg.mxu0
    %v3997 = vpack.c.bf16 %v3983, %v3979
    %v3998 = vpack.c.bf16 %v3985, %v3981
    %v3999 = vpack.c.bf16 %v3993, %v3989
    %v4000 = vpack.c.bf16 %v3995, %v3991
    %v4001 = vld [vmem:[#allocation3] sm:$0xff]
    %v4002 = vld [vmem:[#allocation3 + $0x8] sm:$0xff]
    %v4003 = vld [vmem:[#allocation3 + $0x10] sm:$0xff]
    %v4004 = vld [vmem:[#allocation3 + $0x18] sm:$0xff]
    %v4005 = vld [vmem:[#allocation3 + $0x20] sm:$0xff]
    %v4006 = vld [vmem:[#allocation3 + $0x28] sm:$0xff]
    %v4007 = vld [vmem:[#allocation3 + $0x30] sm:$0xff]
    %v4008 = vld [vmem:[#allocation3 + $0x38] sm:$0xff]
    %v4009 = vld [vmem:[#allocation3 + $0x40] sm:$0xff]
    %v4010 = vld [vmem:[#allocation3 + $0x48] sm:$0xff]
    %v4011 = vld [vmem:[#allocation3 + $0x50] sm:$0xff]
    %v4012 = vld [vmem:[#allocation3 + $0x58] sm:$0xff]
    %v4013 = vld [vmem:[#allocation3 + $0x60] sm:$0xff]
    %v4014 = vld [vmem:[#allocation3 + $0x68] sm:$0xff]
    %v4015 = vld [vmem:[#allocation3 + $0x70] sm:$0xff]
    %v4016 = vld [vmem:[#allocation3 + $0x78] sm:$0xff]
    %v4017 = vld [vmem:[#allocation3 + $0x80] sm:$0xff]
    %v4018 = vld [vmem:[#allocation3 + $0x88] sm:$0xff]
    %v4019 = vld [vmem:[#allocation3 + $0x90] sm:$0xff]
    %v4020 = vld [vmem:[#allocation3 + $0x98] sm:$0xff]
    %v4021 = vld [vmem:[#allocation3 + $0xa0] sm:$0xff]
    %v4022 = vld [vmem:[#allocation3 + $0xa8] sm:$0xff]
    %v4023 = vld [vmem:[#allocation3 + $0xb0] sm:$0xff]
    %v4024 = vld [vmem:[#allocation3 + $0xb8] sm:$0xff]
    %v4025 = vld [vmem:[#allocation3 + $0xc0] sm:$0xff]
    %v4026 = vld [vmem:[#allocation3 + $0xc8] sm:$0xff]
    %v4027 = vld [vmem:[#allocation3 + $0xd0] sm:$0xff]
    %v4028 = vld [vmem:[#allocation3 + $0xd8] sm:$0xff]
    %v4029 = vld [vmem:[#allocation3 + $0xe0] sm:$0xff]
    %v4030 = vld [vmem:[#allocation3 + $0xe8] sm:$0xff]
    %v4031 = vld [vmem:[#allocation3 + $0xf0] sm:$0xff]
    %v4032 = vld [vmem:[#allocation3 + $0xf8] sm:$0xff]
    %v4033 = vld [vmem:[#allocation3 + $0x100] sm:$0xff]
    %v4034 = vld [vmem:[#allocation3 + $0x108] sm:$0xff]
    %v4035 = vld [vmem:[#allocation3 + $0x110] sm:$0xff]
    %v4036 = vld [vmem:[#allocation3 + $0x118] sm:$0xff]
    %v4037 = vld [vmem:[#allocation3 + $0x120] sm:$0xff]
    %v4038 = vld [vmem:[#allocation3 + $0x128] sm:$0xff]
    %v4039 = vld [vmem:[#allocation3 + $0x130] sm:$0xff]
    %v4040 = vld [vmem:[#allocation3 + $0x138] sm:$0xff]
    %v4041 = vld [vmem:[#allocation3 + $0x140] sm:$0xff]
    %v4042 = vld [vmem:[#allocation3 + $0x148] sm:$0xff]
    %v4043 = vld [vmem:[#allocation3 + $0x150] sm:$0xff]
    %v4044 = vld [vmem:[#allocation3 + $0x158] sm:$0xff]
    %v4045 = vld [vmem:[#allocation3 + $0x160] sm:$0xff]
    %v4046 = vld [vmem:[#allocation3 + $0x168] sm:$0xff]
    %v4047 = vld [vmem:[#allocation3 + $0x170] sm:$0xff]
    %v4048 = vld [vmem:[#allocation3 + $0x178] sm:$0xff]
    %v4049 = vld [vmem:[#allocation3 + $0x180] sm:$0xff]
    %v4050 = vld [vmem:[#allocation3 + $0x188] sm:$0xff]
    %v4051 = vld [vmem:[#allocation3 + $0x190] sm:$0xff]
    %v4052 = vld [vmem:[#allocation3 + $0x198] sm:$0xff]
    %v4053 = vld [vmem:[#allocation3 + $0x1a0] sm:$0xff]
    %v4054 = vld [vmem:[#allocation3 + $0x1a8] sm:$0xff]
    %v4055 = vld [vmem:[#allocation3 + $0x1b0] sm:$0xff]
    %v4056 = vld [vmem:[#allocation3 + $0x1b8] sm:$0xff]
    %v4057 = vld [vmem:[#allocation3 + $0x1c0] sm:$0xff]
    %v4058 = vld [vmem:[#allocation3 + $0x1c8] sm:$0xff]
    %v4059 = vld [vmem:[#allocation3 + $0x1d0] sm:$0xff]
    %v4060 = vld [vmem:[#allocation3 + $0x1d8] sm:$0xff]
    %v4061 = vld [vmem:[#allocation3 + $0x1e0] sm:$0xff]
    %v4062 = vld [vmem:[#allocation3 + $0x1e8] sm:$0xff]
    %v4063 = vld [vmem:[#allocation3 + $0x1f0] sm:$0xff]
    %v4064 = vld [vmem:[#allocation3 + $0x1f8] sm:$0xff]
    %v4067 = vrot.slane %v3997, 4
    %v4068 = vrot.slane %v3998, 4
    %4071 = vmatprep.subr.bf16.mxu0 %v4034
    %4072 = vmatpush1.bf16.msra.mxu0 %v4033
    %4073 = vmatprep.subr.bf16.mxu0 %v4036
    %4074 = vmatpush1.bf16.msra.mxu0 %v4035
    %4075 = vmatprep.subr.bf16.mxu0 %v4038
    %4076 = vmatpush1.bf16.msra.mxu0 %v4037
    %4077 = vmatprep.subr.bf16.mxu0 %v4040
    %4078 = vmatpush1.bf16.msra.mxu0 %v4039
    %4079 = vmatprep.subr.bf16.mxu0 %v4042
    %4080 = vmatpush1.bf16.msra.mxu0 %v4041
    %4081 = vmatprep.subr.bf16.mxu0 %v4044
    %4082 = vmatpush1.bf16.msra.mxu0 %v4043
    %4083 = vmatprep.subr.bf16.mxu0 %v4046
    %4084 = vmatpush1.bf16.msra.mxu0 %v4045
    %4085 = vmatprep.subr.bf16.mxu0 %v4048
    %4086 = vmatpush1.bf16.msra.mxu0 %v4047
    %4087 = vmatprep.subr.bf16.mxu0 %v4050
    %4088 = vmatpush1.bf16.msra.mxu0 %v4049
    %4089 = vmatprep.subr.bf16.mxu0 %v4052
    %4090 = vmatpush1.bf16.msra.mxu0 %v4051
    %4091 = vmatprep.subr.bf16.mxu0 %v4054
    %4092 = vmatpush1.bf16.msra.mxu0 %v4053
    %4093 = vmatprep.subr.bf16.mxu0 %v4056
    %4094 = vmatpush1.bf16.msra.mxu0 %v4055
    %4095 = vmatprep.subr.bf16.mxu0 %v4058
    %4096 = vmatpush1.bf16.msra.mxu0 %v4057
    %4097 = vmatprep.subr.bf16.mxu0 %v4060
    %4098 = vmatpush1.bf16.msra.mxu0 %v4059
    %4099 = vmatprep.subr.bf16.mxu0 %v4062
    %4100 = vmatpush1.bf16.msra.mxu0 %v4061
    %4101 = vmatprep.subr.bf16.mxu0 %v4064
    %4102 = vmatpush1.bf16.msra.mxu0 %v4063
    %4103 = vmatprep.mubr.bf16.mxu0 %v4068
    %4104 = vmatmul.mubr.bf16.gmra.mrb[0].mxu0 %v4067
    %v4105 = vpop.f32.mrb[0].mxu0
    %v4106 = vadd.f32 0.0, %v4105
    %v4107 = vpop.f32.mrb[0].mxu0
    %v4108 = vadd.f32 0.0, %v4107
    %v4109 = vpop.f32.mrb[0].mxu0
    %v4110 = vpop.f32.mrb[0].mxu0
    %4111 = vdwg.mxu0
    %4112 = vmatprep.subr.bf16.mxu0 %v4002
    %4113 = vmatpush1.bf16.msra.mxu0 %v4001
    %4114 = vmatprep.subr.bf16.mxu0 %v4004
    %4115 = vmatpush1.bf16.msra.mxu0 %v4003
    %4116 = vmatprep.subr.bf16.mxu0 %v4006
    %4117 = vmatpush1.bf16.msra.mxu0 %v4005
    %4118 = vmatprep.subr.bf16.mxu0 %v4008
    %4119 = vmatpush1.bf16.msra.mxu0 %v4007
    %4120 = vmatprep.subr.bf16.mxu0 %v4010
    %4121 = vmatpush1.bf16.msra.mxu0 %v4009
    %4122 = vmatprep.subr.bf16.mxu0 %v4012
    %4123 = vmatpush1.bf16.msra.mxu0 %v4011
    %4124 = vmatprep.subr.bf16.mxu0 %v4014
    %4125 = vmatpush1.bf16.msra.mxu0 %v4013
    %4126 = vmatprep.subr.bf16.mxu0 %v4016
    %4127 = vmatpush1.bf16.msra.mxu0 %v4015
    %4128 = vmatprep.subr.bf16.mxu0 %v4018
    %4129 = vmatpush1.bf16.msra.mxu0 %v4017
    %4130 = vmatprep.subr.bf16.mxu0 %v4020
    %4131 = vmatpush1.bf16.msra.mxu0 %v4019
    %4132 = vmatprep.subr.bf16.mxu0 %v4022
    %4133 = vmatpush1.bf16.msra.mxu0 %v4021
    %4134 = vmatprep.subr.bf16.mxu0 %v4024
    %4135 = vmatpush1.bf16.msra.mxu0 %v4023
    %4136 = vmatprep.subr.bf16.mxu0 %v4026
    %4137 = vmatpush1.bf16.msra.mxu0 %v4025
    %4138 = vmatprep.subr.bf16.mxu0 %v4028
    %4139 = vmatpush1.bf16.msra.mxu0 %v4027
    %4140 = vmatprep.subr.bf16.mxu0 %v4030
    %4141 = vmatpush1.bf16.msra.mxu0 %v4029
    %4142 = vmatprep.subr.bf16.mxu0 %v4032
    %4143 = vmatpush1.bf16.msra.mxu0 %v4031
    %4144 = vmatprep.mubr.bf16.mxu0 %v3998
    %4145 = vmatmul.mubr.bf16.gmra.mrb[0].mxu0 %v3997
    %v4146 = vpop.f32.mrb[0].mxu0
    %v4147 = vadd.f32 %v4106, %v4146
    %v4148 = vpop.f32.mrb[0].mxu0
    %v4149 = vadd.f32 %v4108, %v4148
    %v4150 = vpop.f32.mrb[0].mxu0
    %v4151 = vpop.f32.mrb[0].mxu0
    %4152 = vdwg.mxu0
    %v4153 = vld [vmem:[#allocation3 + $0x200] sm:$0xff]
    %v4154 = vld [vmem:[#allocation3 + $0x208] sm:$0xff]
    %v4155 = vld [vmem:[#allocation3 + $0x210] sm:$0xff]
    %v4156 = vld [vmem:[#allocation3 + $0x218] sm:$0xff]
    %v4157 = vld [vmem:[#allocation3 + $0x220] sm:$0xff]
    %v4158 = vld [vmem:[#allocation3 + $0x228] sm:$0xff]
    %v4159 = vld [vmem:[#allocation3 + $0x230] sm:$0xff]
    %v4160 = vld [vmem:[#allocation3 + $0x238] sm:$0xff]
    %v4161 = vld [vmem:[#allocation3 + $0x240] sm:$0xff]
    %v4162 = vld [vmem:[#allocation3 + $0x248] sm:$0xff]
    %v4163 = vld [vmem:[#allocation3 + $0x250] sm:$0xff]
    %v4164 = vld [vmem:[#allocation3 + $0x258] sm:$0xff]
    %v4165 = vld [vmem:[#allocation3 + $0x260] sm:$0xff]
    %v4166 = vld [vmem:[#allocation3 + $0x268] sm:$0xff]
    %v4167 = vld [vmem:[#allocation3 + $0x270] sm:$0xff]
    %v4168 = vld [vmem:[#allocation3 + $0x278] sm:$0xff]
    %v4169 = vld [vmem:[#allocation3 + $0x280] sm:$0xff]
    %v4170 = vld [vmem:[#allocation3 + $0x288] sm:$0xff]
    %v4171 = vld [vmem:[#allocation3 + $0x290] sm:$0xff]
    %v4172 = vld [vmem:[#allocation3 + $0x298] sm:$0xff]
    %v4173 = vld [vmem:[#allocation3 + $0x2a0] sm:$0xff]
    %v4174 = vld [vmem:[#allocation3 + $0x2a8] sm:$0xff]
    %v4175 = vld [vmem:[#allocation3 + $0x2b0] sm:$0xff]
    %v4176 = vld [vmem:[#allocation3 + $0x2b8] sm:$0xff]
    %v4177 = vld [vmem:[#allocation3 + $0x2c0] sm:$0xff]
    %v4178 = vld [vmem:[#allocation3 + $0x2c8] sm:$0xff]
    %v4179 = vld [vmem:[#allocation3 + $0x2d0] sm:$0xff]
    %v4180 = vld [vmem:[#allocation3 + $0x2d8] sm:$0xff]
    %v4181 = vld [vmem:[#allocation3 + $0x2e0] sm:$0xff]
    %v4182 = vld [vmem:[#allocation3 + $0x2e8] sm:$0xff]
    %v4183 = vld [vmem:[#allocation3 + $0x2f0] sm:$0xff]
    %v4184 = vld [vmem:[#allocation3 + $0x2f8] sm:$0xff]
    %4185 = vmatprep.subr.bf16.mxu0 %v4154
    %4186 = vmatpush1.bf16.msra.mxu0 %v4153
    %4187 = vmatprep.subr.bf16.mxu0 %v4156
    %4188 = vmatpush1.bf16.msra.mxu0 %v4155
    %4189 = vmatprep.subr.bf16.mxu0 %v4158
    %4190 = vmatpush1.bf16.msra.mxu0 %v4157
    %4191 = vmatprep.subr.bf16.mxu0 %v4160
    %4192 = vmatpush1.bf16.msra.mxu0 %v4159
    %4193 = vmatprep.subr.bf16.mxu0 %v4162
    %4194 = vmatpush1.bf16.msra.mxu0 %v4161
    %4195 = vmatprep.subr.bf16.mxu0 %v4164
    %4196 = vmatpush1.bf16.msra.mxu0 %v4163
    %4197 = vmatprep.subr.bf16.mxu0 %v4166
    %4198 = vmatpush1.bf16.msra.mxu0 %v4165
    %4199 = vmatprep.subr.bf16.mxu0 %v4168
    %4200 = vmatpush1.bf16.msra.mxu0 %v4167
    %4201 = vmatprep.subr.bf16.mxu0 %v4170
    %4202 = vmatpush1.bf16.msra.mxu0 %v4169
    %4203 = vmatprep.subr.bf16.mxu0 %v4172
    %4204 = vmatpush1.bf16.msra.mxu0 %v4171
    %4205 = vmatprep.subr.bf16.mxu0 %v4174
    %4206 = vmatpush1.bf16.msra.mxu0 %v4173
    %4207 = vmatprep.subr.bf16.mxu0 %v4176
    %4208 = vmatpush1.bf16.msra.mxu0 %v4175
    %4209 = vmatprep.subr.bf16.mxu0 %v4178
    %4210 = vmatpush1.bf16.msra.mxu0 %v4177
    %4211 = vmatprep.subr.bf16.mxu0 %v4180
    %4212 = vmatpush1.bf16.msra.mxu0 %v4179
    %4213 = vmatprep.subr.bf16.mxu0 %v4182
    %4214 = vmatpush1.bf16.msra.mxu0 %v4181
    %4215 = vmatprep.subr.bf16.mxu0 %v4184
    %4216 = vmatpush1.bf16.msra.mxu0 %v4183
    %4217 = vmatprep.mubr.bf16.mxu0 %v4000
    %4218 = vmatmul.mubr.bf16.gmra.mrb[0].mxu0 %v3999
    %v4219 = vpop.f32.mrb[0].mxu0
    %v4220 = vadd.f32 0.0, %v4219
    %v4221 = vpop.f32.mrb[0].mxu0
    %v4222 = vadd.f32 0.0, %v4221
    %v4223 = vpop.f32.mrb[0].mxu0
    %v4224 = vpop.f32.mrb[0].mxu0
    %4225 = vdwg.mxu0
    %v4226 = vadd.f32 %v4147, %v4220
    %v4227 = vadd.f32 %v4149, %v4222
    %v4228 = vld [vmem:[#allocation3 + $0x300] sm:$0xff]
    %v4229 = vld [vmem:[#allocation3 + $0x308] sm:$0xff]
    %v4230 = vld [vmem:[#allocation3 + $0x310] sm:$0xff]
    %v4231 = vld [vmem:[#allocation3 + $0x318] sm:$0xff]
    %v4232 = vld [vmem:[#allocation3 + $0x320] sm:$0xff]
    %v4233 = vld [vmem:[#allocation3 + $0x328] sm:$0xff]
    %v4234 = vld [vmem:[#allocation3 + $0x330] sm:$0xff]
    %v4235 = vld [vmem:[#allocation3 + $0x338] sm:$0xff]
    %v4236 = vld [vmem:[#allocation3 + $0x340] sm:$0xff]
    %v4237 = vld [vmem:[#allocation3 + $0x348] sm:$0xff]
    %v4238 = vld [vmem:[#allocation3 + $0x350] sm:$0xff]
    %v4239 = vld [vmem:[#allocation3 + $0x358] sm:$0xff]
    %v4240 = vld [vmem:[#allocation3 + $0x360] sm:$0xff]
    %v4241 = vld [vmem:[#allocation3 + $0x368] sm:$0xff]
    %v4242 = vld [vmem:[#allocation3 + $0x370] sm:$0xff]
    %v4243 = vld [vmem:[#allocation3 + $0x378] sm:$0xff]
    %v4244 = vld [vmem:[#allocation3 + $0x380] sm:$0xff]
    %v4245 = vld [vmem:[#allocation3 + $0x388] sm:$0xff]
    %v4246 = vld [vmem:[#allocation3 + $0x390] sm:$0xff]
    %v4247 = vld [vmem:[#allocation3 + $0x398] sm:$0xff]
    %v4248 = vld [vmem:[#allocation3 + $0x3a0] sm:$0xff]
    %v4249 = vld [vmem:[#allocation3 + $0x3a8] sm:$0xff]
    %v4250 = vld [vmem:[#allocation3 + $0x3b0] sm:$0xff]
    %v4251 = vld [vmem:[#allocation3 + $0x3b8] sm:$0xff]
    %v4252 = vld [vmem:[#allocation3 + $0x3c0] sm:$0xff]
    %v4253 = vld [vmem:[#allocation3 + $0x3c8] sm:$0xff]
    %v4254 = vld [vmem:[#allocation3 + $0x3d0] sm:$0xff]
    %v4255 = vld [vmem:[#allocation3 + $0x3d8] sm:$0xff]
    %v4256 = vld [vmem:[#allocation3 + $0x3e0] sm:$0xff]
    %v4257 = vld [vmem:[#allocation3 + $0x3e8] sm:$0xff]
    %v4258 = vld [vmem:[#allocation3 + $0x3f0] sm:$0xff]
    %v4259 = vld [vmem:[#allocation3 + $0x3f8] sm:$0xff]
    %v4262 = vrot.slane %v3999, 4
    %v4263 = vrot.slane %v4000, 4
    %4266 = vmatprep.subr.bf16.mxu0 %v4229
    %4267 = vmatpush1.bf16.msra.mxu0 %v4228
    %4268 = vmatprep.subr.bf16.mxu0 %v4231
    %4269 = vmatpush1.bf16.msra.mxu0 %v4230
    %4270 = vmatprep.subr.bf16.mxu0 %v4233
    %4271 = vmatpush1.bf16.msra.mxu0 %v4232
    %4272 = vmatprep.subr.bf16.mxu0 %v4235
    %4273 = vmatpush1.bf16.msra.mxu0 %v4234
    %4274 = vmatprep.subr.bf16.mxu0 %v4237
    %4275 = vmatpush1.bf16.msra.mxu0 %v4236
    %4276 = vmatprep.subr.bf16.mxu0 %v4239
    %4277 = vmatpush1.bf16.msra.mxu0 %v4238
    %4278 = vmatprep.subr.bf16.mxu0 %v4241
    %4279 = vmatpush1.bf16.msra.mxu0 %v4240
    %4280 = vmatprep.subr.bf16.mxu0 %v4243
    %4281 = vmatpush1.bf16.msra.mxu0 %v4242
    %4282 = vmatprep.subr.bf16.mxu0 %v4245
    %4283 = vmatpush1.bf16.msra.mxu0 %v4244
    %4284 = vmatprep.subr.bf16.mxu0 %v4247
    %4285 = vmatpush1.bf16.msra.mxu0 %v4246
    %4286 = vmatprep.subr.bf16.mxu0 %v4249
    %4287 = vmatpush1.bf16.msra.mxu0 %v4248
    %4288 = vmatprep.subr.bf16.mxu0 %v4251
    %4289 = vmatpush1.bf16.msra.mxu0 %v4250
    %4290 = vmatprep.subr.bf16.mxu0 %v4253
    %4291 = vmatpush1.bf16.msra.mxu0 %v4252
    %4292 = vmatprep.subr.bf16.mxu0 %v4255
    %4293 = vmatpush1.bf16.msra.mxu0 %v4254
    %4294 = vmatprep.subr.bf16.mxu0 %v4257
    %4295 = vmatpush1.bf16.msra.mxu0 %v4256
    %4296 = vmatprep.subr.bf16.mxu0 %v4259
    %4297 = vmatpush1.bf16.msra.mxu0 %v4258
    %4298 = vmatprep.mubr.bf16.mxu0 %v4263
    %4299 = vmatmul.mubr.bf16.gmra.mrb[0].mxu0 %v4262
    %v4300 = vpop.f32.mrb[0].mxu0
    %v4301 = vadd.f32 0.0, %v4300
    %v4302 = vpop.f32.mrb[0].mxu0
    %v4303 = vadd.f32 0.0, %v4302
    %v4304 = vpop.f32.mrb[0].mxu0
    %v4305 = vpop.f32.mrb[0].mxu0
    %4306 = vdwg.mxu0
    %v4307 = vadd.f32 %v4226, %v4301
    %v4308 = vadd.f32 %v4227, %v4303
    %v4309 = vld [vmem:[%s15] sm:$0x3]
    %v4311 = vlaneseq
    %v4312 = vshrl.u32 %v4311, 7
    %v4313 = vsub.s32 0, %v4312
    %v4314 = vrot.slane %v4309, %v4313
    %v4315 = vlaneseq
    %v4316 = vshrl.u32 %v4315, 7
    %v4317 = vsub.s32 1, %v4316
    %v4318 = vrot.slane %v4309, %v4317
    %v4321 = vadd.f32 %v4307, %v4314
    %v4322 = vadd.f32 %v4308, %v4318
    %v4323 = vmax.f32 %v4321, 0.0
    %v4324 = vmax.f32 %v4322, 0.0
    %v4325 = vpack.c.bf16 %v4323, %v4323
    %v4326 = vpack.c.bf16 %v4324, %v4324
    %s4327 = sshll.u32 %s3914, 4
    %4328 = dma.done %s751, %s4327
    %v4329 = vld [vmem:[%s16] sm:$0xf]
    %v4330 = vld [vmem:[%s16 + $0x4] sm:$0xf]
    %v4331 = vld [vmem:[%s16 + $0x8] sm:$0xf]
    %v4332 = vld [vmem:[%s16 + $0xc] sm:$0xf]
    %v4337 = vunpack.c.l.b16 %v4329
    %v4338 = vunpack.c.l.b16 %v4330
    %v4339 = vunpack.c.l.b16 %v4331
    %v4340 = vunpack.c.l.b16 %v4332
    %v4341 = vpack.c.b16 %v4338, %v4337
    %v4342 = vpack.c.b16 %v4340, %v4339
    %vm4343 = vcmask 64512
    %v4345 = vsel %vm4343, %v4341, 0
    %v4348 = vsel %vm4343, %v4342, 0
    %v4351 = vsel %vm1224, %v4325, 0
    %v4354 = vsel %vm1224, %v4326, 0
    %4356 = vmatprep.subr.bf16.mxu0 %v4354
    %4357 = vmatpush1.bf16.msra.mxu0 %v4351
    %4358 = vmatprep.subr.bf16.mxu0 0
    %4359 = vmatpush1.bf16.msra.mxu0 0
    %4360 = vmatprep.subr.bf16.mxu0 0
    %4361 = vmatpush1.bf16.msra.mxu0 0
    %4362 = vmatprep.subr.bf16.mxu0 0
    %4363 = vmatpush1.bf16.msra.mxu0 0
    %4364 = vmatprep.subr.bf16.mxu0 0
    %4365 = vmatpush1.bf16.msra.mxu0 0
    %4366 = vmatprep.subr.bf16.mxu0 0
    %4367 = vmatpush1.bf16.msra.mxu0 0
    %4368 = vmatprep.subr.bf16.mxu0 0
    %4369 = vmatpush1.bf16.msra.mxu0 0
    %4370 = vmatprep.subr.bf16.mxu0 0
    %4371 = vmatpush1.bf16.msra.mxu0 0
    %4372 = vmatprep.subr.bf16.mxu0 0
    %4373 = vmatpush1.bf16.msra.mxu0 0
    %4374 = vmatprep.subr.bf16.mxu0 0
    %4375 = vmatpush1.bf16.msra.mxu0 0
    %4376 = vmatprep.subr.bf16.mxu0 0
    %4377 = vmatpush1.bf16.msra.mxu0 0
    %4378 = vmatprep.subr.bf16.mxu0 0
    %4379 = vmatpush1.bf16.msra.mxu0 0
    %4380 = vmatprep.subr.bf16.mxu0 0
    %4381 = vmatpush1.bf16.msra.mxu0 0
    %4382 = vmatprep.subr.bf16.mxu0 0
    %4383 = vmatpush1.bf16.msra.mxu0 0
    %4384 = vmatprep.subr.bf16.mxu0 0
    %4385 = vmatpush1.bf16.msra.mxu0 0
    %4386 = vmatprep.subr.bf16.mxu0 0
    %4387 = vmatpush1.bf16.msra.mxu0 0
    %4388 = vmatprep.mubr.bf16.mxu0 0
    %4389 = vmatmul.mubr.bf16.gmra.mrb[0].mxu0 %v4345
    %v4390 = vpop.f32.mrb[0].mxu0
    %v4391 = vadd.f32 0.0, %v4390
    %v4392 = vpop.f32.mrb[0].mxu0
    %v4393 = vadd.f32 0.0, %v4392
    %v4394 = vpop.f32.mrb[0].mxu0
    %v4395 = vadd.f32 0.0, %v4394
    %v4396 = vpop.f32.mrb[0].mxu0
    %v4397 = vadd.f32 0.0, %v4396
    %4398 = vmatprep.mubr.bf16.mxu0 0
    %4399 = vmatmul.mubr.bf16.gmra.mrb[0].mxu0 %v4348
    %v4400 = vpop.f32.mrb[0].mxu0
    %v4401 = vadd.f32 0.0, %v4400
    %v4402 = vpop.f32.mrb[0].mxu0
    %v4403 = vadd.f32 0.0, %v4402
    %v4404 = vpop.f32.mrb[0].mxu0
    %v4405 = vadd.f32 0.0, %v4404
    %v4406 = vpop.f32.mrb[0].mxu0
    %v4407 = vadd.f32 0.0, %v4406
    %4408 = vdwg.mxu0
    %v4409 = vpack.c.bf16 %v4395, %v4391
    %v4410 = vpack.c.bf16 %v4397, %v4393
    %v4411 = vpack.c.bf16 %v4405, %v4401
    %v4412 = vpack.c.bf16 %v4407, %v4403
    %v4413 = vld [vmem:[#allocation4] sm:$0xff]
    %v4414 = vld [vmem:[#allocation4 + $0x8] sm:$0xff]
    %v4415 = vld [vmem:[#allocation4 + $0x10] sm:$0xff]
    %v4416 = vld [vmem:[#allocation4 + $0x18] sm:$0xff]
    %v4417 = vld [vmem:[#allocation4 + $0x20] sm:$0xff]
    %v4418 = vld [vmem:[#allocation4 + $0x28] sm:$0xff]
    %v4419 = vld [vmem:[#allocation4 + $0x30] sm:$0xff]
    %v4420 = vld [vmem:[#allocation4 + $0x38] sm:$0xff]
    %v4421 = vld [vmem:[#allocation4 + $0x40] sm:$0xff]
    %v4422 = vld [vmem:[#allocation4 + $0x48] sm:$0xff]
    %v4423 = vld [vmem:[#allocation4 + $0x50] sm:$0xff]
    %v4424 = vld [vmem:[#allocation4 + $0x58] sm:$0xff]
    %v4425 = vld [vmem:[#allocation4 + $0x60] sm:$0xff]
    %v4426 = vld [vmem:[#allocation4 + $0x68] sm:$0xff]
    %v4427 = vld [vmem:[#allocation4 + $0x70] sm:$0xff]
    %v4428 = vld [vmem:[#allocation4 + $0x78] sm:$0xff]
    %v4429 = vld [vmem:[#allocation4 + $0x80] sm:$0xff]
    %v4430 = vld [vmem:[#allocation4 + $0x88] sm:$0xff]
    %v4431 = vld [vmem:[#allocation4 + $0x90] sm:$0xff]
    %v4432 = vld [vmem:[#allocation4 + $0x98] sm:$0xff]
    %v4433 = vld [vmem:[#allocation4 + $0xa0] sm:$0xff]
    %v4434 = vld [vmem:[#allocation4 + $0xa8] sm:$0xff]
    %v4435 = vld [vmem:[#allocation4 + $0xb0] sm:$0xff]
    %v4436 = vld [vmem:[#allocation4 + $0xb8] sm:$0xff]
    %v4437 = vld [vmem:[#allocation4 + $0xc0] sm:$0xff]
    %v4438 = vld [vmem:[#allocation4 + $0xc8] sm:$0xff]
    %v4439 = vld [vmem:[#allocation4 + $0xd0] sm:$0xff]
    %v4440 = vld [vmem:[#allocation4 + $0xd8] sm:$0xff]
    %v4441 = vld [vmem:[#allocation4 + $0xe0] sm:$0xff]
    %v4442 = vld [vmem:[#allocation4 + $0xe8] sm:$0xff]
    %v4443 = vld [vmem:[#allocation4 + $0xf0] sm:$0xff]
    %v4444 = vld [vmem:[#allocation4 + $0xf8] sm:$0xff]
    %v4445 = vld [vmem:[#allocation4 + $0x100] sm:$0xff]
    %v4446 = vld [vmem:[#allocation4 + $0x108] sm:$0xff]
    %v4447 = vld [vmem:[#allocation4 + $0x110] sm:$0xff]
    %v4448 = vld [vmem:[#allocation4 + $0x118] sm:$0xff]
    %v4449 = vld [vmem:[#allocation4 + $0x120] sm:$0xff]
    %v4450 = vld [vmem:[#allocation4 + $0x128] sm:$0xff]
    %v4451 = vld [vmem:[#allocation4 + $0x130] sm:$0xff]
    %v4452 = vld [vmem:[#allocation4 + $0x138] sm:$0xff]
    %v4453 = vld [vmem:[#allocation4 + $0x140] sm:$0xff]
    %v4454 = vld [vmem:[#allocation4 + $0x148] sm:$0xff]
    %v4455 = vld [vmem:[#allocation4 + $0x150] sm:$0xff]
    %v4456 = vld [vmem:[#allocation4 + $0x158] sm:$0xff]
    %v4457 = vld [vmem:[#allocation4 + $0x160] sm:$0xff]
    %v4458 = vld [vmem:[#allocation4 + $0x168] sm:$0xff]
    %v4459 = vld [vmem:[#allocation4 + $0x170] sm:$0xff]
    %v4460 = vld [vmem:[#allocation4 + $0x178] sm:$0xff]
    %v4461 = vld [vmem:[#allocation4 + $0x180] sm:$0xff]
    %v4462 = vld [vmem:[#allocation4 + $0x188] sm:$0xff]
    %v4463 = vld [vmem:[#allocation4 + $0x190] sm:$0xff]
    %v4464 = vld [vmem:[#allocation4 + $0x198] sm:$0xff]
    %v4465 = vld [vmem:[#allocation4 + $0x1a0] sm:$0xff]
    %v4466 = vld [vmem:[#allocation4 + $0x1a8] sm:$0xff]
    %v4467 = vld [vmem:[#allocation4 + $0x1b0] sm:$0xff]
    %v4468 = vld [vmem:[#allocation4 + $0x1b8] sm:$0xff]
    %v4469 = vld [vmem:[#allocation4 + $0x1c0] sm:$0xff]
    %v4470 = vld [vmem:[#allocation4 + $0x1c8] sm:$0xff]
    %v4471 = vld [vmem:[#allocation4 + $0x1d0] sm:$0xff]
    %v4472 = vld [vmem:[#allocation4 + $0x1d8] sm:$0xff]
    %v4473 = vld [vmem:[#allocation4 + $0x1e0] sm:$0xff]
    %v4474 = vld [vmem:[#allocation4 + $0x1e8] sm:$0xff]
    %v4475 = vld [vmem:[#allocation4 + $0x1f0] sm:$0xff]
    %v4476 = vld [vmem:[#allocation4 + $0x1f8] sm:$0xff]
    %v4479 = vrot.slane %v4409, 4
    %v4480 = vrot.slane %v4410, 4
    %4483 = vmatprep.subr.bf16.mxu0 %v4446
    %4484 = vmatpush1.bf16.msra.mxu0 %v4445
    %4485 = vmatprep.subr.bf16.mxu0 %v4448
    %4486 = vmatpush1.bf16.msra.mxu0 %v4447
    %4487 = vmatprep.subr.bf16.mxu0 %v4450
    %4488 = vmatpush1.bf16.msra.mxu0 %v4449
    %4489 = vmatprep.subr.bf16.mxu0 %v4452
    %4490 = vmatpush1.bf16.msra.mxu0 %v4451
    %4491 = vmatprep.subr.bf16.mxu0 %v4454
    %4492 = vmatpush1.bf16.msra.mxu0 %v4453
    %4493 = vmatprep.subr.bf16.mxu0 %v4456
    %4494 = vmatpush1.bf16.msra.mxu0 %v4455
    %4495 = vmatprep.subr.bf16.mxu0 %v4458
    %4496 = vmatpush1.bf16.msra.mxu0 %v4457
    %4497 = vmatprep.subr.bf16.mxu0 %v4460
    %4498 = vmatpush1.bf16.msra.mxu0 %v4459
    %4499 = vmatprep.subr.bf16.mxu0 %v4462
    %4500 = vmatpush1.bf16.msra.mxu0 %v4461
    %4501 = vmatprep.subr.bf16.mxu0 %v4464
    %4502 = vmatpush1.bf16.msra.mxu0 %v4463
    %4503 = vmatprep.subr.bf16.mxu0 %v4466
    %4504 = vmatpush1.bf16.msra.mxu0 %v4465
    %4505 = vmatprep.subr.bf16.mxu0 %v4468
    %4506 = vmatpush1.bf16.msra.mxu0 %v4467
    %4507 = vmatprep.subr.bf16.mxu0 %v4470
    %4508 = vmatpush1.bf16.msra.mxu0 %v4469
    %4509 = vmatprep.subr.bf16.mxu0 %v4472
    %4510 = vmatpush1.bf16.msra.mxu0 %v4471
    %4511 = vmatprep.subr.bf16.mxu0 %v4474
    %4512 = vmatpush1.bf16.msra.mxu0 %v4473
    %4513 = vmatprep.subr.bf16.mxu0 %v4476
    %4514 = vmatpush1.bf16.msra.mxu0 %v4475
    %4515 = vmatprep.mubr.bf16.mxu0 %v4480
    %4516 = vmatmul.mubr.bf16.gmra.mrb[0].mxu0 %v4479
    %v4517 = vpop.f32.mrb[0].mxu0
    %v4518 = vadd.f32 0.0, %v4517
    %v4519 = vpop.f32.mrb[0].mxu0
    %v4520 = vadd.f32 0.0, %v4519
    %v4521 = vpop.f32.mrb[0].mxu0
    %v4522 = vpop.f32.mrb[0].mxu0
    %4523 = vdwg.mxu0
    %4524 = vmatprep.subr.bf16.mxu0 %v4414
    %4525 = vmatpush1.bf16.msra.mxu0 %v4413
    %4526 = vmatprep.subr.bf16.mxu0 %v4416
    %4527 = vmatpush1.bf16.msra.mxu0 %v4415
    %4528 = vmatprep.subr.bf16.mxu0 %v4418
    %4529 = vmatpush1.bf16.msra.mxu0 %v4417
    %4530 = vmatprep.subr.bf16.mxu0 %v4420
    %4531 = vmatpush1.bf16.msra.mxu0 %v4419
    %4532 = vmatprep.subr.bf16.mxu0 %v4422
    %4533 = vmatpush1.bf16.msra.mxu0 %v4421
    %4534 = vmatprep.subr.bf16.mxu0 %v4424
    %4535 = vmatpush1.bf16.msra.mxu0 %v4423
    %4536 = vmatprep.subr.bf16.mxu0 %v4426
    %4537 = vmatpush1.bf16.msra.mxu0 %v4425
    %4538 = vmatprep.subr.bf16.mxu0 %v4428
    %4539 = vmatpush1.bf16.msra.mxu0 %v4427
    %4540 = vmatprep.subr.bf16.mxu0 %v4430
    %4541 = vmatpush1.bf16.msra.mxu0 %v4429
    %4542 = vmatprep.subr.bf16.mxu0 %v4432
    %4543 = vmatpush1.bf16.msra.mxu0 %v4431
    %4544 = vmatprep.subr.bf16.mxu0 %v4434
    %4545 = vmatpush1.bf16.msra.mxu0 %v4433
    %4546 = vmatprep.subr.bf16.mxu0 %v4436
    %4547 = vmatpush1.bf16.msra.mxu0 %v4435
    %4548 = vmatprep.subr.bf16.mxu0 %v4438
    %4549 = vmatpush1.bf16.msra.mxu0 %v4437
    %4550 = vmatprep.subr.bf16.mxu0 %v4440
    %4551 = vmatpush1.bf16.msra.mxu0 %v4439
    %4552 = vmatprep.subr.bf16.mxu0 %v4442
    %4553 = vmatpush1.bf16.msra.mxu0 %v4441
    %4554 = vmatprep.subr.bf16.mxu0 %v4444
    %4555 = vmatpush1.bf16.msra.mxu0 %v4443
    %4556 = vmatprep.mubr.bf16.mxu0 %v4410
    %4557 = vmatmul.mubr.bf16.gmra.mrb[0].mxu0 %v4409
    %v4558 = vpop.f32.mrb[0].mxu0
    %v4559 = vadd.f32 %v4518, %v4558
    %v4560 = vpop.f32.mrb[0].mxu0
    %v4561 = vadd.f32 %v4520, %v4560
    %v4562 = vpop.f32.mrb[0].mxu0
    %v4563 = vpop.f32.mrb[0].mxu0
    %4564 = vdwg.mxu0
    %v4565 = vld [vmem:[#allocation4 + $0x200] sm:$0xff]
    %v4566 = vld [vmem:[#allocation4 + $0x208] sm:$0xff]
    %v4567 = vld [vmem:[#allocation4 + $0x210] sm:$0xff]
    %v4568 = vld [vmem:[#allocation4 + $0x218] sm:$0xff]
    %v4569 = vld [vmem:[#allocation4 + $0x220] sm:$0xff]
    %v4570 = vld [vmem:[#allocation4 + $0x228] sm:$0xff]
    %v4571 = vld [vmem:[#allocation4 + $0x230] sm:$0xff]
    %v4572 = vld [vmem:[#allocation4 + $0x238] sm:$0xff]
    %v4573 = vld [vmem:[#allocation4 + $0x240] sm:$0xff]
    %v4574 = vld [vmem:[#allocation4 + $0x248] sm:$0xff]
    %v4575 = vld [vmem:[#allocation4 + $0x250] sm:$0xff]
    %v4576 = vld [vmem:[#allocation4 + $0x258] sm:$0xff]
    %v4577 = vld [vmem:[#allocation4 + $0x260] sm:$0xff]
    %v4578 = vld [vmem:[#allocation4 + $0x268] sm:$0xff]
    %v4579 = vld [vmem:[#allocation4 + $0x270] sm:$0xff]
    %v4580 = vld [vmem:[#allocation4 + $0x278] sm:$0xff]
    %v4581 = vld [vmem:[#allocation4 + $0x280] sm:$0xff]
    %v4582 = vld [vmem:[#allocation4 + $0x288] sm:$0xff]
    %v4583 = vld [vmem:[#allocation4 + $0x290] sm:$0xff]
    %v4584 = vld [vmem:[#allocation4 + $0x298] sm:$0xff]
    %v4585 = vld [vmem:[#allocation4 + $0x2a0] sm:$0xff]
    %v4586 = vld [vmem:[#allocation4 + $0x2a8] sm:$0xff]
    %v4587 = vld [vmem:[#allocation4 + $0x2b0] sm:$0xff]
    %v4588 = vld [vmem:[#allocation4 + $0x2b8] sm:$0xff]
    %v4589 = vld [vmem:[#allocation4 + $0x2c0] sm:$0xff]
    %v4590 = vld [vmem:[#allocation4 + $0x2c8] sm:$0xff]
    %v4591 = vld [vmem:[#allocation4 + $0x2d0] sm:$0xff]
    %v4592 = vld [vmem:[#allocation4 + $0x2d8] sm:$0xff]
    %v4593 = vld [vmem:[#allocation4 + $0x2e0] sm:$0xff]
    %v4594 = vld [vmem:[#allocation4 + $0x2e8] sm:$0xff]
    %v4595 = vld [vmem:[#allocation4 + $0x2f0] sm:$0xff]
    %v4596 = vld [vmem:[#allocation4 + $0x2f8] sm:$0xff]
    %4597 = vmatprep.subr.bf16.mxu0 %v4566
    %4598 = vmatpush1.bf16.msra.mxu0 %v4565
    %4599 = vmatprep.subr.bf16.mxu0 %v4568
    %4600 = vmatpush1.bf16.msra.mxu0 %v4567
    %4601 = vmatprep.subr.bf16.mxu0 %v4570
    %4602 = vmatpush1.bf16.msra.mxu0 %v4569
    %4603 = vmatprep.subr.bf16.mxu0 %v4572
    %4604 = vmatpush1.bf16.msra.mxu0 %v4571
    %4605 = vmatprep.subr.bf16.mxu0 %v4574
    %4606 = vmatpush1.bf16.msra.mxu0 %v4573
    %4607 = vmatprep.subr.bf16.mxu0 %v4576
    %4608 = vmatpush1.bf16.msra.mxu0 %v4575
    %4609 = vmatprep.subr.bf16.mxu0 %v4578
    %4610 = vmatpush1.bf16.msra.mxu0 %v4577
    %4611 = vmatprep.subr.bf16.mxu0 %v4580
    %4612 = vmatpush1.bf16.msra.mxu0 %v4579
    %4613 = vmatprep.subr.bf16.mxu0 %v4582
    %4614 = vmatpush1.bf16.msra.mxu0 %v4581
    %4615 = vmatprep.subr.bf16.mxu0 %v4584
    %4616 = vmatpush1.bf16.msra.mxu0 %v4583
    %4617 = vmatprep.subr.bf16.mxu0 %v4586
    %4618 = vmatpush1.bf16.msra.mxu0 %v4585
    %4619 = vmatprep.subr.bf16.mxu0 %v4588
    %4620 = vmatpush1.bf16.msra.mxu0 %v4587
    %4621 = vmatprep.subr.bf16.mxu0 %v4590
    %4622 = vmatpush1.bf16.msra.mxu0 %v4589
    %4623 = vmatprep.subr.bf16.mxu0 %v4592
    %4624 = vmatpush1.bf16.msra.mxu0 %v4591
    %4625 = vmatprep.subr.bf16.mxu0 %v4594
    %4626 = vmatpush1.bf16.msra.mxu0 %v4593
    %4627 = vmatprep.subr.bf16.mxu0 %v4596
    %4628 = vmatpush1.bf16.msra.mxu0 %v4595
    %4629 = vmatprep.mubr.bf16.mxu0 %v4412
    %4630 = vmatmul.mubr.bf16.gmra.mrb[0].mxu0 %v4411
    %v4631 = vpop.f32.mrb[0].mxu0
    %v4632 = vadd.f32 0.0, %v4631
    %v4633 = vpop.f32.mrb[0].mxu0
    %v4634 = vadd.f32 0.0, %v4633
    %v4635 = vpop.f32.mrb[0].mxu0
    %v4636 = vpop.f32.mrb[0].mxu0
    %4637 = vdwg.mxu0
    %v4638 = vadd.f32 %v4559, %v4632
    %v4639 = vadd.f32 %v4561, %v4634
    %v4640 = vld [vmem:[#allocation4 + $0x300] sm:$0xff]
    %v4641 = vld [vmem:[#allocation4 + $0x308] sm:$0xff]
    %v4642 = vld [vmem:[#allocation4 + $0x310] sm:$0xff]
    %v4643 = vld [vmem:[#allocation4 + $0x318] sm:$0xff]
    %v4644 = vld [vmem:[#allocation4 + $0x320] sm:$0xff]
    %v4645 = vld [vmem:[#allocation4 + $0x328] sm:$0xff]
    %v4646 = vld [vmem:[#allocation4 + $0x330] sm:$0xff]
    %v4647 = vld [vmem:[#allocation4 + $0x338] sm:$0xff]
    %v4648 = vld [vmem:[#allocation4 + $0x340] sm:$0xff]
    %v4649 = vld [vmem:[#allocation4 + $0x348] sm:$0xff]
    %v4650 = vld [vmem:[#allocation4 + $0x350] sm:$0xff]
    %v4651 = vld [vmem:[#allocation4 + $0x358] sm:$0xff]
    %v4652 = vld [vmem:[#allocation4 + $0x360] sm:$0xff]
    %v4653 = vld [vmem:[#allocation4 + $0x368] sm:$0xff]
    %v4654 = vld [vmem:[#allocation4 + $0x370] sm:$0xff]
    %v4655 = vld [vmem:[#allocation4 + $0x378] sm:$0xff]
    %v4656 = vld [vmem:[#allocation4 + $0x380] sm:$0xff]
    %v4657 = vld [vmem:[#allocation4 + $0x388] sm:$0xff]
    %v4658 = vld [vmem:[#allocation4 + $0x390] sm:$0xff]
    %v4659 = vld [vmem:[#allocation4 + $0x398] sm:$0xff]
    %v4660 = vld [vmem:[#allocation4 + $0x3a0] sm:$0xff]
    %v4661 = vld [vmem:[#allocation4 + $0x3a8] sm:$0xff]
    %v4662 = vld [vmem:[#allocation4 + $0x3b0] sm:$0xff]
    %v4663 = vld [vmem:[#allocation4 + $0x3b8] sm:$0xff]
    %v4664 = vld [vmem:[#allocation4 + $0x3c0] sm:$0xff]
    %v4665 = vld [vmem:[#allocation4 + $0x3c8] sm:$0xff]
    %v4666 = vld [vmem:[#allocation4 + $0x3d0] sm:$0xff]
    %v4667 = vld [vmem:[#allocation4 + $0x3d8] sm:$0xff]
    %v4668 = vld [vmem:[#allocation4 + $0x3e0] sm:$0xff]
    %v4669 = vld [vmem:[#allocation4 + $0x3e8] sm:$0xff]
    %v4670 = vld [vmem:[#allocation4 + $0x3f0] sm:$0xff]
    %v4671 = vld [vmem:[#allocation4 + $0x3f8] sm:$0xff]
    %v4674 = vrot.slane %v4411, 4
    %v4675 = vrot.slane %v4412, 4
    %4678 = vmatprep.subr.bf16.mxu0 %v4641
    %4679 = vmatpush1.bf16.msra.mxu0 %v4640
    %4680 = vmatprep.subr.bf16.mxu0 %v4643
    %4681 = vmatpush1.bf16.msra.mxu0 %v4642
    %4682 = vmatprep.subr.bf16.mxu0 %v4645
    %4683 = vmatpush1.bf16.msra.mxu0 %v4644
    %4684 = vmatprep.subr.bf16.mxu0 %v4647
    %4685 = vmatpush1.bf16.msra.mxu0 %v4646
    %4686 = vmatprep.subr.bf16.mxu0 %v4649
    %4687 = vmatpush1.bf16.msra.mxu0 %v4648
    %4688 = vmatprep.subr.bf16.mxu0 %v4651
    %4689 = vmatpush1.bf16.msra.mxu0 %v4650
    %4690 = vmatprep.subr.bf16.mxu0 %v4653
    %4691 = vmatpush1.bf16.msra.mxu0 %v4652
    %4692 = vmatprep.subr.bf16.mxu0 %v4655
    %4693 = vmatpush1.bf16.msra.mxu0 %v4654
    %4694 = vmatprep.subr.bf16.mxu0 %v4657
    %4695 = vmatpush1.bf16.msra.mxu0 %v4656
    %4696 = vmatprep.subr.bf16.mxu0 %v4659
    %4697 = vmatpush1.bf16.msra.mxu0 %v4658
    %4698 = vmatprep.subr.bf16.mxu0 %v4661
    %4699 = vmatpush1.bf16.msra.mxu0 %v4660
    %4700 = vmatprep.subr.bf16.mxu0 %v4663
    %4701 = vmatpush1.bf16.msra.mxu0 %v4662
    %4702 = vmatprep.subr.bf16.mxu0 %v4665
    %4703 = vmatpush1.bf16.msra.mxu0 %v4664
    %4704 = vmatprep.subr.bf16.mxu0 %v4667
    %4705 = vmatpush1.bf16.msra.mxu0 %v4666
    %4706 = vmatprep.subr.bf16.mxu0 %v4669
    %4707 = vmatpush1.bf16.msra.mxu0 %v4668
    %4708 = vmatprep.subr.bf16.mxu0 %v4671
    %4709 = vmatpush1.bf16.msra.mxu0 %v4670
    %4710 = vmatprep.mubr.bf16.mxu0 %v4675
    %4711 = vmatmul.mubr.bf16.gmra.mrb[0].mxu0 %v4674
    %v4712 = vpop.f32.mrb[0].mxu0
    %v4713 = vadd.f32 0.0, %v4712
    %v4714 = vpop.f32.mrb[0].mxu0
    %v4715 = vadd.f32 0.0, %v4714
    %v4716 = vpop.f32.mrb[0].mxu0
    %v4717 = vpop.f32.mrb[0].mxu0
    %4718 = vdwg.mxu0
    %v4719 = vadd.f32 %v4638, %v4713
    %v4720 = vadd.f32 %v4639, %v4715
    %v4721 = vld [vmem:[%s17] sm:$0x3]
    %v4723 = vlaneseq
    %v4724 = vshrl.u32 %v4723, 7
    %v4725 = vsub.s32 0, %v4724
    %v4726 = vrot.slane %v4721, %v4725
    %v4727 = vlaneseq
    %v4728 = vshrl.u32 %v4727, 7
    %v4729 = vsub.s32 1, %v4728
    %v4730 = vrot.slane %v4721, %v4729
    %v4733 = vadd.f32 %v4719, %v4726
    %v4734 = vadd.f32 %v4720, %v4730
    %v4735 = vmax.f32 %v4733, 0.0
    %v4736 = vmax.f32 %v4734, 0.0
    %v4737 = vpack.c.bf16 %v4735, %v4735
    %v4738 = vpack.c.bf16 %v4736, %v4736
    %s4739 = smul.u32 4, 32
    %s4740 = smul.u32 %s4739, 1
    %s4741 = sshll.u32 %s4740, 4
    %4742 = dma.done %s786, %s4741
    %v4743 = vld [vmem:[#allocation5] sm:$0xff]
    %v4744 = vld [vmem:[#allocation5 + $0x8] sm:$0xff]
    %v4745 = vld [vmem:[#allocation5 + $0x10] sm:$0xff]
    %v4746 = vld [vmem:[#allocation5 + $0x18] sm:$0xff]
    %v4747 = vld [vmem:[#allocation5 + $0x20] sm:$0xff]
    %v4748 = vld [vmem:[#allocation5 + $0x28] sm:$0xff]
    %v4749 = vld [vmem:[#allocation5 + $0x30] sm:$0xff]
    %v4750 = vld [vmem:[#allocation5 + $0x38] sm:$0xff]
    %v4751 = vld [vmem:[#allocation5 + $0x40] sm:$0xff]
    %v4752 = vld [vmem:[#allocation5 + $0x48] sm:$0xff]
    %v4753 = vld [vmem:[#allocation5 + $0x50] sm:$0xff]
    %v4754 = vld [vmem:[#allocation5 + $0x58] sm:$0xff]
    %v4755 = vld [vmem:[#allocation5 + $0x60] sm:$0xff]
    %v4756 = vld [vmem:[#allocation5 + $0x68] sm:$0xff]
    %v4757 = vld [vmem:[#allocation5 + $0x70] sm:$0xff]
    %v4758 = vld [vmem:[#allocation5 + $0x78] sm:$0xff]
    %v4759 = vld [vmem:[%s18] sm:$0x1]
    %v4761 = vlaneseq
    %v4762 = vshrl.u32 %v4761, 7
    %v4763 = vsub.s32 0, %v4762
    %v4764 = vrot.slane %v4759, %v4763
    %4766 = vmatprep.subr.bf16.mxu0 0
    %4767 = vmatpush1.bf16.msra.mxu0 %v4743
    %4768 = vmatprep.subr.bf16.mxu0 0
    %4769 = vmatpush1.bf16.msra.mxu0 %v4744
    %4770 = vmatprep.subr.bf16.mxu0 0
    %4771 = vmatpush1.bf16.msra.mxu0 %v4745
    %4772 = vmatprep.subr.bf16.mxu0 0
    %4773 = vmatpush1.bf16.msra.mxu0 %v4746
    %4774 = vmatprep.subr.bf16.mxu0 0
    %4775 = vmatpush1.bf16.msra.mxu0 %v4747
    %4776 = vmatprep.subr.bf16.mxu0 0
    %4777 = vmatpush1.bf16.msra.mxu0 %v4748
    %4778 = vmatprep.subr.bf16.mxu0 0
    %4779 = vmatpush1.bf16.msra.mxu0 %v4749
    %4780 = vmatprep.subr.bf16.mxu0 0
    %4781 = vmatpush1.bf16.msra.mxu0 %v4750
    %4782 = vmatprep.subr.bf16.mxu0 0
    %4783 = vmatpush1.bf16.msra.mxu0 %v4751
    %4784 = vmatprep.subr.bf16.mxu0 0
    %4785 = vmatpush1.bf16.msra.mxu0 %v4752
    %4786 = vmatprep.subr.bf16.mxu0 0
    %4787 = vmatpush1.bf16.msra.mxu0 %v4753
    %4788 = vmatprep.subr.bf16.mxu0 0
    %4789 = vmatpush1.bf16.msra.mxu0 %v4754
    %4790 = vmatprep.subr.bf16.mxu0 0
    %4791 = vmatpush1.bf16.msra.mxu0 %v4755
    %4792 = vmatprep.subr.bf16.mxu0 0
    %4793 = vmatpush1.bf16.msra.mxu0 %v4756
    %4794 = vmatprep.subr.bf16.mxu0 0
    %4795 = vmatpush1.bf16.msra.mxu0 %v4757
    %4796 = vmatprep.subr.bf16.mxu0 0
    %4797 = vmatpush1.bf16.msra.mxu0 %v4758
    %4798 = vmatprep.mubr.bf16.mxu0 %v4738
    %4799 = vmatmul.mubr.bf16.gmra.mrb[0].mxu0 %v4737
    %v4800 = vpop.f32.mrb[0].mxu0
    %v4801 = vadd.f32 %v4764, %v4800
    %v4802 = vpop.f32.mrb[0].mxu0
    %v4803 = vpop.f32.mrb[0].mxu0
    %v4804 = vpop.f32.mrb[0].mxu0
    %4805 = vdwg.mxu0
    %v4806 = vmax.f32 %v4801, 0.0
    %v4807 = vpack.c.bf16 %v4806, %v4806
    %s4808 = smul.u32 4, 16
    %s4809 = smul.u32 %s4808, 1
    %s4810 = sshll.u32 %s4809, 4
    %4811 = dma.done %s798, %s4810
    %v4812 = vld [vmem:[#allocation6] sm:$0xff]
    %v4813 = vld [vmem:[#allocation6 + $0x8] sm:$0xff]
    %v4814 = vld [vmem:[#allocation6 + $0x10] sm:$0xff]
    %v4815 = vld [vmem:[#allocation6 + $0x18] sm:$0xff]
    %v4816 = vld [vmem:[#allocation6 + $0x20] sm:$0xff]
    %v4817 = vld [vmem:[#allocation6 + $0x28] sm:$0xff]
    %v4818 = vld [vmem:[#allocation6 + $0x30] sm:$0xff]
    %v4819 = vld [vmem:[#allocation6 + $0x38] sm:$0xff]
    %v4820 = vld [vmem:[%s19] sm:$0x1]
    %v4822 = vlaneseq
    %v4823 = vshrl.u32 %v4822, 7
    %v4824 = vsub.s32 0, %v4823
    %v4825 = vrot.slane %v4820, %v4824
    %4827 = vmatprep.subr.bf16.mxu0 0
    %4828 = vmatpush1.bf16.msra.mxu0 %v4812
    %4829 = vmatprep.subr.bf16.mxu0 0
    %4830 = vmatpush1.bf16.msra.mxu0 %v4813
    %4831 = vmatprep.subr.bf16.mxu0 0
    %4832 = vmatpush1.bf16.msra.mxu0 %v4814
    %4833 = vmatprep.subr.bf16.mxu0 0
    %4834 = vmatpush1.bf16.msra.mxu0 %v4815
    %4835 = vmatprep.subr.bf16.mxu0 0
    %4836 = vmatpush1.bf16.msra.mxu0 %v4816
    %4837 = vmatprep.subr.bf16.mxu0 0
    %4838 = vmatpush1.bf16.msra.mxu0 %v4817
    %4839 = vmatprep.subr.bf16.mxu0 0
    %4840 = vmatpush1.bf16.msra.mxu0 %v4818
    %4841 = vmatprep.subr.bf16.mxu0 0
    %4842 = vmatpush1.bf16.msra.mxu0 %v4819
    %4843 = vmatprep.subr.bf16.mxu0 0
    %4844 = vmatpush1.bf16.msra.mxu0 0
    %4845 = vmatprep.subr.bf16.mxu0 0
    %4846 = vmatpush1.bf16.msra.mxu0 0
    %4847 = vmatprep.subr.bf16.mxu0 0
    %4848 = vmatpush1.bf16.msra.mxu0 0
    %4849 = vmatprep.subr.bf16.mxu0 0
    %4850 = vmatpush1.bf16.msra.mxu0 0
    %4851 = vmatprep.subr.bf16.mxu0 0
    %4852 = vmatpush1.bf16.msra.mxu0 0
    %4853 = vmatprep.subr.bf16.mxu0 0
    %4854 = vmatpush1.bf16.msra.mxu0 0
    %4855 = vmatprep.subr.bf16.mxu0 0
    %4856 = vmatpush1.bf16.msra.mxu0 0
    %4857 = vmatprep.subr.bf16.mxu0 0
    %4858 = vmatpush1.bf16.msra.mxu0 0
    %4859 = vmatprep.mubr.bf16.mxu0 0
    %4860 = vmatmul.mubr.bf16.gmra.mrb[0].mxu0 %v4807
    %v4861 = vpop.f32.mrb[0].mxu0
    %v4862 = vadd.f32 %v4825, %v4861
    %v4863 = vpop.f32.mrb[0].mxu0
    %v4864 = vpop.f32.mrb[0].mxu0
    %v4865 = vpop.f32.mrb[0].mxu0
    %4866 = vdwg.mxu0
    %vm4867 = vcmask 517120
    %4868 = vst.msk [vmem:[#allocation20] sm:$0x3] %vm4867, %v4862
    // Predicated region
    $region185: #{cnn_forward.1} parent=1 // pred_check
      _
    $region186: #{cnn_forward.1} parent=1 // pred_check_branch
      %4870 = sbr.rel (0) target = $region188
    $region187: #{cnn_forward.1} parent=1 // pred_region
      %s4872 = ssub.s32 32, 32
      %4873 = vsyncadd [#allocation10], %s4872
      %s4875 = sshll.u32 [#allocation20], 4
      %s4876 = int_to_ptr.vmem [resolvable:$true] %s4875
      %4878 = dma.vmem_to_hbm [thread:$0]  %s4876, 32, %s25, [#allocation10]
    $region188: #{cnn_forward.1} parent=1 // pred_fallthru
      _
    // Predicated region
    $region189: #{cnn_forward.1} parent=1 // pred_check
      _
    $region190: #{cnn_forward.1} parent=1 // pred_check_branch
      %4880 = sbr.rel (0) target = $region192
    $region191: #{cnn_forward.1} parent=1 // pred_region
      %4881 = dma.done [#allocation10], 32
    $region192: #{cnn_forward.1} parent=1 // pred_fallthru
      _
    %4882 = vsyncpa [#allocation9], 1
    %4883 = vsyncpa [#allocation12], 1
    %4884 = vsyncpa [#allocation15], 1
    %4885 = vsyncpa [#allocation18], 1
    %4886 = vsyncpa [#allocation10], 1
  %4887 = vsyncmov [#allocation7]
  %s4888 = vpop.sfrf %4887
  %p4889 = scmp.eq.s32.totalorder %s4888, 0
  %p4890 = pneg %p4889
  %4892 = shalt.err (%p4890)
  %s4893 = scalar_lea.sflag [#allocation7], 1
  %4894 = vsyncmov %s4893
  %s4895 = vpop.sfrf %4894
  %p4896 = scmp.eq.s32.totalorder %s4895, 0
  %p4897 = pneg %p4896
  %4899 = shalt.err (%p4897)
  %s4900 = scalar_lea.sflag [#allocation7], 2
  %4901 = vsyncmov %s4900
  %s4902 = vpop.sfrf %4901
  %p4903 = scmp.eq.s32.totalorder %s4902, 0
  %p4904 = pneg %p4903
  %4906 = shalt.err (%p4904)
  %s4907 = scalar_lea.sflag [#allocation7], 3
  %4908 = vsyncmov %s4907
  %s4909 = vpop.sfrf %4908
  %p4910 = scmp.eq.s32.totalorder %s4909, 0
  %p4911 = pneg %p4910
  %4913 = shalt.err (%p4911)
  %s4914 = scalar_lea.sflag [#allocation7], 4
  %4915 = vsyncmov %s4914
  %s4916 = vpop.sfrf %4915
  %p4917 = scmp.eq.s32.totalorder %s4916, 0
  %p4918 = pneg %p4917
  %4920 = shalt.err (%p4918)

</llo_original>
